<compile_context>
chip_gen: v7x
topology: tpu7x:2x2x1
jax: 0.10.0
libtpu: 0.0.40
codegen_flags: <defaults>
</compile_context>

<pallas_src>
import functools

import jax
import jax.numpy as jnp
from jax.experimental import pallas as pl
from jax.experimental.pallas import tpu as pltpu


def _gap_kernel(a_ref, x_ref, w1s_ref, w1n_ref, b1_ref,
                w2sg_ref, w2ng_ref, b2g_ref, out_ref):
    cdt = a_ref.dtype                       # MXU operand dtype
    G, N, _ = a_ref.shape
    out_feats = out_ref.shape[-1]

    A = a_ref[...]                          # (G, N, N) row-normalized adjacency
    X = x_ref[...]                          # (G, N, Fin)
    Xf = X.reshape(G * N, -1)               # shared-weight matmuls see G*N rows

    # ---- SAGEConv 1 ('mean') + ReLU:  h1 = relu(X@Ws + (A@X)@Wn + b1) ----
    AX = jnp.einsum('bij,bjf->bif', A, X,
                    preferred_element_type=jnp.float32)            # (G, N, Fin)
    AXf = AX.reshape(G * N, -1).astype(cdt)
    h1 = (jnp.dot(Xf, w1s_ref[...], preferred_element_type=jnp.float32)
          + jnp.dot(AXf, w1n_ref[...], preferred_element_type=jnp.float32)
          + b1_ref[...])                                            # (G*N, H) f32
    h1 = jnp.maximum(h1, 0.0).astype(cdt)

    # ---- SAGEConv 2 ('mean') with the attention-gate Linear folded in as one
    #      extra output column:  hg = [h2 | gate] ----
    AH = jnp.einsum('bij,bjh->bih', A, h1.reshape(G, N, -1),
                    preferred_element_type=jnp.float32)             # (G, N, H)
    AHf = AH.reshape(G * N, -1).astype(cdt)
    hg = (jnp.dot(h1, w2sg_ref[...], preferred_element_type=jnp.float32)
          + jnp.dot(AHf, w2ng_ref[...], preferred_element_type=jnp.float32)
          + b2g_ref[...])                                           # (G*N, O+1)
    hg = hg.reshape(G, N, out_feats + 1)
    h2 = hg[:, :, :out_feats]               # (G, N, O)
    gate = hg[:, :, out_feats:]             # (G, N, 1)

    # ---- GlobalAttentionPooling: per-graph softmax over nodes; pooled
    #      numerator as a batched MXU contraction over the node axis. ----
    m = jnp.max(gate, axis=1, keepdims=True)                        # (G, 1, 1)
    e = jnp.exp(gate - m)                                           # (G, N, 1)
    inv = pl.reciprocal(jnp.sum(e, axis=1, keepdims=True), approx=True)
    num = jnp.einsum('bnk,bno->bko', e, h2,
                     preferred_element_type=jnp.float32)            # (G, 1, O)
    out_ref[0] = (num * inv).reshape(G, out_feats)


def prepare_params(params, compute_dtype=jnp.float32):
    """One-time parameter prep (call at load time, not per forward):
    folds gate_nn = Linear(out_feats, 1) into SAGE layer 2 as one extra output
    column and casts MXU operands to compute_dtype."""
    w1s, w1n, b1, w2s, w2n, b2, wg, bg = params
    # gate = h2@wg + bg = h1@(W2s@wg) + (A@h1)@(W2n@wg) + (b2@wg + bg)
    w2sg = jnp.concatenate([w2s, w2s @ wg], axis=1)                 # (H, O+1)
    w2ng = jnp.concatenate([w2n, w2n @ wg], axis=1)                 # (H, O+1)
    b2g = jnp.concatenate([b2, b2 @ wg + bg], axis=1)               # (1, O+1)
    return (w1s.astype(compute_dtype), w1n.astype(compute_dtype),
            b1.astype(jnp.float32),
            w2sg.astype(compute_dtype), w2ng.astype(compute_dtype),
            b2g.astype(jnp.float32))


def graph_attention_pool(adj_norm, x, prepared, *, graphs_per_block=None):
    """adj_norm: (B, N, N) row-normalized, x: (B, N, Fin). Returns (B, O) f32.

    graphs_per_block: graphs per grid step. Default = whole batch (grid=(1,)),
    the right choice on single-TC chips (v5e/v6e). On v7x (2 TCs) pass B//2 so
    the "parallel" grid axis shards two steps across both cores.
    """
    w1s, w1n, b1, w2sg, w2ng, b2g = prepared
    cdt = w1s.dtype
    B, N, in_feats = x.shape
    hidden_feats = w1s.shape[1]
    out_feats = w2sg.shape[1] - 1

    G = B if graphs_per_block is None else graphs_per_block
    assert B % G == 0, "batch must divide evenly into grid steps"
    num_blocks = B // G

    adj_c = adj_norm.astype(cdt)
    x_c = x.astype(cdt)
    weights = (w1s, w1n, b1, w2sg, w2ng, b2g)

    flops = B * (2 * N * N * in_feats
                 + 2 * 2 * N * in_feats * hidden_feats
                 + 2 * N * N * hidden_feats
                 + 2 * 2 * N * hidden_feats * (out_feats + 1)
                 + 2 * N * out_feats)
    bytes_accessed = (adj_c.size * adj_c.dtype.itemsize
                      + x_c.size * x_c.dtype.itemsize
                      + sum(w.size * w.dtype.itemsize for w in weights)
                      + B * out_feats * 4)

    # Weights: full-array blocks with a constant block index -> fetched once
    # and kept resident across grid steps (no per-step weight re-DMA).
    def w_spec(w):
        return pl.BlockSpec(w.shape, lambda s: (0,) * w.ndim)

    out = pl.pallas_call(
        _gap_kernel,
        out_shape=jax.ShapeDtypeStruct((num_blocks, G, out_feats), jnp.float32),
        grid=(num_blocks,),
        in_specs=[
            pl.BlockSpec((G, N, N), lambda s: (s, 0, 0)),           # A (per step)
            pl.BlockSpec((G, N, in_feats), lambda s: (s, 0, 0)),    # X (per step)
            *[w_spec(w) for w in weights],                          # resident
        ],
        out_specs=pl.BlockSpec((1, G, out_feats), lambda s: (s, 0, 0)),
        compiler_params=pltpu.CompilerParams(
            dimension_semantics=("parallel",)),
        cost_estimate=pl.CostEstimate(
            flops=int(flops),
            transcendentals=int(B * N),
            bytes_accessed=int(bytes_accessed)),
        # TODO(synk): a resident dense A stops fitting once double-buffered
        # 4*N^2-byte A blocks exceed scoped VMEM (N~2.9K at the 32 MiB default;
        # v7x only has 64 MiB physical). At that point tile A over (dst, src)
        # with the src reduction axis last ("arbitrary") and set
        # vmem_limit_bytes explicitly.
    )(adj_c, x_c, *weights)
    return out.reshape(B, out_feats)


def ref_forward(adj_norm, x, params):
    """Pure-JAX fp32 reference with the original module's semantics."""
    w1s, w1n, b1, w2s, w2n, b2, wg, bg = params

    def one_graph(A, X):
        h1 = jnp.maximum(X @ w1s + (A @ X) @ w1n + b1, 0.0)
        h2 = h1 @ w2s + (A @ h1) @ w2n + b2
        gate = h2 @ wg + bg[0, 0]
        alpha = jax.nn.softmax(gate, axis=0)
        return jnp.sum(alpha * h2, axis=0)

    return jax.vmap(one_graph)(adj_norm, x)                         # (B, O)


if __name__ == "__main__":
    key = jax.random.PRNGKey(0)
    B, N = 8, 16
    in_feats, hidden_feats, out_feats = 8, 32, 16
    ks = jax.random.split(key, 10)

    # Node features per graph.
    features = jax.random.normal(ks[0], (B, N, in_feats), jnp.float32)

    # Deterministic random directed graphs -> dense row-normalized adjacency
    # (mean over in-neighbours; isolated nodes get a zero neighbour vector).
    edges = (jax.random.uniform(ks[1], (B, N, N)) < 0.3).astype(jnp.float32)
    deg = jnp.clip(jnp.sum(edges, axis=-1, keepdims=True), 1.0, None)
    adj_norm = edges / deg

    def lin_w(k, fan_in, fan_out):
        bound = 1.0 / jnp.sqrt(jnp.float32(fan_in))
        return jax.random.uniform(k, (fan_in, fan_out), jnp.float32, -bound, bound)

    # SAGEConv 1: fc_self, fc_neigh, shared bias.
    w1_self = lin_w(ks[2], in_feats, hidden_feats)
    w1_neigh = lin_w(ks[3], in_feats, hidden_feats)
    b1 = jax.random.uniform(ks[4], (1, hidden_feats), jnp.float32, -0.1, 0.1)

    # SAGEConv 2.
    w2_self = lin_w(ks[5], hidden_feats, out_feats)
    w2_neigh = lin_w(ks[6], hidden_feats, out_feats)
    b2 = jax.random.uniform(ks[7], (1, out_feats), jnp.float32, -0.1, 0.1)

    # GlobalAttentionPooling gate_nn = Linear(out_feats, 1).
    wg = lin_w(ks[8], out_feats, 1)
    bg = jax.random.uniform(ks[9], (1, 1), jnp.float32, -0.1, 0.1)

    params = (w1_self, w1_neigh, b1, w2_self, w2_neigh, b2, wg, bg)
    ref = ref_forward(adj_norm, features, params)

    # f32 operand path (default): tight structural check vs the fp32 reference
    # (slack only for the approx reciprocal / gate-fold reassociation).
    prep_f32 = prepare_params(params, jnp.float32)
    fwd_f32 = jax.jit(functools.partial(graph_attention_pool, prepared=prep_f32))
    out_f32 = jax.block_until_ready(fwd_f32(adj_norm, features))
    assert out_f32.shape == (B, out_feats)
    assert jnp.allclose(out_f32, ref, atol=1e-2, rtol=1e-2), (out_f32, ref)

    # bf16 operand path (f32 MXU accumulation).
    prep_bf16 = prepare_params(params, jnp.bfloat16)
    fwd_bf16 = jax.jit(functools.partial(graph_attention_pool, prepared=prep_bf16))
    out_bf16 = jax.block_until_ready(fwd_bf16(adj_norm, features))
    assert out_bf16.shape == (B, out_feats)
    assert jnp.allclose(out_bf16, ref, atol=5e-2, rtol=5e-2), (out_bf16, ref)

    print("KERNEL_OK")
</pallas_src>

<mosaic_0001>
module attributes {stable_mosaic.version = 11 : i64} {
  func.func @_gap_kernel(%arg0: i32, %arg1: memref<8x16x16xf32, #tpu.memory_space<vmem>>, %arg2: memref<8x16x8xf32, #tpu.memory_space<vmem>>, %arg3: memref<8x32xf32, #tpu.memory_space<vmem>>, %arg4: memref<8x32xf32, #tpu.memory_space<vmem>>, %arg5: memref<1x32xf32, #tpu.memory_space<vmem>>, %arg6: memref<32x17xf32, #tpu.memory_space<vmem>>, %arg7: memref<32x17xf32, #tpu.memory_space<vmem>>, %arg8: memref<1x17xf32, #tpu.memory_space<vmem>>, %arg9: memref<1x8x16xf32, #tpu.memory_space<vmem>>) attributes {dimension_semantics = [#tpu.dimension_semantics<parallel>], iteration_bounds = array<i64: 1>, scalar_prefetch = 0 : i64, scratch_operands = 0 : i64, tpu.core_type = #tpu.core_type<tc>, window_params = [{transform_indices = @transform_0, window_bounds = array<i64: 8, 16, 16>}, {transform_indices = @transform_1, window_bounds = array<i64: 8, 16, 8>}, {pipeline_mode = #tpu.pipeline_mode<synchronous>, transform_indices = @transform_2, window_bounds = array<i64: 8, 32>}, {pipeline_mode = #tpu.pipeline_mode<synchronous>, transform_indices = @transform_3, window_bounds = array<i64: 8, 32>}, {pipeline_mode = #tpu.pipeline_mode<synchronous>, transform_indices = @transform_4, window_bounds = array<i64: 1, 32>}, {pipeline_mode = #tpu.pipeline_mode<synchronous>, transform_indices = @transform_5, window_bounds = array<i64: 32, 17>}, {pipeline_mode = #tpu.pipeline_mode<synchronous>, transform_indices = @transform_6, window_bounds = array<i64: 32, 17>}, {pipeline_mode = #tpu.pipeline_mode<synchronous>, transform_indices = @transform_7, window_bounds = array<i64: 1, 17>}, {transform_indices = @transform_8, window_bounds = array<i64: 1, 8, 16>}]} {
    %c0 = arith.constant 0 : index
    %c0_0 = arith.constant 0 : index
    %c0_1 = arith.constant 0 : index
    %0 = vector.load %arg1[%c0, %c0_0, %c0_1] : memref<8x16x16xf32, #tpu.memory_space<vmem>>, vector<8x16x16xf32>
    %c0_2 = arith.constant 0 : index
    %c0_3 = arith.constant 0 : index
    %c0_4 = arith.constant 0 : index
    %1 = vector.load %arg2[%c0_2, %c0_3, %c0_4] : memref<8x16x8xf32, #tpu.memory_space<vmem>>, vector<8x16x8xf32>
    %2 = vector.shape_cast %1 : vector<8x16x8xf32> to vector<128x8xf32>
    "tpu.trace_start"() <{level = 10 : i32, message = "bij,bjf->bif"}> : () -> ()
    %cst = arith.constant dense<0.000000e+00> : vector<8x16x8xf32>
    %3 = tpu.matmul %0, %1, %cst {dimension_numbers = #tpu.dot_dimension_numbers<[2], [1], [1], [2], [0, 0, 0, 1, 1, 2], [0], [0]>} : vector<8x16x16xf32>, vector<8x16x8xf32>, vector<8x16x8xf32> -> vector<8x16x8xf32>
    "tpu.trace_stop"() : () -> ()
    %4 = vector.shape_cast %3 : vector<8x16x8xf32> to vector<128x8xf32>
    %c0_5 = arith.constant 0 : index
    %c0_6 = arith.constant 0 : index
    %5 = vector.load %arg3[%c0_5, %c0_6] : memref<8x32xf32, #tpu.memory_space<vmem>>, vector<8x32xf32>
    %cst_7 = arith.constant dense<0.000000e+00> : vector<128x32xf32>
    %6 = tpu.matmul %2, %5, %cst_7 {dimension_numbers = #tpu.dot_dimension_numbers<[1], [0], [0], [1], [0, 0, 1, 1], [], []>} : vector<128x8xf32>, vector<8x32xf32>, vector<128x32xf32> -> vector<128x32xf32>
    %c0_8 = arith.constant 0 : index
    %c0_9 = arith.constant 0 : index
    %7 = vector.load %arg4[%c0_8, %c0_9] : memref<8x32xf32, #tpu.memory_space<vmem>>, vector<8x32xf32>
    %cst_10 = arith.constant dense<0.000000e+00> : vector<128x32xf32>
    %8 = tpu.matmul %4, %7, %cst_10 {dimension_numbers = #tpu.dot_dimension_numbers<[1], [0], [0], [1], [0, 0, 1, 1], [], []>} : vector<128x8xf32>, vector<8x32xf32>, vector<128x32xf32> -> vector<128x32xf32>
    %9 = arith.addf %6, %8 : vector<128x32xf32>
    %c0_11 = arith.constant 0 : index
    %c0_12 = arith.constant 0 : index
    %10 = vector.load %arg5[%c0_11, %c0_12] : memref<1x32xf32, #tpu.memory_space<vmem>>, vector<1x32xf32>
    %11 = vector.broadcast %10 : vector<1x32xf32> to vector<128x32xf32>
    %12 = arith.addf %9, %11 : vector<128x32xf32>
    %cst_13 = arith.constant 0.000000e+00 : f32
    %13 = vector.broadcast %cst_13 : f32 to vector<128x32xf32>
    %14 = arith.maximumf %12, %13 : vector<128x32xf32>
    %15 = vector.shape_cast %14 : vector<128x32xf32> to vector<8x16x32xf32>
    "tpu.trace_start"() <{level = 10 : i32, message = "bij,bjh->bih"}> : () -> ()
    %cst_14 = arith.constant dense<0.000000e+00> : vector<8x16x32xf32>
    %16 = tpu.matmul %0, %15, %cst_14 {dimension_numbers = #tpu.dot_dimension_numbers<[2], [1], [1], [2], [0, 0, 0, 1, 1, 2], [0], [0]>} : vector<8x16x16xf32>, vector<8x16x32xf32>, vector<8x16x32xf32> -> vector<8x16x32xf32>
    "tpu.trace_stop"() : () -> ()
    %17 = vector.shape_cast %16 : vector<8x16x32xf32> to vector<128x32xf32>
    %c0_15 = arith.constant 0 : index
    %c0_16 = arith.constant 0 : index
    %18 = vector.load %arg6[%c0_15, %c0_16] : memref<32x17xf32, #tpu.memory_space<vmem>>, vector<32x17xf32>
    %cst_17 = arith.constant dense<0.000000e+00> : vector<128x17xf32>
    %19 = tpu.matmul %14, %18, %cst_17 {dimension_numbers = #tpu.dot_dimension_numbers<[1], [0], [0], [1], [0, 0, 1, 1], [], []>} : vector<128x32xf32>, vector<32x17xf32>, vector<128x17xf32> -> vector<128x17xf32>
    %c0_18 = arith.constant 0 : index
    %c0_19 = arith.constant 0 : index
    %20 = vector.load %arg7[%c0_18, %c0_19] : memref<32x17xf32, #tpu.memory_space<vmem>>, vector<32x17xf32>
    %cst_20 = arith.constant dense<0.000000e+00> : vector<128x17xf32>
    %21 = tpu.matmul %17, %20, %cst_20 {dimension_numbers = #tpu.dot_dimension_numbers<[1], [0], [0], [1], [0, 0, 1, 1], [], []>} : vector<128x32xf32>, vector<32x17xf32>, vector<128x17xf32> -> vector<128x17xf32>
    %22 = arith.addf %19, %21 : vector<128x17xf32>
    %c0_21 = arith.constant 0 : index
    %c0_22 = arith.constant 0 : index
    %23 = vector.load %arg8[%c0_21, %c0_22] : memref<1x17xf32, #tpu.memory_space<vmem>>, vector<1x17xf32>
    %24 = vector.broadcast %23 : vector<1x17xf32> to vector<128x17xf32>
    %25 = arith.addf %22, %24 : vector<128x17xf32>
    %26 = vector.shape_cast %25 : vector<128x17xf32> to vector<8x16x17xf32>
    %27 = vector.extract_strided_slice %26 {offsets = [0, 0, 0], sizes = [8, 16, 16], strides = [1, 1, 1]} : vector<8x16x17xf32> to vector<8x16x16xf32>
    %28 = vector.extract_strided_slice %26 {offsets = [0, 0, 16], sizes = [8, 16, 1], strides = [1, 1, 1]} : vector<8x16x17xf32> to vector<8x16x1xf32>
    %cst_23 = arith.constant dense<0xFF800000> : vector<8x1xf32>
    %29 = vector.multi_reduction <maximumf>, %28, %cst_23 [1] : vector<8x16x1xf32> to vector<8x1xf32>
    %30 = vector.shape_cast %29 : vector<8x1xf32> to vector<8x1x1xf32>
    %31 = vector.broadcast %30 : vector<8x1x1xf32> to vector<8x16x1xf32>
    %32 = arith.subf %28, %31 : vector<8x16x1xf32>
    %33 = math.exp %32 : vector<8x16x1xf32>
    %cst_24 = arith.constant dense<0.000000e+00> : vector<8x1xf32>
    %34 = vector.multi_reduction <add>, %33, %cst_24 [1] : vector<8x16x1xf32> to vector<8x1xf32>
    %35 = vector.shape_cast %34 : vector<8x1xf32> to vector<8x1x1xf32>
    %36 = tpu.reciprocal %35 {approx = true} : vector<8x1x1xf32> -> vector<8x1x1xf32>
    "tpu.trace_start"() <{level = 10 : i32, message = "bnk,bno->bko"}> : () -> ()
    %cst_25 = arith.constant dense<0.000000e+00> : vector<8x1x16xf32>
    %37 = tpu.matmul %33, %27, %cst_25 {dimension_numbers = #tpu.dot_dimension_numbers<[1], [1], [2], [2], [0, 0, 0, 2, 1, 2], [0], [0]>} : vector<8x16x1xf32>, vector<8x16x16xf32>, vector<8x1x16xf32> -> vector<8x1x16xf32>
    "tpu.trace_stop"() : () -> ()
    %38 = vector.broadcast %36 : vector<8x1x1xf32> to vector<8x1x16xf32>
    %39 = arith.mulf %37, %38 : vector<8x1x16xf32>
    %40 = vector.shape_cast %39 : vector<8x1x16xf32> to vector<8x16xf32>
    %c0_26 = arith.constant 0 : index
    %c0_27 = arith.constant 0 : index
    %c0_28 = arith.constant 0 : index
    %41 = vector.load %arg9[%c0_26, %c0_27, %c0_28] : memref<1x8x16xf32, #tpu.memory_space<vmem>>, vector<1x8x16xf32>
    %42 = vector.shape_cast %41 : vector<1x8x16xf32> to vector<8x16xf32>
    %43 = vector.shape_cast %40 : vector<8x16xf32> to vector<1x8x16xf32>
    tpu.vector_store %arg9[%c0_26, %c0_27, %c0_28], %43 {strides = array<i32>} : memref<1x8x16xf32, #tpu.memory_space<vmem>>, vector<1x8x16xf32>,
    return
  }
  func.func @transform_0(%arg0: i32) -> (i32, i32, i32) {
    %c0_i32 = arith.constant 0 : i32
    %c0_i32_0 = arith.constant 0 : i32
    %c0_i32_1 = arith.constant 0 : i32
    return %arg0, %c0_i32, %c0_i32_0 : i32, i32, i32
  }
  func.func @transform_1(%arg0: i32) -> (i32, i32, i32) {
    %c0_i32 = arith.constant 0 : i32
    %c0_i32_0 = arith.constant 0 : i32
    %c0_i32_1 = arith.constant 0 : i32
    return %arg0, %c0_i32, %c0_i32_0 : i32, i32, i32
  }
  func.func @transform_2(%arg0: i32) -> (i32, i32) {
    %c0_i32 = arith.constant 0 : i32
    %c0_i32_0 = arith.constant 0 : i32
    %c0_i32_1 = arith.constant 0 : i32
    return %c0_i32, %c0_i32_0 : i32, i32
  }
  func.func @transform_3(%arg0: i32) -> (i32, i32) {
    %c0_i32 = arith.constant 0 : i32
    %c0_i32_0 = arith.constant 0 : i32
    %c0_i32_1 = arith.constant 0 : i32
    return %c0_i32, %c0_i32_0 : i32, i32
  }
  func.func @transform_4(%arg0: i32) -> (i32, i32) {
    %c0_i32 = arith.constant 0 : i32
    %c0_i32_0 = arith.constant 0 : i32
    %c0_i32_1 = arith.constant 0 : i32
    return %c0_i32, %c0_i32_0 : i32, i32
  }
  func.func @transform_5(%arg0: i32) -> (i32, i32) {
    %c0_i32 = arith.constant 0 : i32
    %c0_i32_0 = arith.constant 0 : i32
    %c0_i32_1 = arith.constant 0 : i32
    return %c0_i32, %c0_i32_0 : i32, i32
  }
  func.func @transform_6(%arg0: i32) -> (i32, i32) {
    %c0_i32 = arith.constant 0 : i32
    %c0_i32_0 = arith.constant 0 : i32
    %c0_i32_1 = arith.constant 0 : i32
    return %c0_i32, %c0_i32_0 : i32, i32
  }
  func.func @transform_7(%arg0: i32) -> (i32, i32) {
    %c0_i32 = arith.constant 0 : i32
    %c0_i32_0 = arith.constant 0 : i32
    %c0_i32_1 = arith.constant 0 : i32
    return %c0_i32, %c0_i32_0 : i32, i32
  }
  func.func @transform_8(%arg0: i32) -> (i32, i32, i32) {
    %c0_i32 = arith.constant 0 : i32
    %c0_i32_0 = arith.constant 0 : i32
    %c0_i32_1 = arith.constant 0 : i32
    return %arg0, %c0_i32, %c0_i32_0 : i32, i32, i32
  }
}

</mosaic_0001>

<llo_original>
// kernel: graph_attention_pool.1
$region0: #{graph_attention_pool.1}
  #allocation0 [shape = 'u32[]', space=smem, size = 0x4, offset = 0x4, fixed_abs, tag = 'smem constant byte address 0x4 - core index']
  #allocation1 [shape = 'u32[144,128]{1,0:T(1,128)}', space=vmem, size = 0x12000, scoped, tag = 'internal scratch']
  %s0 = inlined_call_operand.vmem [shape: f32[8,16,16], index: 0, kind: input, shape index: {}]
  %s1 = inlined_call_operand.vmem [shape: f32[8,16,8], index: 1, kind: input, shape index: {}]
  %s2 = inlined_call_operand.hbm [shape: f32[8,32], index: 2, kind: input, shape index: {}]
  %s3 = inlined_call_operand.vmem [shape: f32[8,32], index: 3, kind: input, shape index: {}]
  %s4 = inlined_call_operand.vmem [shape: f32[1,32], index: 4, kind: input, shape index: {}]
  %s5 = inlined_call_operand.vmem [shape: f32[32,17], index: 5, kind: input, shape index: {}]
  %s6 = inlined_call_operand.vmem [shape: f32[32,17], index: 6, kind: input, shape index: {}]
  %s7 = inlined_call_operand.vmem [shape: f32[1,17], index: 7, kind: input, shape index: {}]
  %s8 = inlined_call_operand.hbm [shape: f32[1,8,16], index: 8, kind: output, shape index: {}]
  %s9 = sld [smem:[#allocation0]]
  $region46: #{graph_attention_pool.1} parent=0
    _
  %s11 = ssub.s32 1, %s9
  %s12 = scalar_select 0, %s11, %s9
  $region1: #{graph_attention_pool.1} parent=0
    #allocation2 [shape = 'u8[4096]{0}', space=vmem, size = 0x1000, scoped, tag = 'input window, operand 2, single buffered']
    #allocation3 [shape = 's32[1]{0}', space=sflag, size = 0x4, scoped, tag = 'scoped memory for graph_attention_pool.1']
    #allocation4 [shape = 's32[1]{0}', space=sflag, size = 0x4, scoped, tag = 'scoped memory for graph_attention_pool.1']
    #allocation5 [shape = 'u8[4096]{0}', space=vmem, size = 0x1000, scoped, tag = 'output window, operand 0, single buffered']
    %13 = vsyncpa [#allocation3], 0
    %14 = vsyncpa [#allocation4], 0
    // Predicated region
    $region2: #{graph_attention_pool.1} parent=1 // pred_check
      _
    $region3: #{graph_attention_pool.1} parent=1 // pred_check_branch
      %16 = sbr.rel (0) target = $region5
    $region4: #{graph_attention_pool.1} parent=1 // pred_region
      _
    $region5: #{graph_attention_pool.1} parent=1 // pred_fallthru
      _
    // Predicated region
    $region6: #{graph_attention_pool.1} parent=1 // pred_check
      _
    $region7: #{graph_attention_pool.1} parent=1 // pred_check_branch
      %18 = sbr.rel (0) target = $region9
    $region8: #{graph_attention_pool.1} parent=1 // pred_region
      _
    $region9: #{graph_attention_pool.1} parent=1 // pred_fallthru
      _
    // Predicated region
    $region10: #{graph_attention_pool.1} parent=1 // pred_check
      _
    $region11: #{graph_attention_pool.1} parent=1 // pred_check_branch
      %20 = sbr.rel (0) target = $region13
    $region12: #{graph_attention_pool.1} parent=1 // pred_region
      %s22 = ssub.s32 128, 128
      %23 = vsyncadd [#allocation3], %s22
      %s25 = sshll.u32 [#allocation2], 4
      %s26 = int_to_ptr.vmem [resolvable:$true] %s25
      %28 = dma.hbm_to_vmem [thread:$0]  %s2, 128, %s26, [#allocation3]
    $region13: #{graph_attention_pool.1} parent=1 // pred_fallthru
      _
    // Predicated region
    $region14: #{graph_attention_pool.1} parent=1 // pred_check
      _
    $region15: #{graph_attention_pool.1} parent=1 // pred_check_branch
      %30 = sbr.rel (0) target = $region17
    $region16: #{graph_attention_pool.1} parent=1 // pred_region
      _
    $region17: #{graph_attention_pool.1} parent=1 // pred_fallthru
      _
    // Predicated region
    $region18: #{graph_attention_pool.1} parent=1 // pred_check
      _
    $region19: #{graph_attention_pool.1} parent=1 // pred_check_branch
      %32 = sbr.rel (0) target = $region21
    $region20: #{graph_attention_pool.1} parent=1 // pred_region
      _
    $region21: #{graph_attention_pool.1} parent=1 // pred_fallthru
      _
    // Predicated region
    $region22: #{graph_attention_pool.1} parent=1 // pred_check
      _
    $region23: #{graph_attention_pool.1} parent=1 // pred_check_branch
      %34 = sbr.rel (0) target = $region25
    $region24: #{graph_attention_pool.1} parent=1 // pred_region
      _
    $region25: #{graph_attention_pool.1} parent=1 // pred_fallthru
      _
    // Predicated region
    $region26: #{graph_attention_pool.1} parent=1 // pred_check
      _
    $region27: #{graph_attention_pool.1} parent=1 // pred_check_branch
      %36 = sbr.rel (0) target = $region29
    $region28: #{graph_attention_pool.1} parent=1 // pred_region
      _
    $region29: #{graph_attention_pool.1} parent=1 // pred_fallthru
      _
    // Predicated region
    $region30: #{graph_attention_pool.1} parent=1 // pred_check
      _
    $region31: #{graph_attention_pool.1} parent=1 // pred_check_branch
      %38 = sbr.rel (0) target = $region33
    $region32: #{graph_attention_pool.1} parent=1 // pred_region
      _
    $region33: #{graph_attention_pool.1} parent=1 // pred_fallthru
      _
    // Predicated region
    $region34: #{graph_attention_pool.1} parent=1 // pred_check
      _
    $region35: #{graph_attention_pool.1} parent=1 // pred_check_branch
      %40 = sbr.rel (0) target = $region37
    $region36: #{graph_attention_pool.1} parent=1 // pred_region
      %41 = dma.done [#allocation3], 128
    $region37: #{graph_attention_pool.1} parent=1 // pred_fallthru
      _
    %v42 = vld [vmem:[%s0] sm:$0xff]
    %v43 = vld [vmem:[%s0 + $0x8] sm:$0xff]
    %v44 = vld [vmem:[%s0 + $0x10] sm:$0xff]
    %v45 = vld [vmem:[%s0 + $0x18] sm:$0xff]
    %v46 = vld [vmem:[%s0 + $0x20] sm:$0xff]
    %v47 = vld [vmem:[%s0 + $0x28] sm:$0xff]
    %v48 = vld [vmem:[%s0 + $0x30] sm:$0xff]
    %v49 = vld [vmem:[%s0 + $0x38] sm:$0xff]
    %v50 = vld [vmem:[%s0 + $0x40] sm:$0xff]
    %v51 = vld [vmem:[%s0 + $0x48] sm:$0xff]
    %v52 = vld [vmem:[%s0 + $0x50] sm:$0xff]
    %v53 = vld [vmem:[%s0 + $0x58] sm:$0xff]
    %v54 = vld [vmem:[%s0 + $0x60] sm:$0xff]
    %v55 = vld [vmem:[%s0 + $0x68] sm:$0xff]
    %v56 = vld [vmem:[%s0 + $0x70] sm:$0xff]
    %v57 = vld [vmem:[%s0 + $0x78] sm:$0xff]
    %v58 = vld [vmem:[%s1] sm:$0xff]
    %v59 = vld [vmem:[%s1 + $0x8] sm:$0xff]
    %v60 = vld [vmem:[%s1 + $0x10] sm:$0xff]
    %v61 = vld [vmem:[%s1 + $0x18] sm:$0xff]
    %v62 = vld [vmem:[%s1 + $0x20] sm:$0xff]
    %v63 = vld [vmem:[%s1 + $0x28] sm:$0xff]
    %v64 = vld [vmem:[%s1 + $0x30] sm:$0xff]
    %v65 = vld [vmem:[%s1 + $0x38] sm:$0xff]
    %v66 = vld [vmem:[%s1 + $0x40] sm:$0xff]
    %v67 = vld [vmem:[%s1 + $0x48] sm:$0xff]
    %v68 = vld [vmem:[%s1 + $0x50] sm:$0xff]
    %v69 = vld [vmem:[%s1 + $0x58] sm:$0xff]
    %v70 = vld [vmem:[%s1 + $0x60] sm:$0xff]
    %v71 = vld [vmem:[%s1 + $0x68] sm:$0xff]
    %v72 = vld [vmem:[%s1 + $0x70] sm:$0xff]
    %v73 = vld [vmem:[%s1 + $0x78] sm:$0xff]
    %vm74 = vcmask 130048
    %v76 = vsel %vm74, %v42, 0
    %v79 = vsel %vm74, %v43, 0
    %81 = vmatprep.subr.mxu0 0.0
    %82 = vmatpush1.msra.mxu0 %v58
    %83 = vmatprep.subr.mxu0 0.0
    %84 = vmatpush1.msra.mxu0 %v59
    %85 = vmatprep.subr.mxu0 0.0
    %86 = vmatpush1.msra.mxu0 0.0
    %87 = vmatprep.subr.mxu0 0.0
    %88 = vmatpush1.msra.mxu0 0.0
    %89 = vmatprep.subr.mxu0 0.0
    %90 = vmatpush1.msra.mxu0 0.0
    %91 = vmatprep.subr.mxu0 0.0
    %92 = vmatpush1.msra.mxu0 0.0
    %93 = vmatprep.subr.mxu0 0.0
    %94 = vmatpush1.msra.mxu0 0.0
    %95 = vmatprep.subr.mxu0 0.0
    %96 = vmatpush1.msra.mxu0 0.0
    %97 = vmatprep.subr.mxu0 0.0
    %98 = vmatpush1.msra.mxu0 0.0
    %99 = vmatprep.subr.mxu0 0.0
    %100 = vmatpush1.msra.mxu0 0.0
    %101 = vmatprep.subr.mxu0 0.0
    %102 = vmatpush1.msra.mxu0 0.0
    %103 = vmatprep.subr.mxu0 0.0
    %104 = vmatpush1.msra.mxu0 0.0
    %105 = vmatprep.subr.mxu0 0.0
    %106 = vmatpush1.msra.mxu0 0.0
    %107 = vmatprep.subr.mxu0 0.0
    %108 = vmatpush1.msra.mxu0 0.0
    %109 = vmatprep.subr.mxu0 0.0
    %110 = vmatpush1.msra.mxu0 0.0
    %111 = vmatprep.subr.mxu0 0.0
    %112 = vmatpush1.msra.mxu0 0.0
    %113 = vmatprep.subr.mxu0 0.0
    %114 = vmatpush1.msra.mxu0 0.0
    %115 = vmatprep.subr.mxu0 0.0
    %116 = vmatpush1.msra.mxu0 0.0
    %117 = vmatprep.subr.mxu0 0.0
    %118 = vmatpush1.msra.mxu0 0.0
    %119 = vmatprep.subr.mxu0 0.0
    %120 = vmatpush1.msra.mxu0 0.0
    %121 = vmatprep.subr.mxu0 0.0
    %122 = vmatpush1.msra.mxu0 0.0
    %123 = vmatprep.subr.mxu0 0.0
    %124 = vmatpush1.msra.mxu0 0.0
    %125 = vmatprep.subr.mxu0 0.0
    %126 = vmatpush1.msra.mxu0 0.0
    %127 = vmatprep.subr.mxu0 0.0
    %128 = vmatpush1.msra.mxu0 0.0
    %129 = vmatprep.subr.mxu0 0.0
    %130 = vmatpush1.msra.mxu0 0.0
    %131 = vmatprep.subr.mxu0 0.0
    %132 = vmatpush1.msra.mxu0 0.0
    %133 = vmatprep.subr.mxu0 0.0
    %134 = vmatpush1.msra.mxu0 0.0
    %135 = vmatprep.subr.mxu0 0.0
    %136 = vmatpush1.msra.mxu0 0.0
    %137 = vmatprep.subr.mxu0 0.0
    %138 = vmatpush1.msra.mxu0 0.0
    %139 = vmatprep.subr.mxu0 0.0
    %140 = vmatpush1.msra.mxu0 0.0
    %141 = vmatprep.subr.mxu0 0.0
    %142 = vmatpush1.msra.mxu0 0.0
    %143 = vmatprep.subr.mxu0 0.0
    %144 = vmatpush1.msra.mxu0 0.0
    %145 = vmatprep.mubr.f32.mxu0 0.0
    %146 = vmatmul.mubr.f32.gmra.mrb[0].mxu0 %v76
    %v147 = vpop.f32.mrb[0].mxu0
    %v148 = vadd.f32 0.0, %v147
    %v149 = vpop.f32.mrb[0].mxu0
    %150 = vmatprep.mubr.f32.mxu0 0.0
    %151 = vmatmul.mubr.f32.gmra.mrb[0].mxu0 %v79
    %v152 = vpop.f32.mrb[0].mxu0
    %v153 = vadd.f32 0.0, %v152
    %v154 = vpop.f32.mrb[0].mxu0
    %155 = vdwg.mxu0
    %v157 = vsel %vm74, %v44, 0
    %v160 = vsel %vm74, %v45, 0
    %162 = vmatprep.subr.mxu0 0.0
    %163 = vmatpush1.msra.mxu0 %v60
    %164 = vmatprep.subr.mxu0 0.0
    %165 = vmatpush1.msra.mxu0 %v61
    %166 = vmatprep.subr.mxu0 0.0
    %167 = vmatpush1.msra.mxu0 0.0
    %168 = vmatprep.subr.mxu0 0.0
    %169 = vmatpush1.msra.mxu0 0.0
    %170 = vmatprep.subr.mxu0 0.0
    %171 = vmatpush1.msra.mxu0 0.0
    %172 = vmatprep.subr.mxu0 0.0
    %173 = vmatpush1.msra.mxu0 0.0
    %174 = vmatprep.subr.mxu0 0.0
    %175 = vmatpush1.msra.mxu0 0.0
    %176 = vmatprep.subr.mxu0 0.0
    %177 = vmatpush1.msra.mxu0 0.0
    %178 = vmatprep.subr.mxu0 0.0
    %179 = vmatpush1.msra.mxu0 0.0
    %180 = vmatprep.subr.mxu0 0.0
    %181 = vmatpush1.msra.mxu0 0.0
    %182 = vmatprep.subr.mxu0 0.0
    %183 = vmatpush1.msra.mxu0 0.0
    %184 = vmatprep.subr.mxu0 0.0
    %185 = vmatpush1.msra.mxu0 0.0
    %186 = vmatprep.subr.mxu0 0.0
    %187 = vmatpush1.msra.mxu0 0.0
    %188 = vmatprep.subr.mxu0 0.0
    %189 = vmatpush1.msra.mxu0 0.0
    %190 = vmatprep.subr.mxu0 0.0
    %191 = vmatpush1.msra.mxu0 0.0
    %192 = vmatprep.subr.mxu0 0.0
    %193 = vmatpush1.msra.mxu0 0.0
    %194 = vmatprep.subr.mxu0 0.0
    %195 = vmatpush1.msra.mxu0 0.0
    %196 = vmatprep.subr.mxu0 0.0
    %197 = vmatpush1.msra.mxu0 0.0
    %198 = vmatprep.subr.mxu0 0.0
    %199 = vmatpush1.msra.mxu0 0.0
    %200 = vmatprep.subr.mxu0 0.0
    %201 = vmatpush1.msra.mxu0 0.0
    %202 = vmatprep.subr.mxu0 0.0
    %203 = vmatpush1.msra.mxu0 0.0
    %204 = vmatprep.subr.mxu0 0.0
    %205 = vmatpush1.msra.mxu0 0.0
    %206 = vmatprep.subr.mxu0 0.0
    %207 = vmatpush1.msra.mxu0 0.0
    %208 = vmatprep.subr.mxu0 0.0
    %209 = vmatpush1.msra.mxu0 0.0
    %210 = vmatprep.subr.mxu0 0.0
    %211 = vmatpush1.msra.mxu0 0.0
    %212 = vmatprep.subr.mxu0 0.0
    %213 = vmatpush1.msra.mxu0 0.0
    %214 = vmatprep.subr.mxu0 0.0
    %215 = vmatpush1.msra.mxu0 0.0
    %216 = vmatprep.subr.mxu0 0.0
    %217 = vmatpush1.msra.mxu0 0.0
    %218 = vmatprep.subr.mxu0 0.0
    %219 = vmatpush1.msra.mxu0 0.0
    %220 = vmatprep.subr.mxu0 0.0
    %221 = vmatpush1.msra.mxu0 0.0
    %222 = vmatprep.subr.mxu0 0.0
    %223 = vmatpush1.msra.mxu0 0.0
    %224 = vmatprep.subr.mxu0 0.0
    %225 = vmatpush1.msra.mxu0 0.0
    %226 = vmatprep.mubr.f32.mxu0 0.0
    %227 = vmatmul.mubr.f32.gmra.mrb[0].mxu0 %v157
    %v228 = vpop.f32.mrb[0].mxu0
    %v229 = vadd.f32 0.0, %v228
    %v230 = vpop.f32.mrb[0].mxu0
    %231 = vmatprep.mubr.f32.mxu0 0.0
    %232 = vmatmul.mubr.f32.gmra.mrb[0].mxu0 %v160
    %v233 = vpop.f32.mrb[0].mxu0
    %v234 = vadd.f32 0.0, %v233
    %v235 = vpop.f32.mrb[0].mxu0
    %236 = vdwg.mxu0
    %v238 = vsel %vm74, %v46, 0
    %v241 = vsel %vm74, %v47, 0
    %243 = vmatprep.subr.mxu0 0.0
    %244 = vmatpush1.msra.mxu0 %v62
    %245 = vmatprep.subr.mxu0 0.0
    %246 = vmatpush1.msra.mxu0 %v63
    %247 = vmatprep.subr.mxu0 0.0
    %248 = vmatpush1.msra.mxu0 0.0
    %249 = vmatprep.subr.mxu0 0.0
    %250 = vmatpush1.msra.mxu0 0.0
    %251 = vmatprep.subr.mxu0 0.0
    %252 = vmatpush1.msra.mxu0 0.0
    %253 = vmatprep.subr.mxu0 0.0
    %254 = vmatpush1.msra.mxu0 0.0
    %255 = vmatprep.subr.mxu0 0.0
    %256 = vmatpush1.msra.mxu0 0.0
    %257 = vmatprep.subr.mxu0 0.0
    %258 = vmatpush1.msra.mxu0 0.0
    %259 = vmatprep.subr.mxu0 0.0
    %260 = vmatpush1.msra.mxu0 0.0
    %261 = vmatprep.subr.mxu0 0.0
    %262 = vmatpush1.msra.mxu0 0.0
    %263 = vmatprep.subr.mxu0 0.0
    %264 = vmatpush1.msra.mxu0 0.0
    %265 = vmatprep.subr.mxu0 0.0
    %266 = vmatpush1.msra.mxu0 0.0
    %267 = vmatprep.subr.mxu0 0.0
    %268 = vmatpush1.msra.mxu0 0.0
    %269 = vmatprep.subr.mxu0 0.0
    %270 = vmatpush1.msra.mxu0 0.0
    %271 = vmatprep.subr.mxu0 0.0
    %272 = vmatpush1.msra.mxu0 0.0
    %273 = vmatprep.subr.mxu0 0.0
    %274 = vmatpush1.msra.mxu0 0.0
    %275 = vmatprep.subr.mxu0 0.0
    %276 = vmatpush1.msra.mxu0 0.0
    %277 = vmatprep.subr.mxu0 0.0
    %278 = vmatpush1.msra.mxu0 0.0
    %279 = vmatprep.subr.mxu0 0.0
    %280 = vmatpush1.msra.mxu0 0.0
    %281 = vmatprep.subr.mxu0 0.0
    %282 = vmatpush1.msra.mxu0 0.0
    %283 = vmatprep.subr.mxu0 0.0
    %284 = vmatpush1.msra.mxu0 0.0
    %285 = vmatprep.subr.mxu0 0.0
    %286 = vmatpush1.msra.mxu0 0.0
    %287 = vmatprep.subr.mxu0 0.0
    %288 = vmatpush1.msra.mxu0 0.0
    %289 = vmatprep.subr.mxu0 0.0
    %290 = vmatpush1.msra.mxu0 0.0
    %291 = vmatprep.subr.mxu0 0.0
    %292 = vmatpush1.msra.mxu0 0.0
    %293 = vmatprep.subr.mxu0 0.0
    %294 = vmatpush1.msra.mxu0 0.0
    %295 = vmatprep.subr.mxu0 0.0
    %296 = vmatpush1.msra.mxu0 0.0
    %297 = vmatprep.subr.mxu0 0.0
    %298 = vmatpush1.msra.mxu0 0.0
    %299 = vmatprep.subr.mxu0 0.0
    %300 = vmatpush1.msra.mxu0 0.0
    %301 = vmatprep.subr.mxu0 0.0
    %302 = vmatpush1.msra.mxu0 0.0
    %303 = vmatprep.subr.mxu0 0.0
    %304 = vmatpush1.msra.mxu0 0.0
    %305 = vmatprep.subr.mxu0 0.0
    %306 = vmatpush1.msra.mxu0 0.0
    %307 = vmatprep.mubr.f32.mxu0 0.0
    %308 = vmatmul.mubr.f32.gmra.mrb[0].mxu0 %v238
    %v309 = vpop.f32.mrb[0].mxu0
    %v310 = vadd.f32 0.0, %v309
    %v311 = vpop.f32.mrb[0].mxu0
    %312 = vmatprep.mubr.f32.mxu0 0.0
    %313 = vmatmul.mubr.f32.gmra.mrb[0].mxu0 %v241
    %v314 = vpop.f32.mrb[0].mxu0
    %v315 = vadd.f32 0.0, %v314
    %v316 = vpop.f32.mrb[0].mxu0
    %317 = vdwg.mxu0
    %v319 = vsel %vm74, %v48, 0
    %v322 = vsel %vm74, %v49, 0
    %324 = vmatprep.subr.mxu0 0.0
    %325 = vmatpush1.msra.mxu0 %v64
    %326 = vmatprep.subr.mxu0 0.0
    %327 = vmatpush1.msra.mxu0 %v65
    %328 = vmatprep.subr.mxu0 0.0
    %329 = vmatpush1.msra.mxu0 0.0
    %330 = vmatprep.subr.mxu0 0.0
    %331 = vmatpush1.msra.mxu0 0.0
    %332 = vmatprep.subr.mxu0 0.0
    %333 = vmatpush1.msra.mxu0 0.0
    %334 = vmatprep.subr.mxu0 0.0
    %335 = vmatpush1.msra.mxu0 0.0
    %336 = vmatprep.subr.mxu0 0.0
    %337 = vmatpush1.msra.mxu0 0.0
    %338 = vmatprep.subr.mxu0 0.0
    %339 = vmatpush1.msra.mxu0 0.0
    %340 = vmatprep.subr.mxu0 0.0
    %341 = vmatpush1.msra.mxu0 0.0
    %342 = vmatprep.subr.mxu0 0.0
    %343 = vmatpush1.msra.mxu0 0.0
    %344 = vmatprep.subr.mxu0 0.0
    %345 = vmatpush1.msra.mxu0 0.0
    %346 = vmatprep.subr.mxu0 0.0
    %347 = vmatpush1.msra.mxu0 0.0
    %348 = vmatprep.subr.mxu0 0.0
    %349 = vmatpush1.msra.mxu0 0.0
    %350 = vmatprep.subr.mxu0 0.0
    %351 = vmatpush1.msra.mxu0 0.0
    %352 = vmatprep.subr.mxu0 0.0
    %353 = vmatpush1.msra.mxu0 0.0
    %354 = vmatprep.subr.mxu0 0.0
    %355 = vmatpush1.msra.mxu0 0.0
    %356 = vmatprep.subr.mxu0 0.0
    %357 = vmatpush1.msra.mxu0 0.0
    %358 = vmatprep.subr.mxu0 0.0
    %359 = vmatpush1.msra.mxu0 0.0
    %360 = vmatprep.subr.mxu0 0.0
    %361 = vmatpush1.msra.mxu0 0.0
    %362 = vmatprep.subr.mxu0 0.0
    %363 = vmatpush1.msra.mxu0 0.0
    %364 = vmatprep.subr.mxu0 0.0
    %365 = vmatpush1.msra.mxu0 0.0
    %366 = vmatprep.subr.mxu0 0.0
    %367 = vmatpush1.msra.mxu0 0.0
    %368 = vmatprep.subr.mxu0 0.0
    %369 = vmatpush1.msra.mxu0 0.0
    %370 = vmatprep.subr.mxu0 0.0
    %371 = vmatpush1.msra.mxu0 0.0
    %372 = vmatprep.subr.mxu0 0.0
    %373 = vmatpush1.msra.mxu0 0.0
    %374 = vmatprep.subr.mxu0 0.0
    %375 = vmatpush1.msra.mxu0 0.0
    %376 = vmatprep.subr.mxu0 0.0
    %377 = vmatpush1.msra.mxu0 0.0
    %378 = vmatprep.subr.mxu0 0.0
    %379 = vmatpush1.msra.mxu0 0.0
    %380 = vmatprep.subr.mxu0 0.0
    %381 = vmatpush1.msra.mxu0 0.0
    %382 = vmatprep.subr.mxu0 0.0
    %383 = vmatpush1.msra.mxu0 0.0
    %384 = vmatprep.subr.mxu0 0.0
    %385 = vmatpush1.msra.mxu0 0.0
    %386 = vmatprep.subr.mxu0 0.0
    %387 = vmatpush1.msra.mxu0 0.0
    %388 = vmatprep.mubr.f32.mxu0 0.0
    %389 = vmatmul.mubr.f32.gmra.mrb[0].mxu0 %v319
    %v390 = vpop.f32.mrb[0].mxu0
    %v391 = vadd.f32 0.0, %v390
    %v392 = vpop.f32.mrb[0].mxu0
    %393 = vmatprep.mubr.f32.mxu0 0.0
    %394 = vmatmul.mubr.f32.gmra.mrb[0].mxu0 %v322
    %v395 = vpop.f32.mrb[0].mxu0
    %v396 = vadd.f32 0.0, %v395
    %v397 = vpop.f32.mrb[0].mxu0
    %398 = vdwg.mxu0
    %v400 = vsel %vm74, %v50, 0
    %v403 = vsel %vm74, %v51, 0
    %405 = vmatprep.subr.mxu0 0.0
    %406 = vmatpush1.msra.mxu0 %v66
    %407 = vmatprep.subr.mxu0 0.0
    %408 = vmatpush1.msra.mxu0 %v67
    %409 = vmatprep.subr.mxu0 0.0
    %410 = vmatpush1.msra.mxu0 0.0
    %411 = vmatprep.subr.mxu0 0.0
    %412 = vmatpush1.msra.mxu0 0.0
    %413 = vmatprep.subr.mxu0 0.0
    %414 = vmatpush1.msra.mxu0 0.0
    %415 = vmatprep.subr.mxu0 0.0
    %416 = vmatpush1.msra.mxu0 0.0
    %417 = vmatprep.subr.mxu0 0.0
    %418 = vmatpush1.msra.mxu0 0.0
    %419 = vmatprep.subr.mxu0 0.0
    %420 = vmatpush1.msra.mxu0 0.0
    %421 = vmatprep.subr.mxu0 0.0
    %422 = vmatpush1.msra.mxu0 0.0
    %423 = vmatprep.subr.mxu0 0.0
    %424 = vmatpush1.msra.mxu0 0.0
    %425 = vmatprep.subr.mxu0 0.0
    %426 = vmatpush1.msra.mxu0 0.0
    %427 = vmatprep.subr.mxu0 0.0
    %428 = vmatpush1.msra.mxu0 0.0
    %429 = vmatprep.subr.mxu0 0.0
    %430 = vmatpush1.msra.mxu0 0.0
    %431 = vmatprep.subr.mxu0 0.0
    %432 = vmatpush1.msra.mxu0 0.0
    %433 = vmatprep.subr.mxu0 0.0
    %434 = vmatpush1.msra.mxu0 0.0
    %435 = vmatprep.subr.mxu0 0.0
    %436 = vmatpush1.msra.mxu0 0.0
    %437 = vmatprep.subr.mxu0 0.0
    %438 = vmatpush1.msra.mxu0 0.0
    %439 = vmatprep.subr.mxu0 0.0
    %440 = vmatpush1.msra.mxu0 0.0
    %441 = vmatprep.subr.mxu0 0.0
    %442 = vmatpush1.msra.mxu0 0.0
    %443 = vmatprep.subr.mxu0 0.0
    %444 = vmatpush1.msra.mxu0 0.0
    %445 = vmatprep.subr.mxu0 0.0
    %446 = vmatpush1.msra.mxu0 0.0
    %447 = vmatprep.subr.mxu0 0.0
    %448 = vmatpush1.msra.mxu0 0.0
    %449 = vmatprep.subr.mxu0 0.0
    %450 = vmatpush1.msra.mxu0 0.0
    %451 = vmatprep.subr.mxu0 0.0
    %452 = vmatpush1.msra.mxu0 0.0
    %453 = vmatprep.subr.mxu0 0.0
    %454 = vmatpush1.msra.mxu0 0.0
    %455 = vmatprep.subr.mxu0 0.0
    %456 = vmatpush1.msra.mxu0 0.0
    %457 = vmatprep.subr.mxu0 0.0
    %458 = vmatpush1.msra.mxu0 0.0
    %459 = vmatprep.subr.mxu0 0.0
    %460 = vmatpush1.msra.mxu0 0.0
    %461 = vmatprep.subr.mxu0 0.0
    %462 = vmatpush1.msra.mxu0 0.0
    %463 = vmatprep.subr.mxu0 0.0
    %464 = vmatpush1.msra.mxu0 0.0
    %465 = vmatprep.subr.mxu0 0.0
    %466 = vmatpush1.msra.mxu0 0.0
    %467 = vmatprep.subr.mxu0 0.0
    %468 = vmatpush1.msra.mxu0 0.0
    %469 = vmatprep.mubr.f32.mxu0 0.0
    %470 = vmatmul.mubr.f32.gmra.mrb[0].mxu0 %v400
    %v471 = vpop.f32.mrb[0].mxu0
    %v472 = vadd.f32 0.0, %v471
    %v473 = vpop.f32.mrb[0].mxu0
    %474 = vmatprep.mubr.f32.mxu0 0.0
    %475 = vmatmul.mubr.f32.gmra.mrb[0].mxu0 %v403
    %v476 = vpop.f32.mrb[0].mxu0
    %v477 = vadd.f32 0.0, %v476
    %v478 = vpop.f32.mrb[0].mxu0
    %479 = vdwg.mxu0
    %v481 = vsel %vm74, %v52, 0
    %v484 = vsel %vm74, %v53, 0
    %486 = vmatprep.subr.mxu0 0.0
    %487 = vmatpush1.msra.mxu0 %v68
    %488 = vmatprep.subr.mxu0 0.0
    %489 = vmatpush1.msra.mxu0 %v69
    %490 = vmatprep.subr.mxu0 0.0
    %491 = vmatpush1.msra.mxu0 0.0
    %492 = vmatprep.subr.mxu0 0.0
    %493 = vmatpush1.msra.mxu0 0.0
    %494 = vmatprep.subr.mxu0 0.0
    %495 = vmatpush1.msra.mxu0 0.0
    %496 = vmatprep.subr.mxu0 0.0
    %497 = vmatpush1.msra.mxu0 0.0
    %498 = vmatprep.subr.mxu0 0.0
    %499 = vmatpush1.msra.mxu0 0.0
    %500 = vmatprep.subr.mxu0 0.0
    %501 = vmatpush1.msra.mxu0 0.0
    %502 = vmatprep.subr.mxu0 0.0
    %503 = vmatpush1.msra.mxu0 0.0
    %504 = vmatprep.subr.mxu0 0.0
    %505 = vmatpush1.msra.mxu0 0.0
    %506 = vmatprep.subr.mxu0 0.0
    %507 = vmatpush1.msra.mxu0 0.0
    %508 = vmatprep.subr.mxu0 0.0
    %509 = vmatpush1.msra.mxu0 0.0
    %510 = vmatprep.subr.mxu0 0.0
    %511 = vmatpush1.msra.mxu0 0.0
    %512 = vmatprep.subr.mxu0 0.0
    %513 = vmatpush1.msra.mxu0 0.0
    %514 = vmatprep.subr.mxu0 0.0
    %515 = vmatpush1.msra.mxu0 0.0
    %516 = vmatprep.subr.mxu0 0.0
    %517 = vmatpush1.msra.mxu0 0.0
    %518 = vmatprep.subr.mxu0 0.0
    %519 = vmatpush1.msra.mxu0 0.0
    %520 = vmatprep.subr.mxu0 0.0
    %521 = vmatpush1.msra.mxu0 0.0
    %522 = vmatprep.subr.mxu0 0.0
    %523 = vmatpush1.msra.mxu0 0.0
    %524 = vmatprep.subr.mxu0 0.0
    %525 = vmatpush1.msra.mxu0 0.0
    %526 = vmatprep.subr.mxu0 0.0
    %527 = vmatpush1.msra.mxu0 0.0
    %528 = vmatprep.subr.mxu0 0.0
    %529 = vmatpush1.msra.mxu0 0.0
    %530 = vmatprep.subr.mxu0 0.0
    %531 = vmatpush1.msra.mxu0 0.0
    %532 = vmatprep.subr.mxu0 0.0
    %533 = vmatpush1.msra.mxu0 0.0
    %534 = vmatprep.subr.mxu0 0.0
    %535 = vmatpush1.msra.mxu0 0.0
    %536 = vmatprep.subr.mxu0 0.0
    %537 = vmatpush1.msra.mxu0 0.0
    %538 = vmatprep.subr.mxu0 0.0
    %539 = vmatpush1.msra.mxu0 0.0
    %540 = vmatprep.subr.mxu0 0.0
    %541 = vmatpush1.msra.mxu0 0.0
    %542 = vmatprep.subr.mxu0 0.0
    %543 = vmatpush1.msra.mxu0 0.0
    %544 = vmatprep.subr.mxu0 0.0
    %545 = vmatpush1.msra.mxu0 0.0
    %546 = vmatprep.subr.mxu0 0.0
    %547 = vmatpush1.msra.mxu0 0.0
    %548 = vmatprep.subr.mxu0 0.0
    %549 = vmatpush1.msra.mxu0 0.0
    %550 = vmatprep.mubr.f32.mxu0 0.0
    %551 = vmatmul.mubr.f32.gmra.mrb[0].mxu0 %v481
    %v552 = vpop.f32.mrb[0].mxu0
    %v553 = vadd.f32 0.0, %v552
    %v554 = vpop.f32.mrb[0].mxu0
    %555 = vmatprep.mubr.f32.mxu0 0.0
    %556 = vmatmul.mubr.f32.gmra.mrb[0].mxu0 %v484
    %v557 = vpop.f32.mrb[0].mxu0
    %v558 = vadd.f32 0.0, %v557
    %v559 = vpop.f32.mrb[0].mxu0
    %560 = vdwg.mxu0
    %v562 = vsel %vm74, %v54, 0
    %v565 = vsel %vm74, %v55, 0
    %567 = vmatprep.subr.mxu0 0.0
    %568 = vmatpush1.msra.mxu0 %v70
    %569 = vmatprep.subr.mxu0 0.0
    %570 = vmatpush1.msra.mxu0 %v71
    %571 = vmatprep.subr.mxu0 0.0
    %572 = vmatpush1.msra.mxu0 0.0
    %573 = vmatprep.subr.mxu0 0.0
    %574 = vmatpush1.msra.mxu0 0.0
    %575 = vmatprep.subr.mxu0 0.0
    %576 = vmatpush1.msra.mxu0 0.0
    %577 = vmatprep.subr.mxu0 0.0
    %578 = vmatpush1.msra.mxu0 0.0
    %579 = vmatprep.subr.mxu0 0.0
    %580 = vmatpush1.msra.mxu0 0.0
    %581 = vmatprep.subr.mxu0 0.0
    %582 = vmatpush1.msra.mxu0 0.0
    %583 = vmatprep.subr.mxu0 0.0
    %584 = vmatpush1.msra.mxu0 0.0
    %585 = vmatprep.subr.mxu0 0.0
    %586 = vmatpush1.msra.mxu0 0.0
    %587 = vmatprep.subr.mxu0 0.0
    %588 = vmatpush1.msra.mxu0 0.0
    %589 = vmatprep.subr.mxu0 0.0
    %590 = vmatpush1.msra.mxu0 0.0
    %591 = vmatprep.subr.mxu0 0.0
    %592 = vmatpush1.msra.mxu0 0.0
    %593 = vmatprep.subr.mxu0 0.0
    %594 = vmatpush1.msra.mxu0 0.0
    %595 = vmatprep.subr.mxu0 0.0
    %596 = vmatpush1.msra.mxu0 0.0
    %597 = vmatprep.subr.mxu0 0.0
    %598 = vmatpush1.msra.mxu0 0.0
    %599 = vmatprep.subr.mxu0 0.0
    %600 = vmatpush1.msra.mxu0 0.0
    %601 = vmatprep.subr.mxu0 0.0
    %602 = vmatpush1.msra.mxu0 0.0
    %603 = vmatprep.subr.mxu0 0.0
    %604 = vmatpush1.msra.mxu0 0.0
    %605 = vmatprep.subr.mxu0 0.0
    %606 = vmatpush1.msra.mxu0 0.0
    %607 = vmatprep.subr.mxu0 0.0
    %608 = vmatpush1.msra.mxu0 0.0
    %609 = vmatprep.subr.mxu0 0.0
    %610 = vmatpush1.msra.mxu0 0.0
    %611 = vmatprep.subr.mxu0 0.0
    %612 = vmatpush1.msra.mxu0 0.0
    %613 = vmatprep.subr.mxu0 0.0
    %614 = vmatpush1.msra.mxu0 0.0
    %615 = vmatprep.subr.mxu0 0.0
    %616 = vmatpush1.msra.mxu0 0.0
    %617 = vmatprep.subr.mxu0 0.0
    %618 = vmatpush1.msra.mxu0 0.0
    %619 = vmatprep.subr.mxu0 0.0
    %620 = vmatpush1.msra.mxu0 0.0
    %621 = vmatprep.subr.mxu0 0.0
    %622 = vmatpush1.msra.mxu0 0.0
    %623 = vmatprep.subr.mxu0 0.0
    %624 = vmatpush1.msra.mxu0 0.0
    %625 = vmatprep.subr.mxu0 0.0
    %626 = vmatpush1.msra.mxu0 0.0
    %627 = vmatprep.subr.mxu0 0.0
    %628 = vmatpush1.msra.mxu0 0.0
    %629 = vmatprep.subr.mxu0 0.0
    %630 = vmatpush1.msra.mxu0 0.0
    %631 = vmatprep.mubr.f32.mxu0 0.0
    %632 = vmatmul.mubr.f32.gmra.mrb[0].mxu0 %v562
    %v633 = vpop.f32.mrb[0].mxu0
    %v634 = vadd.f32 0.0, %v633
    %v635 = vpop.f32.mrb[0].mxu0
    %636 = vmatprep.mubr.f32.mxu0 0.0
    %637 = vmatmul.mubr.f32.gmra.mrb[0].mxu0 %v565
    %v638 = vpop.f32.mrb[0].mxu0
    %v639 = vadd.f32 0.0, %v638
    %v640 = vpop.f32.mrb[0].mxu0
    %641 = vdwg.mxu0
    %v643 = vsel %vm74, %v56, 0
    %v646 = vsel %vm74, %v57, 0
    %648 = vmatprep.subr.mxu0 0.0
    %649 = vmatpush1.msra.mxu0 %v72
    %650 = vmatprep.subr.mxu0 0.0
    %651 = vmatpush1.msra.mxu0 %v73
    %652 = vmatprep.subr.mxu0 0.0
    %653 = vmatpush1.msra.mxu0 0.0
    %654 = vmatprep.subr.mxu0 0.0
    %655 = vmatpush1.msra.mxu0 0.0
    %656 = vmatprep.subr.mxu0 0.0
    %657 = vmatpush1.msra.mxu0 0.0
    %658 = vmatprep.subr.mxu0 0.0
    %659 = vmatpush1.msra.mxu0 0.0
    %660 = vmatprep.subr.mxu0 0.0
    %661 = vmatpush1.msra.mxu0 0.0
    %662 = vmatprep.subr.mxu0 0.0
    %663 = vmatpush1.msra.mxu0 0.0
    %664 = vmatprep.subr.mxu0 0.0
    %665 = vmatpush1.msra.mxu0 0.0
    %666 = vmatprep.subr.mxu0 0.0
    %667 = vmatpush1.msra.mxu0 0.0
    %668 = vmatprep.subr.mxu0 0.0
    %669 = vmatpush1.msra.mxu0 0.0
    %670 = vmatprep.subr.mxu0 0.0
    %671 = vmatpush1.msra.mxu0 0.0
    %672 = vmatprep.subr.mxu0 0.0
    %673 = vmatpush1.msra.mxu0 0.0
    %674 = vmatprep.subr.mxu0 0.0
    %675 = vmatpush1.msra.mxu0 0.0
    %676 = vmatprep.subr.mxu0 0.0
    %677 = vmatpush1.msra.mxu0 0.0
    %678 = vmatprep.subr.mxu0 0.0
    %679 = vmatpush1.msra.mxu0 0.0
    %680 = vmatprep.subr.mxu0 0.0
    %681 = vmatpush1.msra.mxu0 0.0
    %682 = vmatprep.subr.mxu0 0.0
    %683 = vmatpush1.msra.mxu0 0.0
    %684 = vmatprep.subr.mxu0 0.0
    %685 = vmatpush1.msra.mxu0 0.0
    %686 = vmatprep.subr.mxu0 0.0
    %687 = vmatpush1.msra.mxu0 0.0
    %688 = vmatprep.subr.mxu0 0.0
    %689 = vmatpush1.msra.mxu0 0.0
    %690 = vmatprep.subr.mxu0 0.0
    %691 = vmatpush1.msra.mxu0 0.0
    %692 = vmatprep.subr.mxu0 0.0
    %693 = vmatpush1.msra.mxu0 0.0
    %694 = vmatprep.subr.mxu0 0.0
    %695 = vmatpush1.msra.mxu0 0.0
    %696 = vmatprep.subr.mxu0 0.0
    %697 = vmatpush1.msra.mxu0 0.0
    %698 = vmatprep.subr.mxu0 0.0
    %699 = vmatpush1.msra.mxu0 0.0
    %700 = vmatprep.subr.mxu0 0.0
    %701 = vmatpush1.msra.mxu0 0.0
    %702 = vmatprep.subr.mxu0 0.0
    %703 = vmatpush1.msra.mxu0 0.0
    %704 = vmatprep.subr.mxu0 0.0
    %705 = vmatpush1.msra.mxu0 0.0
    %706 = vmatprep.subr.mxu0 0.0
    %707 = vmatpush1.msra.mxu0 0.0
    %708 = vmatprep.subr.mxu0 0.0
    %709 = vmatpush1.msra.mxu0 0.0
    %710 = vmatprep.subr.mxu0 0.0
    %711 = vmatpush1.msra.mxu0 0.0
    %712 = vmatprep.mubr.f32.mxu0 0.0
    %713 = vmatmul.mubr.f32.gmra.mrb[0].mxu0 %v643
    %v714 = vpop.f32.mrb[0].mxu0
    %v715 = vadd.f32 0.0, %v714
    %v716 = vpop.f32.mrb[0].mxu0
    %717 = vmatprep.mubr.f32.mxu0 0.0
    %718 = vmatmul.mubr.f32.gmra.mrb[0].mxu0 %v646
    %v719 = vpop.f32.mrb[0].mxu0
    %v720 = vadd.f32 0.0, %v719
    %v721 = vpop.f32.mrb[0].mxu0
    %722 = vdwg.mxu0
    %v723 = vld [vmem:[#allocation2] sm:$0xff]
    %v724 = vld [vmem:[%s3] sm:$0xff]
    %vm725 = vcmask 64512
    %v727 = vsel %vm725, %v148, 0
    %v730 = vsel %vm725, %v153, 0
    %v733 = vsel %vm725, %v229, 0
    %v736 = vsel %vm725, %v234, 0
    %v739 = vsel %vm725, %v310, 0
    %v742 = vsel %vm725, %v315, 0
    %v745 = vsel %vm725, %v391, 0
    %v748 = vsel %vm725, %v396, 0
    %v751 = vsel %vm725, %v472, 0
    %v754 = vsel %vm725, %v477, 0
    %v757 = vsel %vm725, %v553, 0
    %v760 = vsel %vm725, %v558, 0
    %v763 = vsel %vm725, %v634, 0
    %v766 = vsel %vm725, %v639, 0
    %v769 = vsel %vm725, %v715, 0
    %v772 = vsel %vm725, %v720, 0
    %774 = vmatprep.subr.mxu0 0.0
    %775 = vmatpush1.msra.mxu0 %v724
    %776 = vmatprep.subr.mxu0 0.0
    %777 = vmatpush1.msra.mxu0 0.0
    %778 = vmatprep.subr.mxu0 0.0
    %779 = vmatpush1.msra.mxu0 0.0
    %780 = vmatprep.subr.mxu0 0.0
    %781 = vmatpush1.msra.mxu0 0.0
    %782 = vmatprep.subr.mxu0 0.0
    %783 = vmatpush1.msra.mxu0 0.0
    %784 = vmatprep.subr.mxu0 0.0
    %785 = vmatpush1.msra.mxu0 0.0
    %786 = vmatprep.subr.mxu0 0.0
    %787 = vmatpush1.msra.mxu0 0.0
    %788 = vmatprep.subr.mxu0 0.0
    %789 = vmatpush1.msra.mxu0 0.0
    %790 = vmatprep.subr.mxu0 0.0
    %791 = vmatpush1.msra.mxu0 0.0
    %792 = vmatprep.subr.mxu0 0.0
    %793 = vmatpush1.msra.mxu0 0.0
    %794 = vmatprep.subr.mxu0 0.0
    %795 = vmatpush1.msra.mxu0 0.0
    %796 = vmatprep.subr.mxu0 0.0
    %797 = vmatpush1.msra.mxu0 0.0
    %798 = vmatprep.subr.mxu0 0.0
    %799 = vmatpush1.msra.mxu0 0.0
    %800 = vmatprep.subr.mxu0 0.0
    %801 = vmatpush1.msra.mxu0 0.0
    %802 = vmatprep.subr.mxu0 0.0
    %803 = vmatpush1.msra.mxu0 0.0
    %804 = vmatprep.subr.mxu0 0.0
    %805 = vmatpush1.msra.mxu0 0.0
    %806 = vmatprep.subr.mxu0 0.0
    %807 = vmatpush1.msra.mxu0 0.0
    %808 = vmatprep.subr.mxu0 0.0
    %809 = vmatpush1.msra.mxu0 0.0
    %810 = vmatprep.subr.mxu0 0.0
    %811 = vmatpush1.msra.mxu0 0.0
    %812 = vmatprep.subr.mxu0 0.0
    %813 = vmatpush1.msra.mxu0 0.0
    %814 = vmatprep.subr.mxu0 0.0
    %815 = vmatpush1.msra.mxu0 0.0
    %816 = vmatprep.subr.mxu0 0.0
    %817 = vmatpush1.msra.mxu0 0.0
    %818 = vmatprep.subr.mxu0 0.0
    %819 = vmatpush1.msra.mxu0 0.0
    %820 = vmatprep.subr.mxu0 0.0
    %821 = vmatpush1.msra.mxu0 0.0
    %822 = vmatprep.subr.mxu0 0.0
    %823 = vmatpush1.msra.mxu0 0.0
    %824 = vmatprep.subr.mxu0 0.0
    %825 = vmatpush1.msra.mxu0 0.0
    %826 = vmatprep.subr.mxu0 0.0
    %827 = vmatpush1.msra.mxu0 0.0
    %828 = vmatprep.subr.mxu0 0.0
    %829 = vmatpush1.msra.mxu0 0.0
    %830 = vmatprep.subr.mxu0 0.0
    %831 = vmatpush1.msra.mxu0 0.0
    %832 = vmatprep.subr.mxu0 0.0
    %833 = vmatpush1.msra.mxu0 0.0
    %834 = vmatprep.subr.mxu0 0.0
    %835 = vmatpush1.msra.mxu0 0.0
    %836 = vmatprep.subr.mxu0 0.0
    %837 = vmatpush1.msra.mxu0 0.0
    %838 = vmatprep.mubr.f32.mxu0 0.0
    %839 = vmatmul.mubr.f32.gmra.mrb[0].mxu0 %v727
    %v840 = vpop.f32.mrb[0].mxu0
    %v841 = vadd.f32 0.0, %v840
    %v842 = vpop.f32.mrb[0].mxu0
    %843 = vmatprep.mubr.f32.mxu0 0.0
    %844 = vmatmul.mubr.f32.gmra.mrb[0].mxu0 %v730
    %v845 = vpop.f32.mrb[0].mxu0
    %v846 = vadd.f32 0.0, %v845
    %v847 = vpop.f32.mrb[0].mxu0
    %848 = vmatprep.mubr.f32.mxu0 0.0
    %849 = vmatmul.mubr.f32.gmra.mrb[0].mxu0 %v733
    %v850 = vpop.f32.mrb[0].mxu0
    %v851 = vadd.f32 0.0, %v850
    %v852 = vpop.f32.mrb[0].mxu0
    %853 = vmatprep.mubr.f32.mxu0 0.0
    %854 = vmatmul.mubr.f32.gmra.mrb[0].mxu0 %v736
    %v855 = vpop.f32.mrb[0].mxu0
    %v856 = vadd.f32 0.0, %v855
    %v857 = vpop.f32.mrb[0].mxu0
    %858 = vmatprep.mubr.f32.mxu0 0.0
    %859 = vmatmul.mubr.f32.gmra.mrb[0].mxu0 %v739
    %v860 = vpop.f32.mrb[0].mxu0
    %v861 = vadd.f32 0.0, %v860
    %v862 = vpop.f32.mrb[0].mxu0
    %863 = vmatprep.mubr.f32.mxu0 0.0
    %864 = vmatmul.mubr.f32.gmra.mrb[0].mxu0 %v742
    %v865 = vpop.f32.mrb[0].mxu0
    %v866 = vadd.f32 0.0, %v865
    %v867 = vpop.f32.mrb[0].mxu0
    %868 = vmatprep.mubr.f32.mxu0 0.0
    %869 = vmatmul.mubr.f32.gmra.mrb[0].mxu0 %v745
    %v870 = vpop.f32.mrb[0].mxu0
    %v871 = vadd.f32 0.0, %v870
    %v872 = vpop.f32.mrb[0].mxu0
    %873 = vmatprep.mubr.f32.mxu0 0.0
    %874 = vmatmul.mubr.f32.gmra.mrb[0].mxu0 %v748
    %v875 = vpop.f32.mrb[0].mxu0
    %v876 = vadd.f32 0.0, %v875
    %v877 = vpop.f32.mrb[0].mxu0
    %878 = vmatprep.mubr.f32.mxu0 0.0
    %879 = vmatmul.mubr.f32.gmra.mrb[0].mxu0 %v751
    %v880 = vpop.f32.mrb[0].mxu0
    %v881 = vadd.f32 0.0, %v880
    %v882 = vpop.f32.mrb[0].mxu0
    %883 = vmatprep.mubr.f32.mxu0 0.0
    %884 = vmatmul.mubr.f32.gmra.mrb[0].mxu0 %v754
    %v885 = vpop.f32.mrb[0].mxu0
    %v886 = vadd.f32 0.0, %v885
    %v887 = vpop.f32.mrb[0].mxu0
    %888 = vmatprep.mubr.f32.mxu0 0.0
    %889 = vmatmul.mubr.f32.gmra.mrb[0].mxu0 %v757
    %v890 = vpop.f32.mrb[0].mxu0
    %v891 = vadd.f32 0.0, %v890
    %v892 = vpop.f32.mrb[0].mxu0
    %893 = vmatprep.mubr.f32.mxu0 0.0
    %894 = vmatmul.mubr.f32.gmra.mrb[0].mxu0 %v760
    %v895 = vpop.f32.mrb[0].mxu0
    %v896 = vadd.f32 0.0, %v895
    %v897 = vpop.f32.mrb[0].mxu0
    %898 = vmatprep.mubr.f32.mxu0 0.0
    %899 = vmatmul.mubr.f32.gmra.mrb[0].mxu0 %v763
    %v900 = vpop.f32.mrb[0].mxu0
    %v901 = vadd.f32 0.0, %v900
    %v902 = vpop.f32.mrb[0].mxu0
    %903 = vmatprep.mubr.f32.mxu0 0.0
    %904 = vmatmul.mubr.f32.gmra.mrb[0].mxu0 %v766
    %v905 = vpop.f32.mrb[0].mxu0
    %v906 = vadd.f32 0.0, %v905
    %v907 = vpop.f32.mrb[0].mxu0
    %908 = vmatprep.mubr.f32.mxu0 0.0
    %909 = vmatmul.mubr.f32.gmra.mrb[0].mxu0 %v769
    %v910 = vpop.f32.mrb[0].mxu0
    %v911 = vadd.f32 0.0, %v910
    %v912 = vpop.f32.mrb[0].mxu0
    %913 = vmatprep.mubr.f32.mxu0 0.0
    %914 = vmatmul.mubr.f32.gmra.mrb[0].mxu0 %v772
    %v915 = vpop.f32.mrb[0].mxu0
    %v916 = vadd.f32 0.0, %v915
    %v917 = vpop.f32.mrb[0].mxu0
    %918 = vdwg.mxu0
    %v920 = vsel %vm725, %v58, 0
    %v923 = vsel %vm725, %v59, 0
    %v926 = vsel %vm725, %v60, 0
    %v929 = vsel %vm725, %v61, 0
    %v932 = vsel %vm725, %v62, 0
    %v935 = vsel %vm725, %v63, 0
    %v938 = vsel %vm725, %v64, 0
    %v941 = vsel %vm725, %v65, 0
    %v944 = vsel %vm725, %v66, 0
    %v947 = vsel %vm725, %v67, 0
    %v950 = vsel %vm725, %v68, 0
    %v953 = vsel %vm725, %v69, 0
    %v956 = vsel %vm725, %v70, 0
    %v959 = vsel %vm725, %v71, 0
    %v962 = vsel %vm725, %v72, 0
    %v965 = vsel %vm725, %v73, 0
    %967 = vmatprep.subr.mxu0 0.0
    %968 = vmatpush1.msra.mxu0 %v723
    %969 = vmatprep.subr.mxu0 0.0
    %970 = vmatpush1.msra.mxu0 0.0
    %971 = vmatprep.subr.mxu0 0.0
    %972 = vmatpush1.msra.mxu0 0.0
    %973 = vmatprep.subr.mxu0 0.0
    %974 = vmatpush1.msra.mxu0 0.0
    %975 = vmatprep.subr.mxu0 0.0
    %976 = vmatpush1.msra.mxu0 0.0
    %977 = vmatprep.subr.mxu0 0.0
    %978 = vmatpush1.msra.mxu0 0.0
    %979 = vmatprep.subr.mxu0 0.0
    %980 = vmatpush1.msra.mxu0 0.0
    %981 = vmatprep.subr.mxu0 0.0
    %982 = vmatpush1.msra.mxu0 0.0
    %983 = vmatprep.subr.mxu0 0.0
    %984 = vmatpush1.msra.mxu0 0.0
    %985 = vmatprep.subr.mxu0 0.0
    %986 = vmatpush1.msra.mxu0 0.0
    %987 = vmatprep.subr.mxu0 0.0
    %988 = vmatpush1.msra.mxu0 0.0
    %989 = vmatprep.subr.mxu0 0.0
    %990 = vmatpush1.msra.mxu0 0.0
    %991 = vmatprep.subr.mxu0 0.0
    %992 = vmatpush1.msra.mxu0 0.0
    %993 = vmatprep.subr.mxu0 0.0
    %994 = vmatpush1.msra.mxu0 0.0
    %995 = vmatprep.subr.mxu0 0.0
    %996 = vmatpush1.msra.mxu0 0.0
    %997 = vmatprep.subr.mxu0 0.0
    %998 = vmatpush1.msra.mxu0 0.0
    %999 = vmatprep.subr.mxu0 0.0
    %1000 = vmatpush1.msra.mxu0 0.0
    %1001 = vmatprep.subr.mxu0 0.0
    %1002 = vmatpush1.msra.mxu0 0.0
    %1003 = vmatprep.subr.mxu0 0.0
    %1004 = vmatpush1.msra.mxu0 0.0
    %1005 = vmatprep.subr.mxu0 0.0
    %1006 = vmatpush1.msra.mxu0 0.0
    %1007 = vmatprep.subr.mxu0 0.0
    %1008 = vmatpush1.msra.mxu0 0.0
    %1009 = vmatprep.subr.mxu0 0.0
    %1010 = vmatpush1.msra.mxu0 0.0
    %1011 = vmatprep.subr.mxu0 0.0
    %1012 = vmatpush1.msra.mxu0 0.0
    %1013 = vmatprep.subr.mxu0 0.0
    %1014 = vmatpush1.msra.mxu0 0.0
    %1015 = vmatprep.subr.mxu0 0.0
    %1016 = vmatpush1.msra.mxu0 0.0
    %1017 = vmatprep.subr.mxu0 0.0
    %1018 = vmatpush1.msra.mxu0 0.0
    %1019 = vmatprep.subr.mxu0 0.0
    %1020 = vmatpush1.msra.mxu0 0.0
    %1021 = vmatprep.subr.mxu0 0.0
    %1022 = vmatpush1.msra.mxu0 0.0
    %1023 = vmatprep.subr.mxu0 0.0
    %1024 = vmatpush1.msra.mxu0 0.0
    %1025 = vmatprep.subr.mxu0 0.0
    %1026 = vmatpush1.msra.mxu0 0.0
    %1027 = vmatprep.subr.mxu0 0.0
    %1028 = vmatpush1.msra.mxu0 0.0
    %1029 = vmatprep.subr.mxu0 0.0
    %1030 = vmatpush1.msra.mxu0 0.0
    %1031 = vmatprep.mubr.f32.mxu0 0.0
    %1032 = vmatmul.mubr.f32.gmra.mrb[0].mxu0 %v920
    %v1033 = vpop.f32.mrb[0].mxu0
    %v1034 = vadd.f32 %v841, %v1033
    %v1035 = vpop.f32.mrb[0].mxu0
    %1036 = vmatprep.mubr.f32.mxu0 0.0
    %1037 = vmatmul.mubr.f32.gmra.mrb[0].mxu0 %v923
    %v1038 = vpop.f32.mrb[0].mxu0
    %v1039 = vadd.f32 %v846, %v1038
    %v1040 = vpop.f32.mrb[0].mxu0
    %1041 = vmatprep.mubr.f32.mxu0 0.0
    %1042 = vmatmul.mubr.f32.gmra.mrb[0].mxu0 %v926
    %v1043 = vpop.f32.mrb[0].mxu0
    %v1044 = vadd.f32 %v851, %v1043
    %v1045 = vpop.f32.mrb[0].mxu0
    %1046 = vmatprep.mubr.f32.mxu0 0.0
    %1047 = vmatmul.mubr.f32.gmra.mrb[0].mxu0 %v929
    %v1048 = vpop.f32.mrb[0].mxu0
    %v1049 = vadd.f32 %v856, %v1048
    %v1050 = vpop.f32.mrb[0].mxu0
    %1051 = vmatprep.mubr.f32.mxu0 0.0
    %1052 = vmatmul.mubr.f32.gmra.mrb[0].mxu0 %v932
    %v1053 = vpop.f32.mrb[0].mxu0
    %v1054 = vadd.f32 %v861, %v1053
    %v1055 = vpop.f32.mrb[0].mxu0
    %1056 = vmatprep.mubr.f32.mxu0 0.0
    %1057 = vmatmul.mubr.f32.gmra.mrb[0].mxu0 %v935
    %v1058 = vpop.f32.mrb[0].mxu0
    %v1059 = vadd.f32 %v866, %v1058
    %v1060 = vpop.f32.mrb[0].mxu0
    %1061 = vmatprep.mubr.f32.mxu0 0.0
    %1062 = vmatmul.mubr.f32.gmra.mrb[0].mxu0 %v938
    %v1063 = vpop.f32.mrb[0].mxu0
    %v1064 = vadd.f32 %v871, %v1063
    %v1065 = vpop.f32.mrb[0].mxu0
    %1066 = vmatprep.mubr.f32.mxu0 0.0
    %1067 = vmatmul.mubr.f32.gmra.mrb[0].mxu0 %v941
    %v1068 = vpop.f32.mrb[0].mxu0
    %v1069 = vadd.f32 %v876, %v1068
    %v1070 = vpop.f32.mrb[0].mxu0
    %1071 = vmatprep.mubr.f32.mxu0 0.0
    %1072 = vmatmul.mubr.f32.gmra.mrb[0].mxu0 %v944
    %v1073 = vpop.f32.mrb[0].mxu0
    %v1074 = vadd.f32 %v881, %v1073
    %v1075 = vpop.f32.mrb[0].mxu0
    %1076 = vmatprep.mubr.f32.mxu0 0.0
    %1077 = vmatmul.mubr.f32.gmra.mrb[0].mxu0 %v947
    %v1078 = vpop.f32.mrb[0].mxu0
    %v1079 = vadd.f32 %v886, %v1078
    %v1080 = vpop.f32.mrb[0].mxu0
    %1081 = vmatprep.mubr.f32.mxu0 0.0
    %1082 = vmatmul.mubr.f32.gmra.mrb[0].mxu0 %v950
    %v1083 = vpop.f32.mrb[0].mxu0
    %v1084 = vadd.f32 %v891, %v1083
    %v1085 = vpop.f32.mrb[0].mxu0
    %1086 = vmatprep.mubr.f32.mxu0 0.0
    %1087 = vmatmul.mubr.f32.gmra.mrb[0].mxu0 %v953
    %v1088 = vpop.f32.mrb[0].mxu0
    %v1089 = vadd.f32 %v896, %v1088
    %v1090 = vpop.f32.mrb[0].mxu0
    %1091 = vmatprep.mubr.f32.mxu0 0.0
    %1092 = vmatmul.mubr.f32.gmra.mrb[0].mxu0 %v956
    %v1093 = vpop.f32.mrb[0].mxu0
    %v1094 = vadd.f32 %v901, %v1093
    %v1095 = vpop.f32.mrb[0].mxu0
    %1096 = vmatprep.mubr.f32.mxu0 0.0
    %1097 = vmatmul.mubr.f32.gmra.mrb[0].mxu0 %v959
    %v1098 = vpop.f32.mrb[0].mxu0
    %v1099 = vadd.f32 %v906, %v1098
    %v1100 = vpop.f32.mrb[0].mxu0
    %1101 = vmatprep.mubr.f32.mxu0 0.0
    %1102 = vmatmul.mubr.f32.gmra.mrb[0].mxu0 %v962
    %v1103 = vpop.f32.mrb[0].mxu0
    %v1104 = vadd.f32 %v911, %v1103
    %v1105 = vpop.f32.mrb[0].mxu0
    %1106 = vmatprep.mubr.f32.mxu0 0.0
    %1107 = vmatmul.mubr.f32.gmra.mrb[0].mxu0 %v965
    %v1108 = vpop.f32.mrb[0].mxu0
    %v1109 = vadd.f32 %v916, %v1108
    %v1110 = vpop.f32.mrb[0].mxu0
    %1111 = vdwg.mxu0
    %v1112 = vld [vmem:[%s4] sm:$0x1]
    %v1114 = vlaneseq
    %v1115 = vshrl.u32 %v1114, 7
    %v1116 = vsub.s32 0, %v1115
    %v1117 = vrot.slane %v1112, %v1116
    %v1119 = vadd.f32 %v1034, %v1117
    %v1120 = vadd.f32 %v1039, %v1117
    %v1121 = vadd.f32 %v1044, %v1117
    %v1122 = vadd.f32 %v1049, %v1117
    %v1123 = vadd.f32 %v1054, %v1117
    %v1124 = vadd.f32 %v1059, %v1117
    %v1125 = vadd.f32 %v1064, %v1117
    %v1126 = vadd.f32 %v1069, %v1117
    %v1127 = vadd.f32 %v1074, %v1117
    %v1128 = vadd.f32 %v1079, %v1117
    %v1129 = vadd.f32 %v1084, %v1117
    %v1130 = vadd.f32 %v1089, %v1117
    %v1131 = vadd.f32 %v1094, %v1117
    %v1132 = vadd.f32 %v1099, %v1117
    %v1133 = vadd.f32 %v1104, %v1117
    %v1134 = vadd.f32 %v1109, %v1117
    %v1135 = vmax.f32 %v1119, 0.0
    %v1136 = vmax.f32 %v1120, 0.0
    %v1137 = vmax.f32 %v1121, 0.0
    %v1138 = vmax.f32 %v1122, 0.0
    %v1139 = vmax.f32 %v1123, 0.0
    %v1140 = vmax.f32 %v1124, 0.0
    %v1141 = vmax.f32 %v1125, 0.0
    %v1142 = vmax.f32 %v1126, 0.0
    %v1143 = vmax.f32 %v1127, 0.0
    %v1144 = vmax.f32 %v1128, 0.0
    %v1145 = vmax.f32 %v1129, 0.0
    %v1146 = vmax.f32 %v1130, 0.0
    %v1147 = vmax.f32 %v1131, 0.0
    %v1148 = vmax.f32 %v1132, 0.0
    %v1149 = vmax.f32 %v1133, 0.0
    %v1150 = vmax.f32 %v1134, 0.0
    %1151 = vmatprep.subr.mxu0 0.0
    %1152 = vmatpush1.msra.mxu0 %v1135
    %1153 = vmatprep.subr.mxu0 0.0
    %1154 = vmatpush1.msra.mxu0 %v1136
    %1155 = vmatprep.subr.mxu0 0.0
    %1156 = vmatpush1.msra.mxu0 0.0
    %1157 = vmatprep.subr.mxu0 0.0
    %1158 = vmatpush1.msra.mxu0 0.0
    %1159 = vmatprep.subr.mxu0 0.0
    %1160 = vmatpush1.msra.mxu0 0.0
    %1161 = vmatprep.subr.mxu0 0.0
    %1162 = vmatpush1.msra.mxu0 0.0
    %1163 = vmatprep.subr.mxu0 0.0
    %1164 = vmatpush1.msra.mxu0 0.0
    %1165 = vmatprep.subr.mxu0 0.0
    %1166 = vmatpush1.msra.mxu0 0.0
    %1167 = vmatprep.subr.mxu0 0.0
    %1168 = vmatpush1.msra.mxu0 0.0
    %1169 = vmatprep.subr.mxu0 0.0
    %1170 = vmatpush1.msra.mxu0 0.0
    %1171 = vmatprep.subr.mxu0 0.0
    %1172 = vmatpush1.msra.mxu0 0.0
    %1173 = vmatprep.subr.mxu0 0.0
    %1174 = vmatpush1.msra.mxu0 0.0
    %1175 = vmatprep.subr.mxu0 0.0
    %1176 = vmatpush1.msra.mxu0 0.0
    %1177 = vmatprep.subr.mxu0 0.0
    %1178 = vmatpush1.msra.mxu0 0.0
    %1179 = vmatprep.subr.mxu0 0.0
    %1180 = vmatpush1.msra.mxu0 0.0
    %1181 = vmatprep.subr.mxu0 0.0
    %1182 = vmatpush1.msra.mxu0 0.0
    %1183 = vmatprep.subr.mxu0 0.0
    %1184 = vmatpush1.msra.mxu0 0.0
    %1185 = vmatprep.subr.mxu0 0.0
    %1186 = vmatpush1.msra.mxu0 0.0
    %1187 = vmatprep.subr.mxu0 0.0
    %1188 = vmatpush1.msra.mxu0 0.0
    %1189 = vmatprep.subr.mxu0 0.0
    %1190 = vmatpush1.msra.mxu0 0.0
    %1191 = vmatprep.subr.mxu0 0.0
    %1192 = vmatpush1.msra.mxu0 0.0
    %1193 = vmatprep.subr.mxu0 0.0
    %1194 = vmatpush1.msra.mxu0 0.0
    %1195 = vmatprep.subr.mxu0 0.0
    %1196 = vmatpush1.msra.mxu0 0.0
    %1197 = vmatprep.subr.mxu0 0.0
    %1198 = vmatpush1.msra.mxu0 0.0
    %1199 = vmatprep.subr.mxu0 0.0
    %1200 = vmatpush1.msra.mxu0 0.0
    %1201 = vmatprep.subr.mxu0 0.0
    %1202 = vmatpush1.msra.mxu0 0.0
    %1203 = vmatprep.subr.mxu0 0.0
    %1204 = vmatpush1.msra.mxu0 0.0
    %1205 = vmatprep.subr.mxu0 0.0
    %1206 = vmatpush1.msra.mxu0 0.0
    %1207 = vmatprep.subr.mxu0 0.0
    %1208 = vmatpush1.msra.mxu0 0.0
    %1209 = vmatprep.subr.mxu0 0.0
    %1210 = vmatpush1.msra.mxu0 0.0
    %1211 = vmatprep.subr.mxu0 0.0
    %1212 = vmatpush1.msra.mxu0 0.0
    %1213 = vmatprep.subr.mxu0 0.0
    %1214 = vmatpush1.msra.mxu0 0.0
    %1215 = vmatprep.mubr.f32.mxu0 0.0
    %1216 = vmatmul.mubr.f32.gmra.mrb[0].mxu0 %v76
    %v1217 = vpop.f32.mrb[0].mxu0
    %v1218 = vadd.f32 0.0, %v1217
    %v1219 = vpop.f32.mrb[0].mxu0
    %1220 = vmatprep.mubr.f32.mxu0 0.0
    %1221 = vmatmul.mubr.f32.gmra.mrb[0].mxu0 %v79
    %v1222 = vpop.f32.mrb[0].mxu0
    %v1223 = vadd.f32 0.0, %v1222
    %v1224 = vpop.f32.mrb[0].mxu0
    %1225 = vdwg.mxu0
    %1226 = vmatprep.subr.mxu0 0.0
    %1227 = vmatpush1.msra.mxu0 %v1137
    %1228 = vmatprep.subr.mxu0 0.0
    %1229 = vmatpush1.msra.mxu0 %v1138
    %1230 = vmatprep.subr.mxu0 0.0
    %1231 = vmatpush1.msra.mxu0 0.0
    %1232 = vmatprep.subr.mxu0 0.0
    %1233 = vmatpush1.msra.mxu0 0.0
    %1234 = vmatprep.subr.mxu0 0.0
    %1235 = vmatpush1.msra.mxu0 0.0
    %1236 = vmatprep.subr.mxu0 0.0
    %1237 = vmatpush1.msra.mxu0 0.0
    %1238 = vmatprep.subr.mxu0 0.0
    %1239 = vmatpush1.msra.mxu0 0.0
    %1240 = vmatprep.subr.mxu0 0.0
    %1241 = vmatpush1.msra.mxu0 0.0
    %1242 = vmatprep.subr.mxu0 0.0
    %1243 = vmatpush1.msra.mxu0 0.0
    %1244 = vmatprep.subr.mxu0 0.0
    %1245 = vmatpush1.msra.mxu0 0.0
    %1246 = vmatprep.subr.mxu0 0.0
    %1247 = vmatpush1.msra.mxu0 0.0
    %1248 = vmatprep.subr.mxu0 0.0
    %1249 = vmatpush1.msra.mxu0 0.0
    %1250 = vmatprep.subr.mxu0 0.0
    %1251 = vmatpush1.msra.mxu0 0.0
    %1252 = vmatprep.subr.mxu0 0.0
    %1253 = vmatpush1.msra.mxu0 0.0
    %1254 = vmatprep.subr.mxu0 0.0
    %1255 = vmatpush1.msra.mxu0 0.0
    %1256 = vmatprep.subr.mxu0 0.0
    %1257 = vmatpush1.msra.mxu0 0.0
    %1258 = vmatprep.subr.mxu0 0.0
    %1259 = vmatpush1.msra.mxu0 0.0
    %1260 = vmatprep.subr.mxu0 0.0
    %1261 = vmatpush1.msra.mxu0 0.0
    %1262 = vmatprep.subr.mxu0 0.0
    %1263 = vmatpush1.msra.mxu0 0.0
    %1264 = vmatprep.subr.mxu0 0.0
    %1265 = vmatpush1.msra.mxu0 0.0
    %1266 = vmatprep.subr.mxu0 0.0
    %1267 = vmatpush1.msra.mxu0 0.0
    %1268 = vmatprep.subr.mxu0 0.0
    %1269 = vmatpush1.msra.mxu0 0.0
    %1270 = vmatprep.subr.mxu0 0.0
    %1271 = vmatpush1.msra.mxu0 0.0
    %1272 = vmatprep.subr.mxu0 0.0
    %1273 = vmatpush1.msra.mxu0 0.0
    %1274 = vmatprep.subr.mxu0 0.0
    %1275 = vmatpush1.msra.mxu0 0.0
    %1276 = vmatprep.subr.mxu0 0.0
    %1277 = vmatpush1.msra.mxu0 0.0
    %1278 = vmatprep.subr.mxu0 0.0
    %1279 = vmatpush1.msra.mxu0 0.0
    %1280 = vmatprep.subr.mxu0 0.0
    %1281 = vmatpush1.msra.mxu0 0.0
    %1282 = vmatprep.subr.mxu0 0.0
    %1283 = vmatpush1.msra.mxu0 0.0
    %1284 = vmatprep.subr.mxu0 0.0
    %1285 = vmatpush1.msra.mxu0 0.0
    %1286 = vmatprep.subr.mxu0 0.0
    %1287 = vmatpush1.msra.mxu0 0.0
    %1288 = vmatprep.subr.mxu0 0.0
    %1289 = vmatpush1.msra.mxu0 0.0
    %1290 = vmatprep.mubr.f32.mxu0 0.0
    %1291 = vmatmul.mubr.f32.gmra.mrb[0].mxu0 %v157
    %v1292 = vpop.f32.mrb[0].mxu0
    %v1293 = vadd.f32 0.0, %v1292
    %v1294 = vpop.f32.mrb[0].mxu0
    %1295 = vmatprep.mubr.f32.mxu0 0.0
    %1296 = vmatmul.mubr.f32.gmra.mrb[0].mxu0 %v160
    %v1297 = vpop.f32.mrb[0].mxu0
    %v1298 = vadd.f32 0.0, %v1297
    %v1299 = vpop.f32.mrb[0].mxu0
    %1300 = vdwg.mxu0
    %1301 = vmatprep.subr.mxu0 0.0
    %1302 = vmatpush1.msra.mxu0 %v1139
    %1303 = vmatprep.subr.mxu0 0.0
    %1304 = vmatpush1.msra.mxu0 %v1140
    %1305 = vmatprep.subr.mxu0 0.0
    %1306 = vmatpush1.msra.mxu0 0.0
    %1307 = vmatprep.subr.mxu0 0.0
    %1308 = vmatpush1.msra.mxu0 0.0
    %1309 = vmatprep.subr.mxu0 0.0
    %1310 = vmatpush1.msra.mxu0 0.0
    %1311 = vmatprep.subr.mxu0 0.0
    %1312 = vmatpush1.msra.mxu0 0.0
    %1313 = vmatprep.subr.mxu0 0.0
    %1314 = vmatpush1.msra.mxu0 0.0
    %1315 = vmatprep.subr.mxu0 0.0
    %1316 = vmatpush1.msra.mxu0 0.0
    %1317 = vmatprep.subr.mxu0 0.0
    %1318 = vmatpush1.msra.mxu0 0.0
    %1319 = vmatprep.subr.mxu0 0.0
    %1320 = vmatpush1.msra.mxu0 0.0
    %1321 = vmatprep.subr.mxu0 0.0
    %1322 = vmatpush1.msra.mxu0 0.0
    %1323 = vmatprep.subr.mxu0 0.0
    %1324 = vmatpush1.msra.mxu0 0.0
    %1325 = vmatprep.subr.mxu0 0.0
    %1326 = vmatpush1.msra.mxu0 0.0
    %1327 = vmatprep.subr.mxu0 0.0
    %1328 = vmatpush1.msra.mxu0 0.0
    %1329 = vmatprep.subr.mxu0 0.0
    %1330 = vmatpush1.msra.mxu0 0.0
    %1331 = vmatprep.subr.mxu0 0.0
    %1332 = vmatpush1.msra.mxu0 0.0
    %1333 = vmatprep.subr.mxu0 0.0
    %1334 = vmatpush1.msra.mxu0 0.0
    %1335 = vmatprep.subr.mxu0 0.0
    %1336 = vmatpush1.msra.mxu0 0.0
    %1337 = vmatprep.subr.mxu0 0.0
    %1338 = vmatpush1.msra.mxu0 0.0
    %1339 = vmatprep.subr.mxu0 0.0
    %1340 = vmatpush1.msra.mxu0 0.0
    %1341 = vmatprep.subr.mxu0 0.0
    %1342 = vmatpush1.msra.mxu0 0.0
    %1343 = vmatprep.subr.mxu0 0.0
    %1344 = vmatpush1.msra.mxu0 0.0
    %1345 = vmatprep.subr.mxu0 0.0
    %1346 = vmatpush1.msra.mxu0 0.0
    %1347 = vmatprep.subr.mxu0 0.0
    %1348 = vmatpush1.msra.mxu0 0.0
    %1349 = vmatprep.subr.mxu0 0.0
    %1350 = vmatpush1.msra.mxu0 0.0
    %1351 = vmatprep.subr.mxu0 0.0
    %1352 = vmatpush1.msra.mxu0 0.0
    %1353 = vmatprep.subr.mxu0 0.0
    %1354 = vmatpush1.msra.mxu0 0.0
    %1355 = vmatprep.subr.mxu0 0.0
    %1356 = vmatpush1.msra.mxu0 0.0
    %1357 = vmatprep.subr.mxu0 0.0
    %1358 = vmatpush1.msra.mxu0 0.0
    %1359 = vmatprep.subr.mxu0 0.0
    %1360 = vmatpush1.msra.mxu0 0.0
    %1361 = vmatprep.subr.mxu0 0.0
    %1362 = vmatpush1.msra.mxu0 0.0
    %1363 = vmatprep.subr.mxu0 0.0
    %1364 = vmatpush1.msra.mxu0 0.0
    %1365 = vmatprep.mubr.f32.mxu0 0.0
    %1366 = vmatmul.mubr.f32.gmra.mrb[0].mxu0 %v238
    %v1367 = vpop.f32.mrb[0].mxu0
    %v1368 = vadd.f32 0.0, %v1367
    %v1369 = vpop.f32.mrb[0].mxu0
    %1370 = vmatprep.mubr.f32.mxu0 0.0
    %1371 = vmatmul.mubr.f32.gmra.mrb[0].mxu0 %v241
    %v1372 = vpop.f32.mrb[0].mxu0
    %v1373 = vadd.f32 0.0, %v1372
    %v1374 = vpop.f32.mrb[0].mxu0
    %1375 = vdwg.mxu0
    %1376 = vmatprep.subr.mxu0 0.0
    %1377 = vmatpush1.msra.mxu0 %v1141
    %1378 = vmatprep.subr.mxu0 0.0
    %1379 = vmatpush1.msra.mxu0 %v1142
    %1380 = vmatprep.subr.mxu0 0.0
    %1381 = vmatpush1.msra.mxu0 0.0
    %1382 = vmatprep.subr.mxu0 0.0
    %1383 = vmatpush1.msra.mxu0 0.0
    %1384 = vmatprep.subr.mxu0 0.0
    %1385 = vmatpush1.msra.mxu0 0.0
    %1386 = vmatprep.subr.mxu0 0.0
    %1387 = vmatpush1.msra.mxu0 0.0
    %1388 = vmatprep.subr.mxu0 0.0
    %1389 = vmatpush1.msra.mxu0 0.0
    %1390 = vmatprep.subr.mxu0 0.0
    %1391 = vmatpush1.msra.mxu0 0.0
    %1392 = vmatprep.subr.mxu0 0.0
    %1393 = vmatpush1.msra.mxu0 0.0
    %1394 = vmatprep.subr.mxu0 0.0
    %1395 = vmatpush1.msra.mxu0 0.0
    %1396 = vmatprep.subr.mxu0 0.0
    %1397 = vmatpush1.msra.mxu0 0.0
    %1398 = vmatprep.subr.mxu0 0.0
    %1399 = vmatpush1.msra.mxu0 0.0
    %1400 = vmatprep.subr.mxu0 0.0
    %1401 = vmatpush1.msra.mxu0 0.0
    %1402 = vmatprep.subr.mxu0 0.0
    %1403 = vmatpush1.msra.mxu0 0.0
    %1404 = vmatprep.subr.mxu0 0.0
    %1405 = vmatpush1.msra.mxu0 0.0
    %1406 = vmatprep.subr.mxu0 0.0
    %1407 = vmatpush1.msra.mxu0 0.0
    %1408 = vmatprep.subr.mxu0 0.0
    %1409 = vmatpush1.msra.mxu0 0.0
    %1410 = vmatprep.subr.mxu0 0.0
    %1411 = vmatpush1.msra.mxu0 0.0
    %1412 = vmatprep.subr.mxu0 0.0
    %1413 = vmatpush1.msra.mxu0 0.0
    %1414 = vmatprep.subr.mxu0 0.0
    %1415 = vmatpush1.msra.mxu0 0.0
    %1416 = vmatprep.subr.mxu0 0.0
    %1417 = vmatpush1.msra.mxu0 0.0
    %1418 = vmatprep.subr.mxu0 0.0
    %1419 = vmatpush1.msra.mxu0 0.0
    %1420 = vmatprep.subr.mxu0 0.0
    %1421 = vmatpush1.msra.mxu0 0.0
    %1422 = vmatprep.subr.mxu0 0.0
    %1423 = vmatpush1.msra.mxu0 0.0
    %1424 = vmatprep.subr.mxu0 0.0
    %1425 = vmatpush1.msra.mxu0 0.0
    %1426 = vmatprep.subr.mxu0 0.0
    %1427 = vmatpush1.msra.mxu0 0.0
    %1428 = vmatprep.subr.mxu0 0.0
    %1429 = vmatpush1.msra.mxu0 0.0
    %1430 = vmatprep.subr.mxu0 0.0
    %1431 = vmatpush1.msra.mxu0 0.0
    %1432 = vmatprep.subr.mxu0 0.0
    %1433 = vmatpush1.msra.mxu0 0.0
    %1434 = vmatprep.subr.mxu0 0.0
    %1435 = vmatpush1.msra.mxu0 0.0
    %1436 = vmatprep.subr.mxu0 0.0
    %1437 = vmatpush1.msra.mxu0 0.0
    %1438 = vmatprep.subr.mxu0 0.0
    %1439 = vmatpush1.msra.mxu0 0.0
    %1440 = vmatprep.mubr.f32.mxu0 0.0
    %1441 = vmatmul.mubr.f32.gmra.mrb[0].mxu0 %v319
    %v1442 = vpop.f32.mrb[0].mxu0
    %v1443 = vadd.f32 0.0, %v1442
    %v1444 = vpop.f32.mrb[0].mxu0
    %1445 = vmatprep.mubr.f32.mxu0 0.0
    %1446 = vmatmul.mubr.f32.gmra.mrb[0].mxu0 %v322
    %v1447 = vpop.f32.mrb[0].mxu0
    %v1448 = vadd.f32 0.0, %v1447
    %v1449 = vpop.f32.mrb[0].mxu0
    %1450 = vdwg.mxu0
    %1451 = vmatprep.subr.mxu0 0.0
    %1452 = vmatpush1.msra.mxu0 %v1143
    %1453 = vmatprep.subr.mxu0 0.0
    %1454 = vmatpush1.msra.mxu0 %v1144
    %1455 = vmatprep.subr.mxu0 0.0
    %1456 = vmatpush1.msra.mxu0 0.0
    %1457 = vmatprep.subr.mxu0 0.0
    %1458 = vmatpush1.msra.mxu0 0.0
    %1459 = vmatprep.subr.mxu0 0.0
    %1460 = vmatpush1.msra.mxu0 0.0
    %1461 = vmatprep.subr.mxu0 0.0
    %1462 = vmatpush1.msra.mxu0 0.0
    %1463 = vmatprep.subr.mxu0 0.0
    %1464 = vmatpush1.msra.mxu0 0.0
    %1465 = vmatprep.subr.mxu0 0.0
    %1466 = vmatpush1.msra.mxu0 0.0
    %1467 = vmatprep.subr.mxu0 0.0
    %1468 = vmatpush1.msra.mxu0 0.0
    %1469 = vmatprep.subr.mxu0 0.0
    %1470 = vmatpush1.msra.mxu0 0.0
    %1471 = vmatprep.subr.mxu0 0.0
    %1472 = vmatpush1.msra.mxu0 0.0
    %1473 = vmatprep.subr.mxu0 0.0
    %1474 = vmatpush1.msra.mxu0 0.0
    %1475 = vmatprep.subr.mxu0 0.0
    %1476 = vmatpush1.msra.mxu0 0.0
    %1477 = vmatprep.subr.mxu0 0.0
    %1478 = vmatpush1.msra.mxu0 0.0
    %1479 = vmatprep.subr.mxu0 0.0
    %1480 = vmatpush1.msra.mxu0 0.0
    %1481 = vmatprep.subr.mxu0 0.0
    %1482 = vmatpush1.msra.mxu0 0.0
    %1483 = vmatprep.subr.mxu0 0.0
    %1484 = vmatpush1.msra.mxu0 0.0
    %1485 = vmatprep.subr.mxu0 0.0
    %1486 = vmatpush1.msra.mxu0 0.0
    %1487 = vmatprep.subr.mxu0 0.0
    %1488 = vmatpush1.msra.mxu0 0.0
    %1489 = vmatprep.subr.mxu0 0.0
    %1490 = vmatpush1.msra.mxu0 0.0
    %1491 = vmatprep.subr.mxu0 0.0
    %1492 = vmatpush1.msra.mxu0 0.0
    %1493 = vmatprep.subr.mxu0 0.0
    %1494 = vmatpush1.msra.mxu0 0.0
    %1495 = vmatprep.subr.mxu0 0.0
    %1496 = vmatpush1.msra.mxu0 0.0
    %1497 = vmatprep.subr.mxu0 0.0
    %1498 = vmatpush1.msra.mxu0 0.0
    %1499 = vmatprep.subr.mxu0 0.0
    %1500 = vmatpush1.msra.mxu0 0.0
    %1501 = vmatprep.subr.mxu0 0.0
    %1502 = vmatpush1.msra.mxu0 0.0
    %1503 = vmatprep.subr.mxu0 0.0
    %1504 = vmatpush1.msra.mxu0 0.0
    %1505 = vmatprep.subr.mxu0 0.0
    %1506 = vmatpush1.msra.mxu0 0.0
    %1507 = vmatprep.subr.mxu0 0.0
    %1508 = vmatpush1.msra.mxu0 0.0
    %1509 = vmatprep.subr.mxu0 0.0
    %1510 = vmatpush1.msra.mxu0 0.0
    %1511 = vmatprep.subr.mxu0 0.0
    %1512 = vmatpush1.msra.mxu0 0.0
    %1513 = vmatprep.subr.mxu0 0.0
    %1514 = vmatpush1.msra.mxu0 0.0
    %1515 = vmatprep.mubr.f32.mxu0 0.0
    %1516 = vmatmul.mubr.f32.gmra.mrb[0].mxu0 %v400
    %v1517 = vpop.f32.mrb[0].mxu0
    %v1518 = vadd.f32 0.0, %v1517
    %v1519 = vpop.f32.mrb[0].mxu0
    %1520 = vmatprep.mubr.f32.mxu0 0.0
    %1521 = vmatmul.mubr.f32.gmra.mrb[0].mxu0 %v403
    %v1522 = vpop.f32.mrb[0].mxu0
    %v1523 = vadd.f32 0.0, %v1522
    %v1524 = vpop.f32.mrb[0].mxu0
    %1525 = vdwg.mxu0
    %1526 = vmatprep.subr.mxu0 0.0
    %1527 = vmatpush1.msra.mxu0 %v1145
    %1528 = vmatprep.subr.mxu0 0.0
    %1529 = vmatpush1.msra.mxu0 %v1146
    %1530 = vmatprep.subr.mxu0 0.0
    %1531 = vmatpush1.msra.mxu0 0.0
    %1532 = vmatprep.subr.mxu0 0.0
    %1533 = vmatpush1.msra.mxu0 0.0
    %1534 = vmatprep.subr.mxu0 0.0
    %1535 = vmatpush1.msra.mxu0 0.0
    %1536 = vmatprep.subr.mxu0 0.0
    %1537 = vmatpush1.msra.mxu0 0.0
    %1538 = vmatprep.subr.mxu0 0.0
    %1539 = vmatpush1.msra.mxu0 0.0
    %1540 = vmatprep.subr.mxu0 0.0
    %1541 = vmatpush1.msra.mxu0 0.0
    %1542 = vmatprep.subr.mxu0 0.0
    %1543 = vmatpush1.msra.mxu0 0.0
    %1544 = vmatprep.subr.mxu0 0.0
    %1545 = vmatpush1.msra.mxu0 0.0
    %1546 = vmatprep.subr.mxu0 0.0
    %1547 = vmatpush1.msra.mxu0 0.0
    %1548 = vmatprep.subr.mxu0 0.0
    %1549 = vmatpush1.msra.mxu0 0.0
    %1550 = vmatprep.subr.mxu0 0.0
    %1551 = vmatpush1.msra.mxu0 0.0
    %1552 = vmatprep.subr.mxu0 0.0
    %1553 = vmatpush1.msra.mxu0 0.0
    %1554 = vmatprep.subr.mxu0 0.0
    %1555 = vmatpush1.msra.mxu0 0.0
    %1556 = vmatprep.subr.mxu0 0.0
    %1557 = vmatpush1.msra.mxu0 0.0
    %1558 = vmatprep.subr.mxu0 0.0
    %1559 = vmatpush1.msra.mxu0 0.0
    %1560 = vmatprep.subr.mxu0 0.0
    %1561 = vmatpush1.msra.mxu0 0.0
    %1562 = vmatprep.subr.mxu0 0.0
    %1563 = vmatpush1.msra.mxu0 0.0
    %1564 = vmatprep.subr.mxu0 0.0
    %1565 = vmatpush1.msra.mxu0 0.0
    %1566 = vmatprep.subr.mxu0 0.0
    %1567 = vmatpush1.msra.mxu0 0.0
    %1568 = vmatprep.subr.mxu0 0.0
    %1569 = vmatpush1.msra.mxu0 0.0
    %1570 = vmatprep.subr.mxu0 0.0
    %1571 = vmatpush1.msra.mxu0 0.0
    %1572 = vmatprep.subr.mxu0 0.0
    %1573 = vmatpush1.msra.mxu0 0.0
    %1574 = vmatprep.subr.mxu0 0.0
    %1575 = vmatpush1.msra.mxu0 0.0
    %1576 = vmatprep.subr.mxu0 0.0
    %1577 = vmatpush1.msra.mxu0 0.0
    %1578 = vmatprep.subr.mxu0 0.0
    %1579 = vmatpush1.msra.mxu0 0.0
    %1580 = vmatprep.subr.mxu0 0.0
    %1581 = vmatpush1.msra.mxu0 0.0
    %1582 = vmatprep.subr.mxu0 0.0
    %1583 = vmatpush1.msra.mxu0 0.0
    %1584 = vmatprep.subr.mxu0 0.0
    %1585 = vmatpush1.msra.mxu0 0.0
    %1586 = vmatprep.subr.mxu0 0.0
    %1587 = vmatpush1.msra.mxu0 0.0
    %1588 = vmatprep.subr.mxu0 0.0
    %1589 = vmatpush1.msra.mxu0 0.0
    %1590 = vmatprep.mubr.f32.mxu0 0.0
    %1591 = vmatmul.mubr.f32.gmra.mrb[0].mxu0 %v481
    %v1592 = vpop.f32.mrb[0].mxu0
    %v1593 = vadd.f32 0.0, %v1592
    %v1594 = vpop.f32.mrb[0].mxu0
    %1595 = vmatprep.mubr.f32.mxu0 0.0
    %1596 = vmatmul.mubr.f32.gmra.mrb[0].mxu0 %v484
    %v1597 = vpop.f32.mrb[0].mxu0
    %v1598 = vadd.f32 0.0, %v1597
    %v1599 = vpop.f32.mrb[0].mxu0
    %1600 = vdwg.mxu0
    %1601 = vmatprep.subr.mxu0 0.0
    %1602 = vmatpush1.msra.mxu0 %v1147
    %1603 = vmatprep.subr.mxu0 0.0
    %1604 = vmatpush1.msra.mxu0 %v1148
    %1605 = vmatprep.subr.mxu0 0.0
    %1606 = vmatpush1.msra.mxu0 0.0
    %1607 = vmatprep.subr.mxu0 0.0
    %1608 = vmatpush1.msra.mxu0 0.0
    %1609 = vmatprep.subr.mxu0 0.0
    %1610 = vmatpush1.msra.mxu0 0.0
    %1611 = vmatprep.subr.mxu0 0.0
    %1612 = vmatpush1.msra.mxu0 0.0
    %1613 = vmatprep.subr.mxu0 0.0
    %1614 = vmatpush1.msra.mxu0 0.0
    %1615 = vmatprep.subr.mxu0 0.0
    %1616 = vmatpush1.msra.mxu0 0.0
    %1617 = vmatprep.subr.mxu0 0.0
    %1618 = vmatpush1.msra.mxu0 0.0
    %1619 = vmatprep.subr.mxu0 0.0
    %1620 = vmatpush1.msra.mxu0 0.0
    %1621 = vmatprep.subr.mxu0 0.0
    %1622 = vmatpush1.msra.mxu0 0.0
    %1623 = vmatprep.subr.mxu0 0.0
    %1624 = vmatpush1.msra.mxu0 0.0
    %1625 = vmatprep.subr.mxu0 0.0
    %1626 = vmatpush1.msra.mxu0 0.0
    %1627 = vmatprep.subr.mxu0 0.0
    %1628 = vmatpush1.msra.mxu0 0.0
    %1629 = vmatprep.subr.mxu0 0.0
    %1630 = vmatpush1.msra.mxu0 0.0
    %1631 = vmatprep.subr.mxu0 0.0
    %1632 = vmatpush1.msra.mxu0 0.0
    %1633 = vmatprep.subr.mxu0 0.0
    %1634 = vmatpush1.msra.mxu0 0.0
    %1635 = vmatprep.subr.mxu0 0.0
    %1636 = vmatpush1.msra.mxu0 0.0
    %1637 = vmatprep.subr.mxu0 0.0
    %1638 = vmatpush1.msra.mxu0 0.0
    %1639 = vmatprep.subr.mxu0 0.0
    %1640 = vmatpush1.msra.mxu0 0.0
    %1641 = vmatprep.subr.mxu0 0.0
    %1642 = vmatpush1.msra.mxu0 0.0
    %1643 = vmatprep.subr.mxu0 0.0
    %1644 = vmatpush1.msra.mxu0 0.0
    %1645 = vmatprep.subr.mxu0 0.0
    %1646 = vmatpush1.msra.mxu0 0.0
    %1647 = vmatprep.subr.mxu0 0.0
    %1648 = vmatpush1.msra.mxu0 0.0
    %1649 = vmatprep.subr.mxu0 0.0
    %1650 = vmatpush1.msra.mxu0 0.0
    %1651 = vmatprep.subr.mxu0 0.0
    %1652 = vmatpush1.msra.mxu0 0.0
    %1653 = vmatprep.subr.mxu0 0.0
    %1654 = vmatpush1.msra.mxu0 0.0
    %1655 = vmatprep.subr.mxu0 0.0
    %1656 = vmatpush1.msra.mxu0 0.0
    %1657 = vmatprep.subr.mxu0 0.0
    %1658 = vmatpush1.msra.mxu0 0.0
    %1659 = vmatprep.subr.mxu0 0.0
    %1660 = vmatpush1.msra.mxu0 0.0
    %1661 = vmatprep.subr.mxu0 0.0
    %1662 = vmatpush1.msra.mxu0 0.0
    %1663 = vmatprep.subr.mxu0 0.0
    %1664 = vmatpush1.msra.mxu0 0.0
    %1665 = vmatprep.mubr.f32.mxu0 0.0
    %1666 = vmatmul.mubr.f32.gmra.mrb[0].mxu0 %v562
    %v1667 = vpop.f32.mrb[0].mxu0
    %v1668 = vadd.f32 0.0, %v1667
    %v1669 = vpop.f32.mrb[0].mxu0
    %1670 = vmatprep.mubr.f32.mxu0 0.0
    %1671 = vmatmul.mubr.f32.gmra.mrb[0].mxu0 %v565
    %v1672 = vpop.f32.mrb[0].mxu0
    %v1673 = vadd.f32 0.0, %v1672
    %v1674 = vpop.f32.mrb[0].mxu0
    %1675 = vdwg.mxu0
    %1676 = vmatprep.subr.mxu0 0.0
    %1677 = vmatpush1.msra.mxu0 %v1149
    %1678 = vmatprep.subr.mxu0 0.0
    %1679 = vmatpush1.msra.mxu0 %v1150
    %1680 = vmatprep.subr.mxu0 0.0
    %1681 = vmatpush1.msra.mxu0 0.0
    %1682 = vmatprep.subr.mxu0 0.0
    %1683 = vmatpush1.msra.mxu0 0.0
    %1684 = vmatprep.subr.mxu0 0.0
    %1685 = vmatpush1.msra.mxu0 0.0
    %1686 = vmatprep.subr.mxu0 0.0
    %1687 = vmatpush1.msra.mxu0 0.0
    %1688 = vmatprep.subr.mxu0 0.0
    %1689 = vmatpush1.msra.mxu0 0.0
    %1690 = vmatprep.subr.mxu0 0.0
    %1691 = vmatpush1.msra.mxu0 0.0
    %1692 = vmatprep.subr.mxu0 0.0
    %1693 = vmatpush1.msra.mxu0 0.0
    %1694 = vmatprep.subr.mxu0 0.0
    %1695 = vmatpush1.msra.mxu0 0.0
    %1696 = vmatprep.subr.mxu0 0.0
    %1697 = vmatpush1.msra.mxu0 0.0
    %1698 = vmatprep.subr.mxu0 0.0
    %1699 = vmatpush1.msra.mxu0 0.0
    %1700 = vmatprep.subr.mxu0 0.0
    %1701 = vmatpush1.msra.mxu0 0.0
    %1702 = vmatprep.subr.mxu0 0.0
    %1703 = vmatpush1.msra.mxu0 0.0
    %1704 = vmatprep.subr.mxu0 0.0
    %1705 = vmatpush1.msra.mxu0 0.0
    %1706 = vmatprep.subr.mxu0 0.0
    %1707 = vmatpush1.msra.mxu0 0.0
    %1708 = vmatprep.subr.mxu0 0.0
    %1709 = vmatpush1.msra.mxu0 0.0
    %1710 = vmatprep.subr.mxu0 0.0
    %1711 = vmatpush1.msra.mxu0 0.0
    %1712 = vmatprep.subr.mxu0 0.0
    %1713 = vmatpush1.msra.mxu0 0.0
    %1714 = vmatprep.subr.mxu0 0.0
    %1715 = vmatpush1.msra.mxu0 0.0
    %1716 = vmatprep.subr.mxu0 0.0
    %1717 = vmatpush1.msra.mxu0 0.0
    %1718 = vmatprep.subr.mxu0 0.0
    %1719 = vmatpush1.msra.mxu0 0.0
    %1720 = vmatprep.subr.mxu0 0.0
    %1721 = vmatpush1.msra.mxu0 0.0
    %1722 = vmatprep.subr.mxu0 0.0
    %1723 = vmatpush1.msra.mxu0 0.0
    %1724 = vmatprep.subr.mxu0 0.0
    %1725 = vmatpush1.msra.mxu0 0.0
    %1726 = vmatprep.subr.mxu0 0.0
    %1727 = vmatpush1.msra.mxu0 0.0
    %1728 = vmatprep.subr.mxu0 0.0
    %1729 = vmatpush1.msra.mxu0 0.0
    %1730 = vmatprep.subr.mxu0 0.0
    %1731 = vmatpush1.msra.mxu0 0.0
    %1732 = vmatprep.subr.mxu0 0.0
    %1733 = vmatpush1.msra.mxu0 0.0
    %1734 = vmatprep.subr.mxu0 0.0
    %1735 = vmatpush1.msra.mxu0 0.0
    %1736 = vmatprep.subr.mxu0 0.0
    %1737 = vmatpush1.msra.mxu0 0.0
    %1738 = vmatprep.subr.mxu0 0.0
    %1739 = vmatpush1.msra.mxu0 0.0
    %1740 = vmatprep.mubr.f32.mxu0 0.0
    %1741 = vmatmul.mubr.f32.gmra.mrb[0].mxu0 %v643
    %v1742 = vpop.f32.mrb[0].mxu0
    %v1743 = vadd.f32 0.0, %v1742
    %v1744 = vpop.f32.mrb[0].mxu0
    %1745 = vmatprep.mubr.f32.mxu0 0.0
    %1746 = vmatmul.mubr.f32.gmra.mrb[0].mxu0 %v646
    %v1747 = vpop.f32.mrb[0].mxu0
    %v1748 = vadd.f32 0.0, %v1747
    %v1749 = vpop.f32.mrb[0].mxu0
    %1750 = vdwg.mxu0
    %v1751 = vld [vmem:[%s5] sm:$0xff]
    %v1752 = vld [vmem:[%s5 + $0x8] sm:$0xff]
    %v1753 = vld [vmem:[%s5 + $0x10] sm:$0xff]
    %v1754 = vld [vmem:[%s5 + $0x18] sm:$0xff]
    %v1755 = vld [vmem:[%s6] sm:$0xff]
    %v1756 = vld [vmem:[%s6 + $0x8] sm:$0xff]
    %v1757 = vld [vmem:[%s6 + $0x10] sm:$0xff]
    %v1758 = vld [vmem:[%s6 + $0x18] sm:$0xff]
    %vm1759 = vcmask 261120
    %v1761 = vsel %vm1759, %v1218, 0
    %v1764 = vsel %vm1759, %v1223, 0
    %v1767 = vsel %vm1759, %v1293, 0
    %v1770 = vsel %vm1759, %v1298, 0
    %v1773 = vsel %vm1759, %v1368, 0
    %v1776 = vsel %vm1759, %v1373, 0
    %v1779 = vsel %vm1759, %v1443, 0
    %v1782 = vsel %vm1759, %v1448, 0
    %v1785 = vsel %vm1759, %v1518, 0
    %v1788 = vsel %vm1759, %v1523, 0
    %v1791 = vsel %vm1759, %v1593, 0
    %v1794 = vsel %vm1759, %v1598, 0
    %v1797 = vsel %vm1759, %v1668, 0
    %v1800 = vsel %vm1759, %v1673, 0
    %v1803 = vsel %vm1759, %v1743, 0
    %v1806 = vsel %vm1759, %v1748, 0
    %1808 = vmatprep.subr.mxu0 0.0
    %1809 = vmatpush1.msra.mxu0 %v1755
    %1810 = vmatprep.subr.mxu0 0.0
    %1811 = vmatpush1.msra.mxu0 %v1756
    %1812 = vmatprep.subr.mxu0 0.0
    %1813 = vmatpush1.msra.mxu0 %v1757
    %1814 = vmatprep.subr.mxu0 0.0
    %1815 = vmatpush1.msra.mxu0 %v1758
    %1816 = vmatprep.subr.mxu0 0.0
    %1817 = vmatpush1.msra.mxu0 0.0
    %1818 = vmatprep.subr.mxu0 0.0
    %1819 = vmatpush1.msra.mxu0 0.0
    %1820 = vmatprep.subr.mxu0 0.0
    %1821 = vmatpush1.msra.mxu0 0.0
    %1822 = vmatprep.subr.mxu0 0.0
    %1823 = vmatpush1.msra.mxu0 0.0
    %1824 = vmatprep.subr.mxu0 0.0
    %1825 = vmatpush1.msra.mxu0 0.0
    %1826 = vmatprep.subr.mxu0 0.0
    %1827 = vmatpush1.msra.mxu0 0.0
    %1828 = vmatprep.subr.mxu0 0.0
    %1829 = vmatpush1.msra.mxu0 0.0
    %1830 = vmatprep.subr.mxu0 0.0
    %1831 = vmatpush1.msra.mxu0 0.0
    %1832 = vmatprep.subr.mxu0 0.0
    %1833 = vmatpush1.msra.mxu0 0.0
    %1834 = vmatprep.subr.mxu0 0.0
    %1835 = vmatpush1.msra.mxu0 0.0
    %1836 = vmatprep.subr.mxu0 0.0
    %1837 = vmatpush1.msra.mxu0 0.0
    %1838 = vmatprep.subr.mxu0 0.0
    %1839 = vmatpush1.msra.mxu0 0.0
    %1840 = vmatprep.subr.mxu0 0.0
    %1841 = vmatpush1.msra.mxu0 0.0
    %1842 = vmatprep.subr.mxu0 0.0
    %1843 = vmatpush1.msra.mxu0 0.0
    %1844 = vmatprep.subr.mxu0 0.0
    %1845 = vmatpush1.msra.mxu0 0.0
    %1846 = vmatprep.subr.mxu0 0.0
    %1847 = vmatpush1.msra.mxu0 0.0
    %1848 = vmatprep.subr.mxu0 0.0
    %1849 = vmatpush1.msra.mxu0 0.0
    %1850 = vmatprep.subr.mxu0 0.0
    %1851 = vmatpush1.msra.mxu0 0.0
    %1852 = vmatprep.subr.mxu0 0.0
    %1853 = vmatpush1.msra.mxu0 0.0
    %1854 = vmatprep.subr.mxu0 0.0
    %1855 = vmatpush1.msra.mxu0 0.0
    %1856 = vmatprep.subr.mxu0 0.0
    %1857 = vmatpush1.msra.mxu0 0.0
    %1858 = vmatprep.subr.mxu0 0.0
    %1859 = vmatpush1.msra.mxu0 0.0
    %1860 = vmatprep.subr.mxu0 0.0
    %1861 = vmatpush1.msra.mxu0 0.0
    %1862 = vmatprep.subr.mxu0 0.0
    %1863 = vmatpush1.msra.mxu0 0.0
    %1864 = vmatprep.subr.mxu0 0.0
    %1865 = vmatpush1.msra.mxu0 0.0
    %1866 = vmatprep.subr.mxu0 0.0
    %1867 = vmatpush1.msra.mxu0 0.0
    %1868 = vmatprep.subr.mxu0 0.0
    %1869 = vmatpush1.msra.mxu0 0.0
    %1870 = vmatprep.subr.mxu0 0.0
    %1871 = vmatpush1.msra.mxu0 0.0
    %1872 = vmatprep.mubr.f32.mxu0 0.0
    %1873 = vmatmul.mubr.f32.gmra.mrb[0].mxu0 %v1761
    %v1874 = vpop.f32.mrb[0].mxu0
    %v1875 = vadd.f32 0.0, %v1874
    %v1876 = vpop.f32.mrb[0].mxu0
    %1877 = vmatprep.mubr.f32.mxu0 0.0
    %1878 = vmatmul.mubr.f32.gmra.mrb[0].mxu0 %v1764
    %v1879 = vpop.f32.mrb[0].mxu0
    %v1880 = vadd.f32 0.0, %v1879
    %v1881 = vpop.f32.mrb[0].mxu0
    %1882 = vmatprep.mubr.f32.mxu0 0.0
    %1883 = vmatmul.mubr.f32.gmra.mrb[0].mxu0 %v1767
    %v1884 = vpop.f32.mrb[0].mxu0
    %v1885 = vadd.f32 0.0, %v1884
    %v1886 = vpop.f32.mrb[0].mxu0
    %1887 = vmatprep.mubr.f32.mxu0 0.0
    %1888 = vmatmul.mubr.f32.gmra.mrb[0].mxu0 %v1770
    %v1889 = vpop.f32.mrb[0].mxu0
    %v1890 = vadd.f32 0.0, %v1889
    %v1891 = vpop.f32.mrb[0].mxu0
    %1892 = vmatprep.mubr.f32.mxu0 0.0
    %1893 = vmatmul.mubr.f32.gmra.mrb[0].mxu0 %v1773
    %v1894 = vpop.f32.mrb[0].mxu0
    %v1895 = vadd.f32 0.0, %v1894
    %v1896 = vpop.f32.mrb[0].mxu0
    %1897 = vmatprep.mubr.f32.mxu0 0.0
    %1898 = vmatmul.mubr.f32.gmra.mrb[0].mxu0 %v1776
    %v1899 = vpop.f32.mrb[0].mxu0
    %v1900 = vadd.f32 0.0, %v1899
    %v1901 = vpop.f32.mrb[0].mxu0
    %1902 = vmatprep.mubr.f32.mxu0 0.0
    %1903 = vmatmul.mubr.f32.gmra.mrb[0].mxu0 %v1779
    %v1904 = vpop.f32.mrb[0].mxu0
    %v1905 = vadd.f32 0.0, %v1904
    %v1906 = vpop.f32.mrb[0].mxu0
    %1907 = vmatprep.mubr.f32.mxu0 0.0
    %1908 = vmatmul.mubr.f32.gmra.mrb[0].mxu0 %v1782
    %v1909 = vpop.f32.mrb[0].mxu0
    %v1910 = vadd.f32 0.0, %v1909
    %v1911 = vpop.f32.mrb[0].mxu0
    %1912 = vmatprep.mubr.f32.mxu0 0.0
    %1913 = vmatmul.mubr.f32.gmra.mrb[0].mxu0 %v1785
    %v1914 = vpop.f32.mrb[0].mxu0
    %v1915 = vadd.f32 0.0, %v1914
    %v1916 = vpop.f32.mrb[0].mxu0
    %1917 = vmatprep.mubr.f32.mxu0 0.0
    %1918 = vmatmul.mubr.f32.gmra.mrb[0].mxu0 %v1788
    %v1919 = vpop.f32.mrb[0].mxu0
    %v1920 = vadd.f32 0.0, %v1919
    %v1921 = vpop.f32.mrb[0].mxu0
    %1922 = vmatprep.mubr.f32.mxu0 0.0
    %1923 = vmatmul.mubr.f32.gmra.mrb[0].mxu0 %v1791
    %v1924 = vpop.f32.mrb[0].mxu0
    %v1925 = vadd.f32 0.0, %v1924
    %v1926 = vpop.f32.mrb[0].mxu0
    %1927 = vmatprep.mubr.f32.mxu0 0.0
    %1928 = vmatmul.mubr.f32.gmra.mrb[0].mxu0 %v1794
    %v1929 = vpop.f32.mrb[0].mxu0
    %v1930 = vadd.f32 0.0, %v1929
    %v1931 = vpop.f32.mrb[0].mxu0
    %1932 = vmatprep.mubr.f32.mxu0 0.0
    %1933 = vmatmul.mubr.f32.gmra.mrb[0].mxu0 %v1797
    %v1934 = vpop.f32.mrb[0].mxu0
    %v1935 = vadd.f32 0.0, %v1934
    %v1936 = vpop.f32.mrb[0].mxu0
    %1937 = vmatprep.mubr.f32.mxu0 0.0
    %1938 = vmatmul.mubr.f32.gmra.mrb[0].mxu0 %v1800
    %v1939 = vpop.f32.mrb[0].mxu0
    %v1940 = vadd.f32 0.0, %v1939
    %v1941 = vpop.f32.mrb[0].mxu0
    %1942 = vmatprep.mubr.f32.mxu0 0.0
    %1943 = vmatmul.mubr.f32.gmra.mrb[0].mxu0 %v1803
    %v1944 = vpop.f32.mrb[0].mxu0
    %v1945 = vadd.f32 0.0, %v1944
    %v1946 = vpop.f32.mrb[0].mxu0
    %1947 = vmatprep.mubr.f32.mxu0 0.0
    %1948 = vmatmul.mubr.f32.gmra.mrb[0].mxu0 %v1806
    %v1949 = vpop.f32.mrb[0].mxu0
    %v1950 = vadd.f32 0.0, %v1949
    %v1951 = vpop.f32.mrb[0].mxu0
    %1952 = vdwg.mxu0
    %v1954 = vsel %vm1759, %v1135, 0
    %v1957 = vsel %vm1759, %v1136, 0
    %v1960 = vsel %vm1759, %v1137, 0
    %v1963 = vsel %vm1759, %v1138, 0
    %v1966 = vsel %vm1759, %v1139, 0
    %v1969 = vsel %vm1759, %v1140, 0
    %v1972 = vsel %vm1759, %v1141, 0
    %v1975 = vsel %vm1759, %v1142, 0
    %v1978 = vsel %vm1759, %v1143, 0
    %v1981 = vsel %vm1759, %v1144, 0
    %v1984 = vsel %vm1759, %v1145, 0
    %v1987 = vsel %vm1759, %v1146, 0
    %v1990 = vsel %vm1759, %v1147, 0
    %v1993 = vsel %vm1759, %v1148, 0
    %v1996 = vsel %vm1759, %v1149, 0
    %v1999 = vsel %vm1759, %v1150, 0
    %2001 = vmatprep.subr.mxu0 0.0
    %2002 = vmatpush1.msra.mxu0 %v1751
    %2003 = vmatprep.subr.mxu0 0.0
    %2004 = vmatpush1.msra.mxu0 %v1752
    %2005 = vmatprep.subr.mxu0 0.0
    %2006 = vmatpush1.msra.mxu0 %v1753
    %2007 = vmatprep.subr.mxu0 0.0
    %2008 = vmatpush1.msra.mxu0 %v1754
    %2009 = vmatprep.subr.mxu0 0.0
    %2010 = vmatpush1.msra.mxu0 0.0
    %2011 = vmatprep.subr.mxu0 0.0
    %2012 = vmatpush1.msra.mxu0 0.0
    %2013 = vmatprep.subr.mxu0 0.0
    %2014 = vmatpush1.msra.mxu0 0.0
    %2015 = vmatprep.subr.mxu0 0.0
    %2016 = vmatpush1.msra.mxu0 0.0
    %2017 = vmatprep.subr.mxu0 0.0
    %2018 = vmatpush1.msra.mxu0 0.0
    %2019 = vmatprep.subr.mxu0 0.0
    %2020 = vmatpush1.msra.mxu0 0.0
    %2021 = vmatprep.subr.mxu0 0.0
    %2022 = vmatpush1.msra.mxu0 0.0
    %2023 = vmatprep.subr.mxu0 0.0
    %2024 = vmatpush1.msra.mxu0 0.0
    %2025 = vmatprep.subr.mxu0 0.0
    %2026 = vmatpush1.msra.mxu0 0.0
    %2027 = vmatprep.subr.mxu0 0.0
    %2028 = vmatpush1.msra.mxu0 0.0
    %2029 = vmatprep.subr.mxu0 0.0
    %2030 = vmatpush1.msra.mxu0 0.0
    %2031 = vmatprep.subr.mxu0 0.0
    %2032 = vmatpush1.msra.mxu0 0.0
    %2033 = vmatprep.subr.mxu0 0.0
    %2034 = vmatpush1.msra.mxu0 0.0
    %2035 = vmatprep.subr.mxu0 0.0
    %2036 = vmatpush1.msra.mxu0 0.0
    %2037 = vmatprep.subr.mxu0 0.0
    %2038 = vmatpush1.msra.mxu0 0.0
    %2039 = vmatprep.subr.mxu0 0.0
    %2040 = vmatpush1.msra.mxu0 0.0
    %2041 = vmatprep.subr.mxu0 0.0
    %2042 = vmatpush1.msra.mxu0 0.0
    %2043 = vmatprep.subr.mxu0 0.0
    %2044 = vmatpush1.msra.mxu0 0.0
    %2045 = vmatprep.subr.mxu0 0.0
    %2046 = vmatpush1.msra.mxu0 0.0
    %2047 = vmatprep.subr.mxu0 0.0
    %2048 = vmatpush1.msra.mxu0 0.0
    %2049 = vmatprep.subr.mxu0 0.0
    %2050 = vmatpush1.msra.mxu0 0.0
    %2051 = vmatprep.subr.mxu0 0.0
    %2052 = vmatpush1.msra.mxu0 0.0
    %2053 = vmatprep.subr.mxu0 0.0
    %2054 = vmatpush1.msra.mxu0 0.0
    %2055 = vmatprep.subr.mxu0 0.0
    %2056 = vmatpush1.msra.mxu0 0.0
    %2057 = vmatprep.subr.mxu0 0.0
    %2058 = vmatpush1.msra.mxu0 0.0
    %2059 = vmatprep.subr.mxu0 0.0
    %2060 = vmatpush1.msra.mxu0 0.0
    %2061 = vmatprep.subr.mxu0 0.0
    %2062 = vmatpush1.msra.mxu0 0.0
    %2063 = vmatprep.subr.mxu0 0.0
    %2064 = vmatpush1.msra.mxu0 0.0
    %2065 = vmatprep.mubr.f32.mxu0 0.0
    %2066 = vmatmul.mubr.f32.gmra.mrb[0].mxu0 %v1954
    %v2067 = vpop.f32.mrb[0].mxu0
    %v2068 = vadd.f32 %v1875, %v2067
    %v2069 = vpop.f32.mrb[0].mxu0
    %2070 = vmatprep.mubr.f32.mxu0 0.0
    %2071 = vmatmul.mubr.f32.gmra.mrb[0].mxu0 %v1957
    %v2072 = vpop.f32.mrb[0].mxu0
    %v2073 = vadd.f32 %v1880, %v2072
    %v2074 = vpop.f32.mrb[0].mxu0
    %2075 = vmatprep.mubr.f32.mxu0 0.0
    %2076 = vmatmul.mubr.f32.gmra.mrb[0].mxu0 %v1960
    %v2077 = vpop.f32.mrb[0].mxu0
    %v2078 = vadd.f32 %v1885, %v2077
    %v2079 = vpop.f32.mrb[0].mxu0
    %2080 = vmatprep.mubr.f32.mxu0 0.0
    %2081 = vmatmul.mubr.f32.gmra.mrb[0].mxu0 %v1963
    %v2082 = vpop.f32.mrb[0].mxu0
    %v2083 = vadd.f32 %v1890, %v2082
    %v2084 = vpop.f32.mrb[0].mxu0
    %2085 = vmatprep.mubr.f32.mxu0 0.0
    %2086 = vmatmul.mubr.f32.gmra.mrb[0].mxu0 %v1966
    %v2087 = vpop.f32.mrb[0].mxu0
    %v2088 = vadd.f32 %v1895, %v2087
    %v2089 = vpop.f32.mrb[0].mxu0
    %2090 = vmatprep.mubr.f32.mxu0 0.0
    %2091 = vmatmul.mubr.f32.gmra.mrb[0].mxu0 %v1969
    %v2092 = vpop.f32.mrb[0].mxu0
    %v2093 = vadd.f32 %v1900, %v2092
    %v2094 = vpop.f32.mrb[0].mxu0
    %2095 = vmatprep.mubr.f32.mxu0 0.0
    %2096 = vmatmul.mubr.f32.gmra.mrb[0].mxu0 %v1972
    %v2097 = vpop.f32.mrb[0].mxu0
    %v2098 = vadd.f32 %v1905, %v2097
    %v2099 = vpop.f32.mrb[0].mxu0
    %2100 = vmatprep.mubr.f32.mxu0 0.0
    %2101 = vmatmul.mubr.f32.gmra.mrb[0].mxu0 %v1975
    %v2102 = vpop.f32.mrb[0].mxu0
    %v2103 = vadd.f32 %v1910, %v2102
    %v2104 = vpop.f32.mrb[0].mxu0
    %2105 = vmatprep.mubr.f32.mxu0 0.0
    %2106 = vmatmul.mubr.f32.gmra.mrb[0].mxu0 %v1978
    %v2107 = vpop.f32.mrb[0].mxu0
    %v2108 = vadd.f32 %v1915, %v2107
    %v2109 = vpop.f32.mrb[0].mxu0
    %2110 = vmatprep.mubr.f32.mxu0 0.0
    %2111 = vmatmul.mubr.f32.gmra.mrb[0].mxu0 %v1981
    %v2112 = vpop.f32.mrb[0].mxu0
    %v2113 = vadd.f32 %v1920, %v2112
    %v2114 = vpop.f32.mrb[0].mxu0
    %2115 = vmatprep.mubr.f32.mxu0 0.0
    %2116 = vmatmul.mubr.f32.gmra.mrb[0].mxu0 %v1984
    %v2117 = vpop.f32.mrb[0].mxu0
    %v2118 = vadd.f32 %v1925, %v2117
    %v2119 = vpop.f32.mrb[0].mxu0
    %2120 = vmatprep.mubr.f32.mxu0 0.0
    %2121 = vmatmul.mubr.f32.gmra.mrb[0].mxu0 %v1987
    %v2122 = vpop.f32.mrb[0].mxu0
    %v2123 = vadd.f32 %v1930, %v2122
    %v2124 = vpop.f32.mrb[0].mxu0
    %2125 = vmatprep.mubr.f32.mxu0 0.0
    %2126 = vmatmul.mubr.f32.gmra.mrb[0].mxu0 %v1990
    %v2127 = vpop.f32.mrb[0].mxu0
    %v2128 = vadd.f32 %v1935, %v2127
    %v2129 = vpop.f32.mrb[0].mxu0
    %2130 = vmatprep.mubr.f32.mxu0 0.0
    %2131 = vmatmul.mubr.f32.gmra.mrb[0].mxu0 %v1993
    %v2132 = vpop.f32.mrb[0].mxu0
    %v2133 = vadd.f32 %v1940, %v2132
    %v2134 = vpop.f32.mrb[0].mxu0
    %2135 = vmatprep.mubr.f32.mxu0 0.0
    %2136 = vmatmul.mubr.f32.gmra.mrb[0].mxu0 %v1996
    %v2137 = vpop.f32.mrb[0].mxu0
    %v2138 = vadd.f32 %v1945, %v2137
    %v2139 = vpop.f32.mrb[0].mxu0
    %2140 = vmatprep.mubr.f32.mxu0 0.0
    %2141 = vmatmul.mubr.f32.gmra.mrb[0].mxu0 %v1999
    %v2142 = vpop.f32.mrb[0].mxu0
    %v2143 = vadd.f32 %v1950, %v2142
    %v2144 = vpop.f32.mrb[0].mxu0
    %2145 = vdwg.mxu0
    %v2146 = vld [vmem:[%s7] sm:$0x1]
    %v2148 = vlaneseq
    %v2149 = vshrl.u32 %v2148, 7
    %v2150 = vsub.s32 0, %v2149
    %v2151 = vrot.slane %v2146, %v2150
    %v2153 = vadd.f32 %v2068, %v2151
    %v2154 = vadd.f32 %v2073, %v2151
    %v2155 = vadd.f32 %v2078, %v2151
    %v2156 = vadd.f32 %v2083, %v2151
    %v2157 = vadd.f32 %v2088, %v2151
    %v2158 = vadd.f32 %v2093, %v2151
    %v2159 = vadd.f32 %v2098, %v2151
    %v2160 = vadd.f32 %v2103, %v2151
    %v2161 = vadd.f32 %v2108, %v2151
    %v2162 = vadd.f32 %v2113, %v2151
    %v2163 = vadd.f32 %v2118, %v2151
    %v2164 = vadd.f32 %v2123, %v2151
    %v2165 = vadd.f32 %v2128, %v2151
    %v2166 = vadd.f32 %v2133, %v2151
    %v2167 = vadd.f32 %v2138, %v2151
    %v2168 = vadd.f32 %v2143, %v2151
    %vm2169 = vcmask 138368
    %v2170 = vsel %vm2169, %v2153, -inf
    %v2171 = vsel %vm2169, %v2154, -inf
    %v2172 = vmax.f32 %v2170, %v2171
    %v2173 = vrot.slane %v2172, 4
    %v2174 = vmax.f32 %v2172, %v2173
    %v2175 = vrot.slane %v2174, 2
    %v2176 = vmax.f32 %v2174, %v2175
    %v2177 = vrot.slane %v2176, 1
    %v2178 = vmax.f32 %v2176, %v2177
    %v2179 = vsel %vm2169, %v2155, -inf
    %v2180 = vsel %vm2169, %v2156, -inf
    %v2181 = vmax.f32 %v2179, %v2180
    %v2182 = vrot.slane %v2181, 4
    %v2183 = vmax.f32 %v2181, %v2182
    %v2184 = vrot.slane %v2183, 2
    %v2185 = vmax.f32 %v2183, %v2184
    %v2186 = vrot.slane %v2185, 1
    %v2187 = vmax.f32 %v2185, %v2186
    %v2188 = vsel %vm2169, %v2157, -inf
    %v2189 = vsel %vm2169, %v2158, -inf
    %v2190 = vmax.f32 %v2188, %v2189
    %v2191 = vrot.slane %v2190, 4
    %v2192 = vmax.f32 %v2190, %v2191
    %v2193 = vrot.slane %v2192, 2
    %v2194 = vmax.f32 %v2192, %v2193
    %v2195 = vrot.slane %v2194, 1
    %v2196 = vmax.f32 %v2194, %v2195
    %v2197 = vsel %vm2169, %v2159, -inf
    %v2198 = vsel %vm2169, %v2160, -inf
    %v2199 = vmax.f32 %v2197, %v2198
    %v2200 = vrot.slane %v2199, 4
    %v2201 = vmax.f32 %v2199, %v2200
    %v2202 = vrot.slane %v2201, 2
    %v2203 = vmax.f32 %v2201, %v2202
    %v2204 = vrot.slane %v2203, 1
    %v2205 = vmax.f32 %v2203, %v2204
    %v2206 = vsel %vm2169, %v2161, -inf
    %v2207 = vsel %vm2169, %v2162, -inf
    %v2208 = vmax.f32 %v2206, %v2207
    %v2209 = vrot.slane %v2208, 4
    %v2210 = vmax.f32 %v2208, %v2209
    %v2211 = vrot.slane %v2210, 2
    %v2212 = vmax.f32 %v2210, %v2211
    %v2213 = vrot.slane %v2212, 1
    %v2214 = vmax.f32 %v2212, %v2213
    %v2215 = vsel %vm2169, %v2163, -inf
    %v2216 = vsel %vm2169, %v2164, -inf
    %v2217 = vmax.f32 %v2215, %v2216
    %v2218 = vrot.slane %v2217, 4
    %v2219 = vmax.f32 %v2217, %v2218
    %v2220 = vrot.slane %v2219, 2
    %v2221 = vmax.f32 %v2219, %v2220
    %v2222 = vrot.slane %v2221, 1
    %v2223 = vmax.f32 %v2221, %v2222
    %v2224 = vsel %vm2169, %v2165, -inf
    %v2225 = vsel %vm2169, %v2166, -inf
    %v2226 = vmax.f32 %v2224, %v2225
    %v2227 = vrot.slane %v2226, 4
    %v2228 = vmax.f32 %v2226, %v2227
    %v2229 = vrot.slane %v2228, 2
    %v2230 = vmax.f32 %v2228, %v2229
    %v2231 = vrot.slane %v2230, 1
    %v2232 = vmax.f32 %v2230, %v2231
    %v2233 = vsel %vm2169, %v2167, -inf
    %v2234 = vsel %vm2169, %v2168, -inf
    %v2235 = vmax.f32 %v2233, %v2234
    %v2236 = vrot.slane %v2235, 4
    %v2237 = vmax.f32 %v2235, %v2236
    %v2238 = vrot.slane %v2237, 2
    %v2239 = vmax.f32 %v2237, %v2238
    %v2240 = vrot.slane %v2239, 1
    %v2241 = vmax.f32 %v2239, %v2240
    %v2242 = vsub.f32 %v2153, %v2178
    %v2243 = vsub.f32 %v2154, %v2178
    %v2244 = vsub.f32 %v2155, %v2187
    %v2245 = vsub.f32 %v2156, %v2187
    %v2246 = vsub.f32 %v2157, %v2196
    %v2247 = vsub.f32 %v2158, %v2196
    %v2248 = vsub.f32 %v2159, %v2205
    %v2249 = vsub.f32 %v2160, %v2205
    %v2250 = vsub.f32 %v2161, %v2214
    %v2251 = vsub.f32 %v2162, %v2214
    %v2252 = vsub.f32 %v2163, %v2223
    %v2253 = vsub.f32 %v2164, %v2223
    %v2254 = vsub.f32 %v2165, %v2232
    %v2255 = vsub.f32 %v2166, %v2232
    %v2256 = vsub.f32 %v2167, %v2241
    %v2257 = vsub.f32 %v2168, %v2241
    %v2258 = vmul.f32 %v2242, 1.442695
    %v2259 = vpow.pop %v2258
    %v2260 = vmul.f32 %v2243, 1.442695
    %v2261 = vpow.pop %v2260
    %v2262 = vmul.f32 %v2244, 1.442695
    %v2263 = vpow.pop %v2262
    %v2264 = vmul.f32 %v2245, 1.442695
    %v2265 = vpow.pop %v2264
    %v2266 = vmul.f32 %v2246, 1.442695
    %v2267 = vpow.pop %v2266
    %v2268 = vmul.f32 %v2247, 1.442695
    %v2269 = vpow.pop %v2268
    %v2270 = vmul.f32 %v2248, 1.442695
    %v2271 = vpow.pop %v2270
    %v2272 = vmul.f32 %v2249, 1.442695
    %v2273 = vpow.pop %v2272
    %v2274 = vmul.f32 %v2250, 1.442695
    %v2275 = vpow.pop %v2274
    %v2276 = vmul.f32 %v2251, 1.442695
    %v2277 = vpow.pop %v2276
    %v2278 = vmul.f32 %v2252, 1.442695
    %v2279 = vpow.pop %v2278
    %v2280 = vmul.f32 %v2253, 1.442695
    %v2281 = vpow.pop %v2280
    %v2282 = vmul.f32 %v2254, 1.442695
    %v2283 = vpow.pop %v2282
    %v2284 = vmul.f32 %v2255, 1.442695
    %v2285 = vpow.pop %v2284
    %v2286 = vmul.f32 %v2256, 1.442695
    %v2287 = vpow.pop %v2286
    %v2288 = vmul.f32 %v2257, 1.442695
    %v2289 = vpow.pop %v2288
    %v2290 = vsel %vm2169, %v2259, 0.0
    %v2291 = vsel %vm2169, %v2261, 0.0
    %v2292 = vadd.f32 %v2290, %v2291
    %v2293 = vrot.slane %v2292, 4
    %v2294 = vadd.f32 %v2292, %v2293
    %v2295 = vrot.slane %v2294, 2
    %v2296 = vadd.f32 %v2294, %v2295
    %v2297 = vrot.slane %v2296, 1
    %v2298 = vadd.f32 %v2296, %v2297
    %v2299 = vsel %vm2169, %v2263, 0.0
    %v2300 = vsel %vm2169, %v2265, 0.0
    %v2301 = vadd.f32 %v2299, %v2300
    %v2302 = vrot.slane %v2301, 4
    %v2303 = vadd.f32 %v2301, %v2302
    %v2304 = vrot.slane %v2303, 2
    %v2305 = vadd.f32 %v2303, %v2304
    %v2306 = vrot.slane %v2305, 1
    %v2307 = vadd.f32 %v2305, %v2306
    %v2308 = vsel %vm2169, %v2267, 0.0
    %v2309 = vsel %vm2169, %v2269, 0.0
    %v2310 = vadd.f32 %v2308, %v2309
    %v2311 = vrot.slane %v2310, 4
    %v2312 = vadd.f32 %v2310, %v2311
    %v2313 = vrot.slane %v2312, 2
    %v2314 = vadd.f32 %v2312, %v2313
    %v2315 = vrot.slane %v2314, 1
    %v2316 = vadd.f32 %v2314, %v2315
    %v2317 = vsel %vm2169, %v2271, 0.0
    %v2318 = vsel %vm2169, %v2273, 0.0
    %v2319 = vadd.f32 %v2317, %v2318
    %v2320 = vrot.slane %v2319, 4
    %v2321 = vadd.f32 %v2319, %v2320
    %v2322 = vrot.slane %v2321, 2
    %v2323 = vadd.f32 %v2321, %v2322
    %v2324 = vrot.slane %v2323, 1
    %v2325 = vadd.f32 %v2323, %v2324
    %v2326 = vsel %vm2169, %v2275, 0.0
    %v2327 = vsel %vm2169, %v2277, 0.0
    %v2328 = vadd.f32 %v2326, %v2327
    %v2329 = vrot.slane %v2328, 4
    %v2330 = vadd.f32 %v2328, %v2329
    %v2331 = vrot.slane %v2330, 2
    %v2332 = vadd.f32 %v2330, %v2331
    %v2333 = vrot.slane %v2332, 1
    %v2334 = vadd.f32 %v2332, %v2333
    %v2335 = vsel %vm2169, %v2279, 0.0
    %v2336 = vsel %vm2169, %v2281, 0.0
    %v2337 = vadd.f32 %v2335, %v2336
    %v2338 = vrot.slane %v2337, 4
    %v2339 = vadd.f32 %v2337, %v2338
    %v2340 = vrot.slane %v2339, 2
    %v2341 = vadd.f32 %v2339, %v2340
    %v2342 = vrot.slane %v2341, 1
    %v2343 = vadd.f32 %v2341, %v2342
    %v2344 = vsel %vm2169, %v2283, 0.0
    %v2345 = vsel %vm2169, %v2285, 0.0
    %v2346 = vadd.f32 %v2344, %v2345
    %v2347 = vrot.slane %v2346, 4
    %v2348 = vadd.f32 %v2346, %v2347
    %v2349 = vrot.slane %v2348, 2
    %v2350 = vadd.f32 %v2348, %v2349
    %v2351 = vrot.slane %v2350, 1
    %v2352 = vadd.f32 %v2350, %v2351
    %v2353 = vsel %vm2169, %v2287, 0.0
    %v2354 = vsel %vm2169, %v2289, 0.0
    %v2355 = vadd.f32 %v2353, %v2354
    %v2356 = vrot.slane %v2355, 4
    %v2357 = vadd.f32 %v2355, %v2356
    %v2358 = vrot.slane %v2357, 2
    %v2359 = vadd.f32 %v2357, %v2358
    %v2360 = vrot.slane %v2359, 1
    %v2361 = vadd.f32 %v2359, %v2360
    %v2362 = vrcp.pop %v2298
    %v2363 = vrcp.pop %v2307
    %v2364 = vrcp.pop %v2316
    %v2365 = vrcp.pop %v2325
    %v2366 = vrcp.pop %v2334
    %v2367 = vrcp.pop %v2343
    %v2368 = vrcp.pop %v2352
    %v2369 = vrcp.pop %v2361
    %2372 = vrot.lane.b32.xlu0 %v2259, 112
    %v2373 = vpop.permute.xlu0 %2372
    %2374 = vrot.lane.b32.xlu0 %v2261, 112
    %v2375 = vpop.permute.xlu0 %2374
    %2378 = vxpose.xlu0.b32.start [1/16] %v2373, 128
    %2379 = vxpose.xlu0.b32.cont [2/16] %v2375, 128
    %2380 = vxpose.xlu0.b32.cont [3/16] 0.0, 128
    %2381 = vxpose.xlu0.b32.cont [4/16] 0.0, 128
    %2382 = vxpose.xlu0.b32.cont [5/16] 0.0, 128
    %2383 = vxpose.xlu0.b32.cont [6/16] 0.0, 128
    %2384 = vxpose.xlu0.b32.cont [7/16] 0.0, 128
    %2385 = vxpose.xlu0.b32.cont [8/16] 0.0, 128
    %2386 = vxpose.xlu0.b32.cont [9/16] 0.0, 128
    %2387 = vxpose.xlu0.b32.cont [10/16] 0.0, 128
    %2388 = vxpose.xlu0.b32.cont [11/16] 0.0, 128
    %2389 = vxpose.xlu0.b32.cont [12/16] 0.0, 128
    %2390 = vxpose.xlu0.b32.cont [13/16] 0.0, 128
    %2391 = vxpose.xlu0.b32.cont [14/16] 0.0, 128
    %2392 = vxpose.xlu0.b32.cont [15/16] 0.0, 128
    %2393 = vxpose.xlu0.b32.end [16/16] 0.0, 128
    %v2394 = vpop.trf.xlu0
    %v2395 = vpop.trf.xlu0
    %v2396 = vpop.trf.xlu0
    %v2397 = vpop.trf.xlu0
    %v2398 = vpop.trf.xlu0
    %v2399 = vpop.trf.xlu0
    %v2400 = vpop.trf.xlu0
    %v2401 = vpop.trf.xlu0
    %v2402 = vpop.trf.xlu0
    %v2403 = vpop.trf.xlu0
    %v2404 = vpop.trf.xlu0
    %v2405 = vpop.trf.xlu0
    %v2406 = vpop.trf.xlu0
    %v2407 = vpop.trf.xlu0
    %v2408 = vpop.trf.xlu0
    %v2409 = vpop.trf.xlu0
    %v2411 = vsel %vm74, %v2394, 0
    %2413 = vmatprep.subr.mxu0 0.0
    %2414 = vmatpush1.msra.mxu0 %v2153
    %2415 = vmatprep.subr.mxu0 0.0
    %2416 = vmatpush1.msra.mxu0 %v2154
    %2417 = vmatprep.subr.mxu0 0.0
    %2418 = vmatpush1.msra.mxu0 0.0
    %2419 = vmatprep.subr.mxu0 0.0
    %2420 = vmatpush1.msra.mxu0 0.0
    %2421 = vmatprep.subr.mxu0 0.0
    %2422 = vmatpush1.msra.mxu0 0.0
    %2423 = vmatprep.subr.mxu0 0.0
    %2424 = vmatpush1.msra.mxu0 0.0
    %2425 = vmatprep.subr.mxu0 0.0
    %2426 = vmatpush1.msra.mxu0 0.0
    %2427 = vmatprep.subr.mxu0 0.0
    %2428 = vmatpush1.msra.mxu0 0.0
    %2429 = vmatprep.subr.mxu0 0.0
    %2430 = vmatpush1.msra.mxu0 0.0
    %2431 = vmatprep.subr.mxu0 0.0
    %2432 = vmatpush1.msra.mxu0 0.0
    %2433 = vmatprep.subr.mxu0 0.0
    %2434 = vmatpush1.msra.mxu0 0.0
    %2435 = vmatprep.subr.mxu0 0.0
    %2436 = vmatpush1.msra.mxu0 0.0
    %2437 = vmatprep.subr.mxu0 0.0
    %2438 = vmatpush1.msra.mxu0 0.0
    %2439 = vmatprep.subr.mxu0 0.0
    %2440 = vmatpush1.msra.mxu0 0.0
    %2441 = vmatprep.subr.mxu0 0.0
    %2442 = vmatpush1.msra.mxu0 0.0
    %2443 = vmatprep.subr.mxu0 0.0
    %2444 = vmatpush1.msra.mxu0 0.0
    %2445 = vmatprep.subr.mxu0 0.0
    %2446 = vmatpush1.msra.mxu0 0.0
    %2447 = vmatprep.subr.mxu0 0.0
    %2448 = vmatpush1.msra.mxu0 0.0
    %2449 = vmatprep.subr.mxu0 0.0
    %2450 = vmatpush1.msra.mxu0 0.0
    %2451 = vmatprep.subr.mxu0 0.0
    %2452 = vmatpush1.msra.mxu0 0.0
    %2453 = vmatprep.subr.mxu0 0.0
    %2454 = vmatpush1.msra.mxu0 0.0
    %2455 = vmatprep.subr.mxu0 0.0
    %2456 = vmatpush1.msra.mxu0 0.0
    %2457 = vmatprep.subr.mxu0 0.0
    %2458 = vmatpush1.msra.mxu0 0.0
    %2459 = vmatprep.subr.mxu0 0.0
    %2460 = vmatpush1.msra.mxu0 0.0
    %2461 = vmatprep.subr.mxu0 0.0
    %2462 = vmatpush1.msra.mxu0 0.0
    %2463 = vmatprep.subr.mxu0 0.0
    %2464 = vmatpush1.msra.mxu0 0.0
    %2465 = vmatprep.subr.mxu0 0.0
    %2466 = vmatpush1.msra.mxu0 0.0
    %2467 = vmatprep.subr.mxu0 0.0
    %2468 = vmatpush1.msra.mxu0 0.0
    %2469 = vmatprep.subr.mxu0 0.0
    %2470 = vmatpush1.msra.mxu0 0.0
    %2471 = vmatprep.subr.mxu0 0.0
    %2472 = vmatpush1.msra.mxu0 0.0
    %2473 = vmatprep.subr.mxu0 0.0
    %2474 = vmatpush1.msra.mxu0 0.0
    %2475 = vmatprep.subr.mxu0 0.0
    %2476 = vmatpush1.msra.mxu0 0.0
    %2477 = vmatprep.mubr.f32.mxu0 0.0
    %2478 = vmatmul.mubr.f32.gmra.mrb[0].mxu0 %v2411
    %v2479 = vpop.f32.mrb[0].mxu0
    %v2480 = vadd.f32 0.0, %v2479
    %v2481 = vpop.f32.mrb[0].mxu0
    %2482 = vdwg.mxu0
    %2485 = vrot.lane.b32.xlu0 %v2263, 112
    %v2486 = vpop.permute.xlu0 %2485
    %2487 = vrot.lane.b32.xlu0 %v2265, 112
    %v2488 = vpop.permute.xlu0 %2487
    %2491 = vxpose.xlu0.b32.start [1/16] %v2486, 128
    %2492 = vxpose.xlu0.b32.cont [2/16] %v2488, 128
    %2493 = vxpose.xlu0.b32.cont [3/16] 0.0, 128
    %2494 = vxpose.xlu0.b32.cont [4/16] 0.0, 128
    %2495 = vxpose.xlu0.b32.cont [5/16] 0.0, 128
    %2496 = vxpose.xlu0.b32.cont [6/16] 0.0, 128
    %2497 = vxpose.xlu0.b32.cont [7/16] 0.0, 128
    %2498 = vxpose.xlu0.b32.cont [8/16] 0.0, 128
    %2499 = vxpose.xlu0.b32.cont [9/16] 0.0, 128
    %2500 = vxpose.xlu0.b32.cont [10/16] 0.0, 128
    %2501 = vxpose.xlu0.b32.cont [11/16] 0.0, 128
    %2502 = vxpose.xlu0.b32.cont [12/16] 0.0, 128
    %2503 = vxpose.xlu0.b32.cont [13/16] 0.0, 128
    %2504 = vxpose.xlu0.b32.cont [14/16] 0.0, 128
    %2505 = vxpose.xlu0.b32.cont [15/16] 0.0, 128
    %2506 = vxpose.xlu0.b32.end [16/16] 0.0, 128
    %v2507 = vpop.trf.xlu0
    %v2508 = vpop.trf.xlu0
    %v2509 = vpop.trf.xlu0
    %v2510 = vpop.trf.xlu0
    %v2511 = vpop.trf.xlu0
    %v2512 = vpop.trf.xlu0
    %v2513 = vpop.trf.xlu0
    %v2514 = vpop.trf.xlu0
    %v2515 = vpop.trf.xlu0
    %v2516 = vpop.trf.xlu0
    %v2517 = vpop.trf.xlu0
    %v2518 = vpop.trf.xlu0
    %v2519 = vpop.trf.xlu0
    %v2520 = vpop.trf.xlu0
    %v2521 = vpop.trf.xlu0
    %v2522 = vpop.trf.xlu0
    %v2524 = vsel %vm74, %v2507, 0
    %2526 = vmatprep.subr.mxu0 0.0
    %2527 = vmatpush1.msra.mxu0 %v2155
    %2528 = vmatprep.subr.mxu0 0.0
    %2529 = vmatpush1.msra.mxu0 %v2156
    %2530 = vmatprep.subr.mxu0 0.0
    %2531 = vmatpush1.msra.mxu0 0.0
    %2532 = vmatprep.subr.mxu0 0.0
    %2533 = vmatpush1.msra.mxu0 0.0
    %2534 = vmatprep.subr.mxu0 0.0
    %2535 = vmatpush1.msra.mxu0 0.0
    %2536 = vmatprep.subr.mxu0 0.0
    %2537 = vmatpush1.msra.mxu0 0.0
    %2538 = vmatprep.subr.mxu0 0.0
    %2539 = vmatpush1.msra.mxu0 0.0
    %2540 = vmatprep.subr.mxu0 0.0
    %2541 = vmatpush1.msra.mxu0 0.0
    %2542 = vmatprep.subr.mxu0 0.0
    %2543 = vmatpush1.msra.mxu0 0.0
    %2544 = vmatprep.subr.mxu0 0.0
    %2545 = vmatpush1.msra.mxu0 0.0
    %2546 = vmatprep.subr.mxu0 0.0
    %2547 = vmatpush1.msra.mxu0 0.0
    %2548 = vmatprep.subr.mxu0 0.0
    %2549 = vmatpush1.msra.mxu0 0.0
    %2550 = vmatprep.subr.mxu0 0.0
    %2551 = vmatpush1.msra.mxu0 0.0
    %2552 = vmatprep.subr.mxu0 0.0
    %2553 = vmatpush1.msra.mxu0 0.0
    %2554 = vmatprep.subr.mxu0 0.0
    %2555 = vmatpush1.msra.mxu0 0.0
    %2556 = vmatprep.subr.mxu0 0.0
    %2557 = vmatpush1.msra.mxu0 0.0
    %2558 = vmatprep.subr.mxu0 0.0
    %2559 = vmatpush1.msra.mxu0 0.0
    %2560 = vmatprep.subr.mxu0 0.0
    %2561 = vmatpush1.msra.mxu0 0.0
    %2562 = vmatprep.subr.mxu0 0.0
    %2563 = vmatpush1.msra.mxu0 0.0
    %2564 = vmatprep.subr.mxu0 0.0
    %2565 = vmatpush1.msra.mxu0 0.0
    %2566 = vmatprep.subr.mxu0 0.0
    %2567 = vmatpush1.msra.mxu0 0.0
    %2568 = vmatprep.subr.mxu0 0.0
    %2569 = vmatpush1.msra.mxu0 0.0
    %2570 = vmatprep.subr.mxu0 0.0
    %2571 = vmatpush1.msra.mxu0 0.0
    %2572 = vmatprep.subr.mxu0 0.0
    %2573 = vmatpush1.msra.mxu0 0.0
    %2574 = vmatprep.subr.mxu0 0.0
    %2575 = vmatpush1.msra.mxu0 0.0
    %2576 = vmatprep.subr.mxu0 0.0
    %2577 = vmatpush1.msra.mxu0 0.0
    %2578 = vmatprep.subr.mxu0 0.0
    %2579 = vmatpush1.msra.mxu0 0.0
    %2580 = vmatprep.subr.mxu0 0.0
    %2581 = vmatpush1.msra.mxu0 0.0
    %2582 = vmatprep.subr.mxu0 0.0
    %2583 = vmatpush1.msra.mxu0 0.0
    %2584 = vmatprep.subr.mxu0 0.0
    %2585 = vmatpush1.msra.mxu0 0.0
    %2586 = vmatprep.subr.mxu0 0.0
    %2587 = vmatpush1.msra.mxu0 0.0
    %2588 = vmatprep.subr.mxu0 0.0
    %2589 = vmatpush1.msra.mxu0 0.0
    %2590 = vmatprep.mubr.f32.mxu0 0.0
    %2591 = vmatmul.mubr.f32.gmra.mrb[0].mxu0 %v2524
    %v2592 = vpop.f32.mrb[0].mxu0
    %v2593 = vadd.f32 0.0, %v2592
    %v2594 = vpop.f32.mrb[0].mxu0
    %2595 = vdwg.mxu0
    %2598 = vrot.lane.b32.xlu0 %v2267, 112
    %v2599 = vpop.permute.xlu0 %2598
    %2600 = vrot.lane.b32.xlu0 %v2269, 112
    %v2601 = vpop.permute.xlu0 %2600
    %2604 = vxpose.xlu0.b32.start [1/16] %v2599, 128
    %2605 = vxpose.xlu0.b32.cont [2/16] %v2601, 128
    %2606 = vxpose.xlu0.b32.cont [3/16] 0.0, 128
    %2607 = vxpose.xlu0.b32.cont [4/16] 0.0, 128
    %2608 = vxpose.xlu0.b32.cont [5/16] 0.0, 128
    %2609 = vxpose.xlu0.b32.cont [6/16] 0.0, 128
    %2610 = vxpose.xlu0.b32.cont [7/16] 0.0, 128
    %2611 = vxpose.xlu0.b32.cont [8/16] 0.0, 128
    %2612 = vxpose.xlu0.b32.cont [9/16] 0.0, 128
    %2613 = vxpose.xlu0.b32.cont [10/16] 0.0, 128
    %2614 = vxpose.xlu0.b32.cont [11/16] 0.0, 128
    %2615 = vxpose.xlu0.b32.cont [12/16] 0.0, 128
    %2616 = vxpose.xlu0.b32.cont [13/16] 0.0, 128
    %2617 = vxpose.xlu0.b32.cont [14/16] 0.0, 128
    %2618 = vxpose.xlu0.b32.cont [15/16] 0.0, 128
    %2619 = vxpose.xlu0.b32.end [16/16] 0.0, 128
    %v2620 = vpop.trf.xlu0
    %v2621 = vpop.trf.xlu0
    %v2622 = vpop.trf.xlu0
    %v2623 = vpop.trf.xlu0
    %v2624 = vpop.trf.xlu0
    %v2625 = vpop.trf.xlu0
    %v2626 = vpop.trf.xlu0
    %v2627 = vpop.trf.xlu0
    %v2628 = vpop.trf.xlu0
    %v2629 = vpop.trf.xlu0
    %v2630 = vpop.trf.xlu0
    %v2631 = vpop.trf.xlu0
    %v2632 = vpop.trf.xlu0
    %v2633 = vpop.trf.xlu0
    %v2634 = vpop.trf.xlu0
    %v2635 = vpop.trf.xlu0
    %v2637 = vsel %vm74, %v2620, 0
    %2639 = vmatprep.subr.mxu0 0.0
    %2640 = vmatpush1.msra.mxu0 %v2157
    %2641 = vmatprep.subr.mxu0 0.0
    %2642 = vmatpush1.msra.mxu0 %v2158
    %2643 = vmatprep.subr.mxu0 0.0
    %2644 = vmatpush1.msra.mxu0 0.0
    %2645 = vmatprep.subr.mxu0 0.0
    %2646 = vmatpush1.msra.mxu0 0.0
    %2647 = vmatprep.subr.mxu0 0.0
    %2648 = vmatpush1.msra.mxu0 0.0
    %2649 = vmatprep.subr.mxu0 0.0
    %2650 = vmatpush1.msra.mxu0 0.0
    %2651 = vmatprep.subr.mxu0 0.0
    %2652 = vmatpush1.msra.mxu0 0.0
    %2653 = vmatprep.subr.mxu0 0.0
    %2654 = vmatpush1.msra.mxu0 0.0
    %2655 = vmatprep.subr.mxu0 0.0
    %2656 = vmatpush1.msra.mxu0 0.0
    %2657 = vmatprep.subr.mxu0 0.0
    %2658 = vmatpush1.msra.mxu0 0.0
    %2659 = vmatprep.subr.mxu0 0.0
    %2660 = vmatpush1.msra.mxu0 0.0
    %2661 = vmatprep.subr.mxu0 0.0
    %2662 = vmatpush1.msra.mxu0 0.0
    %2663 = vmatprep.subr.mxu0 0.0
    %2664 = vmatpush1.msra.mxu0 0.0
    %2665 = vmatprep.subr.mxu0 0.0
    %2666 = vmatpush1.msra.mxu0 0.0
    %2667 = vmatprep.subr.mxu0 0.0
    %2668 = vmatpush1.msra.mxu0 0.0
    %2669 = vmatprep.subr.mxu0 0.0
    %2670 = vmatpush1.msra.mxu0 0.0
    %2671 = vmatprep.subr.mxu0 0.0
    %2672 = vmatpush1.msra.mxu0 0.0
    %2673 = vmatprep.subr.mxu0 0.0
    %2674 = vmatpush1.msra.mxu0 0.0
    %2675 = vmatprep.subr.mxu0 0.0
    %2676 = vmatpush1.msra.mxu0 0.0
    %2677 = vmatprep.subr.mxu0 0.0
    %2678 = vmatpush1.msra.mxu0 0.0
    %2679 = vmatprep.subr.mxu0 0.0
    %2680 = vmatpush1.msra.mxu0 0.0
    %2681 = vmatprep.subr.mxu0 0.0
    %2682 = vmatpush1.msra.mxu0 0.0
    %2683 = vmatprep.subr.mxu0 0.0
    %2684 = vmatpush1.msra.mxu0 0.0
    %2685 = vmatprep.subr.mxu0 0.0
    %2686 = vmatpush1.msra.mxu0 0.0
    %2687 = vmatprep.subr.mxu0 0.0
    %2688 = vmatpush1.msra.mxu0 0.0
    %2689 = vmatprep.subr.mxu0 0.0
    %2690 = vmatpush1.msra.mxu0 0.0
    %2691 = vmatprep.subr.mxu0 0.0
    %2692 = vmatpush1.msra.mxu0 0.0
    %2693 = vmatprep.subr.mxu0 0.0
    %2694 = vmatpush1.msra.mxu0 0.0
    %2695 = vmatprep.subr.mxu0 0.0
    %2696 = vmatpush1.msra.mxu0 0.0
    %2697 = vmatprep.subr.mxu0 0.0
    %2698 = vmatpush1.msra.mxu0 0.0
    %2699 = vmatprep.subr.mxu0 0.0
    %2700 = vmatpush1.msra.mxu0 0.0
    %2701 = vmatprep.subr.mxu0 0.0
    %2702 = vmatpush1.msra.mxu0 0.0
    %2703 = vmatprep.mubr.f32.mxu0 0.0
    %2704 = vmatmul.mubr.f32.gmra.mrb[0].mxu0 %v2637
    %v2705 = vpop.f32.mrb[0].mxu0
    %v2706 = vadd.f32 0.0, %v2705
    %v2707 = vpop.f32.mrb[0].mxu0
    %2708 = vdwg.mxu0
    %2711 = vrot.lane.b32.xlu0 %v2271, 112
    %v2712 = vpop.permute.xlu0 %2711
    %2713 = vrot.lane.b32.xlu0 %v2273, 112
    %v2714 = vpop.permute.xlu0 %2713
    %2717 = vxpose.xlu0.b32.start [1/16] %v2712, 128
    %2718 = vxpose.xlu0.b32.cont [2/16] %v2714, 128
    %2719 = vxpose.xlu0.b32.cont [3/16] 0.0, 128
    %2720 = vxpose.xlu0.b32.cont [4/16] 0.0, 128
    %2721 = vxpose.xlu0.b32.cont [5/16] 0.0, 128
    %2722 = vxpose.xlu0.b32.cont [6/16] 0.0, 128
    %2723 = vxpose.xlu0.b32.cont [7/16] 0.0, 128
    %2724 = vxpose.xlu0.b32.cont [8/16] 0.0, 128
    %2725 = vxpose.xlu0.b32.cont [9/16] 0.0, 128
    %2726 = vxpose.xlu0.b32.cont [10/16] 0.0, 128
    %2727 = vxpose.xlu0.b32.cont [11/16] 0.0, 128
    %2728 = vxpose.xlu0.b32.cont [12/16] 0.0, 128
    %2729 = vxpose.xlu0.b32.cont [13/16] 0.0, 128
    %2730 = vxpose.xlu0.b32.cont [14/16] 0.0, 128
    %2731 = vxpose.xlu0.b32.cont [15/16] 0.0, 128
    %2732 = vxpose.xlu0.b32.end [16/16] 0.0, 128
    %v2733 = vpop.trf.xlu0
    %v2734 = vpop.trf.xlu0
    %v2735 = vpop.trf.xlu0
    %v2736 = vpop.trf.xlu0
    %v2737 = vpop.trf.xlu0
    %v2738 = vpop.trf.xlu0
    %v2739 = vpop.trf.xlu0
    %v2740 = vpop.trf.xlu0
    %v2741 = vpop.trf.xlu0
    %v2742 = vpop.trf.xlu0
    %v2743 = vpop.trf.xlu0
    %v2744 = vpop.trf.xlu0
    %v2745 = vpop.trf.xlu0
    %v2746 = vpop.trf.xlu0
    %v2747 = vpop.trf.xlu0
    %v2748 = vpop.trf.xlu0
    %v2750 = vsel %vm74, %v2733, 0
    %2752 = vmatprep.subr.mxu0 0.0
    %2753 = vmatpush1.msra.mxu0 %v2159
    %2754 = vmatprep.subr.mxu0 0.0
    %2755 = vmatpush1.msra.mxu0 %v2160
    %2756 = vmatprep.subr.mxu0 0.0
    %2757 = vmatpush1.msra.mxu0 0.0
    %2758 = vmatprep.subr.mxu0 0.0
    %2759 = vmatpush1.msra.mxu0 0.0
    %2760 = vmatprep.subr.mxu0 0.0
    %2761 = vmatpush1.msra.mxu0 0.0
    %2762 = vmatprep.subr.mxu0 0.0
    %2763 = vmatpush1.msra.mxu0 0.0
    %2764 = vmatprep.subr.mxu0 0.0
    %2765 = vmatpush1.msra.mxu0 0.0
    %2766 = vmatprep.subr.mxu0 0.0
    %2767 = vmatpush1.msra.mxu0 0.0
    %2768 = vmatprep.subr.mxu0 0.0
    %2769 = vmatpush1.msra.mxu0 0.0
    %2770 = vmatprep.subr.mxu0 0.0
    %2771 = vmatpush1.msra.mxu0 0.0
    %2772 = vmatprep.subr.mxu0 0.0
    %2773 = vmatpush1.msra.mxu0 0.0
    %2774 = vmatprep.subr.mxu0 0.0
    %2775 = vmatpush1.msra.mxu0 0.0
    %2776 = vmatprep.subr.mxu0 0.0
    %2777 = vmatpush1.msra.mxu0 0.0
    %2778 = vmatprep.subr.mxu0 0.0
    %2779 = vmatpush1.msra.mxu0 0.0
    %2780 = vmatprep.subr.mxu0 0.0
    %2781 = vmatpush1.msra.mxu0 0.0
    %2782 = vmatprep.subr.mxu0 0.0
    %2783 = vmatpush1.msra.mxu0 0.0
    %2784 = vmatprep.subr.mxu0 0.0
    %2785 = vmatpush1.msra.mxu0 0.0
    %2786 = vmatprep.subr.mxu0 0.0
    %2787 = vmatpush1.msra.mxu0 0.0
    %2788 = vmatprep.subr.mxu0 0.0
    %2789 = vmatpush1.msra.mxu0 0.0
    %2790 = vmatprep.subr.mxu0 0.0
    %2791 = vmatpush1.msra.mxu0 0.0
    %2792 = vmatprep.subr.mxu0 0.0
    %2793 = vmatpush1.msra.mxu0 0.0
    %2794 = vmatprep.subr.mxu0 0.0
    %2795 = vmatpush1.msra.mxu0 0.0
    %2796 = vmatprep.subr.mxu0 0.0
    %2797 = vmatpush1.msra.mxu0 0.0
    %2798 = vmatprep.subr.mxu0 0.0
    %2799 = vmatpush1.msra.mxu0 0.0
    %2800 = vmatprep.subr.mxu0 0.0
    %2801 = vmatpush1.msra.mxu0 0.0
    %2802 = vmatprep.subr.mxu0 0.0
    %2803 = vmatpush1.msra.mxu0 0.0
    %2804 = vmatprep.subr.mxu0 0.0
    %2805 = vmatpush1.msra.mxu0 0.0
    %2806 = vmatprep.subr.mxu0 0.0
    %2807 = vmatpush1.msra.mxu0 0.0
    %2808 = vmatprep.subr.mxu0 0.0
    %2809 = vmatpush1.msra.mxu0 0.0
    %2810 = vmatprep.subr.mxu0 0.0
    %2811 = vmatpush1.msra.mxu0 0.0
    %2812 = vmatprep.subr.mxu0 0.0
    %2813 = vmatpush1.msra.mxu0 0.0
    %2814 = vmatprep.subr.mxu0 0.0
    %2815 = vmatpush1.msra.mxu0 0.0
    %2816 = vmatprep.mubr.f32.mxu0 0.0
    %2817 = vmatmul.mubr.f32.gmra.mrb[0].mxu0 %v2750
    %v2818 = vpop.f32.mrb[0].mxu0
    %v2819 = vadd.f32 0.0, %v2818
    %v2820 = vpop.f32.mrb[0].mxu0
    %2821 = vdwg.mxu0
    %2824 = vrot.lane.b32.xlu0 %v2275, 112
    %v2825 = vpop.permute.xlu0 %2824
    %2826 = vrot.lane.b32.xlu0 %v2277, 112
    %v2827 = vpop.permute.xlu0 %2826
    %2830 = vxpose.xlu0.b32.start [1/16] %v2825, 128
    %2831 = vxpose.xlu0.b32.cont [2/16] %v2827, 128
    %2832 = vxpose.xlu0.b32.cont [3/16] 0.0, 128
    %2833 = vxpose.xlu0.b32.cont [4/16] 0.0, 128
    %2834 = vxpose.xlu0.b32.cont [5/16] 0.0, 128
    %2835 = vxpose.xlu0.b32.cont [6/16] 0.0, 128
    %2836 = vxpose.xlu0.b32.cont [7/16] 0.0, 128
    %2837 = vxpose.xlu0.b32.cont [8/16] 0.0, 128
    %2838 = vxpose.xlu0.b32.cont [9/16] 0.0, 128
    %2839 = vxpose.xlu0.b32.cont [10/16] 0.0, 128
    %2840 = vxpose.xlu0.b32.cont [11/16] 0.0, 128
    %2841 = vxpose.xlu0.b32.cont [12/16] 0.0, 128
    %2842 = vxpose.xlu0.b32.cont [13/16] 0.0, 128
    %2843 = vxpose.xlu0.b32.cont [14/16] 0.0, 128
    %2844 = vxpose.xlu0.b32.cont [15/16] 0.0, 128
    %2845 = vxpose.xlu0.b32.end [16/16] 0.0, 128
    %v2846 = vpop.trf.xlu0
    %v2847 = vpop.trf.xlu0
    %v2848 = vpop.trf.xlu0
    %v2849 = vpop.trf.xlu0
    %v2850 = vpop.trf.xlu0
    %v2851 = vpop.trf.xlu0
    %v2852 = vpop.trf.xlu0
    %v2853 = vpop.trf.xlu0
    %v2854 = vpop.trf.xlu0
    %v2855 = vpop.trf.xlu0
    %v2856 = vpop.trf.xlu0
    %v2857 = vpop.trf.xlu0
    %v2858 = vpop.trf.xlu0
    %v2859 = vpop.trf.xlu0
    %v2860 = vpop.trf.xlu0
    %v2861 = vpop.trf.xlu0
    %v2863 = vsel %vm74, %v2846, 0
    %2865 = vmatprep.subr.mxu0 0.0
    %2866 = vmatpush1.msra.mxu0 %v2161
    %2867 = vmatprep.subr.mxu0 0.0
    %2868 = vmatpush1.msra.mxu0 %v2162
    %2869 = vmatprep.subr.mxu0 0.0
    %2870 = vmatpush1.msra.mxu0 0.0
    %2871 = vmatprep.subr.mxu0 0.0
    %2872 = vmatpush1.msra.mxu0 0.0
    %2873 = vmatprep.subr.mxu0 0.0
    %2874 = vmatpush1.msra.mxu0 0.0
    %2875 = vmatprep.subr.mxu0 0.0
    %2876 = vmatpush1.msra.mxu0 0.0
    %2877 = vmatprep.subr.mxu0 0.0
    %2878 = vmatpush1.msra.mxu0 0.0
    %2879 = vmatprep.subr.mxu0 0.0
    %2880 = vmatpush1.msra.mxu0 0.0
    %2881 = vmatprep.subr.mxu0 0.0
    %2882 = vmatpush1.msra.mxu0 0.0
    %2883 = vmatprep.subr.mxu0 0.0
    %2884 = vmatpush1.msra.mxu0 0.0
    %2885 = vmatprep.subr.mxu0 0.0
    %2886 = vmatpush1.msra.mxu0 0.0
    %2887 = vmatprep.subr.mxu0 0.0
    %2888 = vmatpush1.msra.mxu0 0.0
    %2889 = vmatprep.subr.mxu0 0.0
    %2890 = vmatpush1.msra.mxu0 0.0
    %2891 = vmatprep.subr.mxu0 0.0
    %2892 = vmatpush1.msra.mxu0 0.0
    %2893 = vmatprep.subr.mxu0 0.0
    %2894 = vmatpush1.msra.mxu0 0.0
    %2895 = vmatprep.subr.mxu0 0.0
    %2896 = vmatpush1.msra.mxu0 0.0
    %2897 = vmatprep.subr.mxu0 0.0
    %2898 = vmatpush1.msra.mxu0 0.0
    %2899 = vmatprep.subr.mxu0 0.0
    %2900 = vmatpush1.msra.mxu0 0.0
    %2901 = vmatprep.subr.mxu0 0.0
    %2902 = vmatpush1.msra.mxu0 0.0
    %2903 = vmatprep.subr.mxu0 0.0
    %2904 = vmatpush1.msra.mxu0 0.0
    %2905 = vmatprep.subr.mxu0 0.0
    %2906 = vmatpush1.msra.mxu0 0.0
    %2907 = vmatprep.subr.mxu0 0.0
    %2908 = vmatpush1.msra.mxu0 0.0
    %2909 = vmatprep.subr.mxu0 0.0
    %2910 = vmatpush1.msra.mxu0 0.0
    %2911 = vmatprep.subr.mxu0 0.0
    %2912 = vmatpush1.msra.mxu0 0.0
    %2913 = vmatprep.subr.mxu0 0.0
    %2914 = vmatpush1.msra.mxu0 0.0
    %2915 = vmatprep.subr.mxu0 0.0
    %2916 = vmatpush1.msra.mxu0 0.0
    %2917 = vmatprep.subr.mxu0 0.0
    %2918 = vmatpush1.msra.mxu0 0.0
    %2919 = vmatprep.subr.mxu0 0.0
    %2920 = vmatpush1.msra.mxu0 0.0
    %2921 = vmatprep.subr.mxu0 0.0
    %2922 = vmatpush1.msra.mxu0 0.0
    %2923 = vmatprep.subr.mxu0 0.0
    %2924 = vmatpush1.msra.mxu0 0.0
    %2925 = vmatprep.subr.mxu0 0.0
    %2926 = vmatpush1.msra.mxu0 0.0
    %2927 = vmatprep.subr.mxu0 0.0
    %2928 = vmatpush1.msra.mxu0 0.0
    %2929 = vmatprep.mubr.f32.mxu0 0.0
    %2930 = vmatmul.mubr.f32.gmra.mrb[0].mxu0 %v2863
    %v2931 = vpop.f32.mrb[0].mxu0
    %v2932 = vadd.f32 0.0, %v2931
    %v2933 = vpop.f32.mrb[0].mxu0
    %2934 = vdwg.mxu0
    %2937 = vrot.lane.b32.xlu0 %v2279, 112
    %v2938 = vpop.permute.xlu0 %2937
    %2939 = vrot.lane.b32.xlu0 %v2281, 112
    %v2940 = vpop.permute.xlu0 %2939
    %2943 = vxpose.xlu0.b32.start [1/16] %v2938, 128
    %2944 = vxpose.xlu0.b32.cont [2/16] %v2940, 128
    %2945 = vxpose.xlu0.b32.cont [3/16] 0.0, 128
    %2946 = vxpose.xlu0.b32.cont [4/16] 0.0, 128
    %2947 = vxpose.xlu0.b32.cont [5/16] 0.0, 128
    %2948 = vxpose.xlu0.b32.cont [6/16] 0.0, 128
    %2949 = vxpose.xlu0.b32.cont [7/16] 0.0, 128
    %2950 = vxpose.xlu0.b32.cont [8/16] 0.0, 128
    %2951 = vxpose.xlu0.b32.cont [9/16] 0.0, 128
    %2952 = vxpose.xlu0.b32.cont [10/16] 0.0, 128
    %2953 = vxpose.xlu0.b32.cont [11/16] 0.0, 128
    %2954 = vxpose.xlu0.b32.cont [12/16] 0.0, 128
    %2955 = vxpose.xlu0.b32.cont [13/16] 0.0, 128
    %2956 = vxpose.xlu0.b32.cont [14/16] 0.0, 128
    %2957 = vxpose.xlu0.b32.cont [15/16] 0.0, 128
    %2958 = vxpose.xlu0.b32.end [16/16] 0.0, 128
    %v2959 = vpop.trf.xlu0
    %v2960 = vpop.trf.xlu0
    %v2961 = vpop.trf.xlu0
    %v2962 = vpop.trf.xlu0
    %v2963 = vpop.trf.xlu0
    %v2964 = vpop.trf.xlu0
    %v2965 = vpop.trf.xlu0
    %v2966 = vpop.trf.xlu0
    %v2967 = vpop.trf.xlu0
    %v2968 = vpop.trf.xlu0
    %v2969 = vpop.trf.xlu0
    %v2970 = vpop.trf.xlu0
    %v2971 = vpop.trf.xlu0
    %v2972 = vpop.trf.xlu0
    %v2973 = vpop.trf.xlu0
    %v2974 = vpop.trf.xlu0
    %v2976 = vsel %vm74, %v2959, 0
    %2978 = vmatprep.subr.mxu0 0.0
    %2979 = vmatpush1.msra.mxu0 %v2163
    %2980 = vmatprep.subr.mxu0 0.0
    %2981 = vmatpush1.msra.mxu0 %v2164
    %2982 = vmatprep.subr.mxu0 0.0
    %2983 = vmatpush1.msra.mxu0 0.0
    %2984 = vmatprep.subr.mxu0 0.0
    %2985 = vmatpush1.msra.mxu0 0.0
    %2986 = vmatprep.subr.mxu0 0.0
    %2987 = vmatpush1.msra.mxu0 0.0
    %2988 = vmatprep.subr.mxu0 0.0
    %2989 = vmatpush1.msra.mxu0 0.0
    %2990 = vmatprep.subr.mxu0 0.0
    %2991 = vmatpush1.msra.mxu0 0.0
    %2992 = vmatprep.subr.mxu0 0.0
    %2993 = vmatpush1.msra.mxu0 0.0
    %2994 = vmatprep.subr.mxu0 0.0
    %2995 = vmatpush1.msra.mxu0 0.0
    %2996 = vmatprep.subr.mxu0 0.0
    %2997 = vmatpush1.msra.mxu0 0.0
    %2998 = vmatprep.subr.mxu0 0.0
    %2999 = vmatpush1.msra.mxu0 0.0
    %3000 = vmatprep.subr.mxu0 0.0
    %3001 = vmatpush1.msra.mxu0 0.0
    %3002 = vmatprep.subr.mxu0 0.0
    %3003 = vmatpush1.msra.mxu0 0.0
    %3004 = vmatprep.subr.mxu0 0.0
    %3005 = vmatpush1.msra.mxu0 0.0
    %3006 = vmatprep.subr.mxu0 0.0
    %3007 = vmatpush1.msra.mxu0 0.0
    %3008 = vmatprep.subr.mxu0 0.0
    %3009 = vmatpush1.msra.mxu0 0.0
    %3010 = vmatprep.subr.mxu0 0.0
    %3011 = vmatpush1.msra.mxu0 0.0
    %3012 = vmatprep.subr.mxu0 0.0
    %3013 = vmatpush1.msra.mxu0 0.0
    %3014 = vmatprep.subr.mxu0 0.0
    %3015 = vmatpush1.msra.mxu0 0.0
    %3016 = vmatprep.subr.mxu0 0.0
    %3017 = vmatpush1.msra.mxu0 0.0
    %3018 = vmatprep.subr.mxu0 0.0
    %3019 = vmatpush1.msra.mxu0 0.0
    %3020 = vmatprep.subr.mxu0 0.0
    %3021 = vmatpush1.msra.mxu0 0.0
    %3022 = vmatprep.subr.mxu0 0.0
    %3023 = vmatpush1.msra.mxu0 0.0
    %3024 = vmatprep.subr.mxu0 0.0
    %3025 = vmatpush1.msra.mxu0 0.0
    %3026 = vmatprep.subr.mxu0 0.0
    %3027 = vmatpush1.msra.mxu0 0.0
    %3028 = vmatprep.subr.mxu0 0.0
    %3029 = vmatpush1.msra.mxu0 0.0
    %3030 = vmatprep.subr.mxu0 0.0
    %3031 = vmatpush1.msra.mxu0 0.0
    %3032 = vmatprep.subr.mxu0 0.0
    %3033 = vmatpush1.msra.mxu0 0.0
    %3034 = vmatprep.subr.mxu0 0.0
    %3035 = vmatpush1.msra.mxu0 0.0
    %3036 = vmatprep.subr.mxu0 0.0
    %3037 = vmatpush1.msra.mxu0 0.0
    %3038 = vmatprep.subr.mxu0 0.0
    %3039 = vmatpush1.msra.mxu0 0.0
    %3040 = vmatprep.subr.mxu0 0.0
    %3041 = vmatpush1.msra.mxu0 0.0
    %3042 = vmatprep.mubr.f32.mxu0 0.0
    %3043 = vmatmul.mubr.f32.gmra.mrb[0].mxu0 %v2976
    %v3044 = vpop.f32.mrb[0].mxu0
    %v3045 = vadd.f32 0.0, %v3044
    %v3046 = vpop.f32.mrb[0].mxu0
    %3047 = vdwg.mxu0
    %3050 = vrot.lane.b32.xlu0 %v2283, 112
    %v3051 = vpop.permute.xlu0 %3050
    %3052 = vrot.lane.b32.xlu0 %v2285, 112
    %v3053 = vpop.permute.xlu0 %3052
    %3056 = vxpose.xlu0.b32.start [1/16] %v3051, 128
    %3057 = vxpose.xlu0.b32.cont [2/16] %v3053, 128
    %3058 = vxpose.xlu0.b32.cont [3/16] 0.0, 128
    %3059 = vxpose.xlu0.b32.cont [4/16] 0.0, 128
    %3060 = vxpose.xlu0.b32.cont [5/16] 0.0, 128
    %3061 = vxpose.xlu0.b32.cont [6/16] 0.0, 128
    %3062 = vxpose.xlu0.b32.cont [7/16] 0.0, 128
    %3063 = vxpose.xlu0.b32.cont [8/16] 0.0, 128
    %3064 = vxpose.xlu0.b32.cont [9/16] 0.0, 128
    %3065 = vxpose.xlu0.b32.cont [10/16] 0.0, 128
    %3066 = vxpose.xlu0.b32.cont [11/16] 0.0, 128
    %3067 = vxpose.xlu0.b32.cont [12/16] 0.0, 128
    %3068 = vxpose.xlu0.b32.cont [13/16] 0.0, 128
    %3069 = vxpose.xlu0.b32.cont [14/16] 0.0, 128
    %3070 = vxpose.xlu0.b32.cont [15/16] 0.0, 128
    %3071 = vxpose.xlu0.b32.end [16/16] 0.0, 128
    %v3072 = vpop.trf.xlu0
    %v3073 = vpop.trf.xlu0
    %v3074 = vpop.trf.xlu0
    %v3075 = vpop.trf.xlu0
    %v3076 = vpop.trf.xlu0
    %v3077 = vpop.trf.xlu0
    %v3078 = vpop.trf.xlu0
    %v3079 = vpop.trf.xlu0
    %v3080 = vpop.trf.xlu0
    %v3081 = vpop.trf.xlu0
    %v3082 = vpop.trf.xlu0
    %v3083 = vpop.trf.xlu0
    %v3084 = vpop.trf.xlu0
    %v3085 = vpop.trf.xlu0
    %v3086 = vpop.trf.xlu0
    %v3087 = vpop.trf.xlu0
    %v3089 = vsel %vm74, %v3072, 0
    %3091 = vmatprep.subr.mxu0 0.0
    %3092 = vmatpush1.msra.mxu0 %v2165
    %3093 = vmatprep.subr.mxu0 0.0
    %3094 = vmatpush1.msra.mxu0 %v2166
    %3095 = vmatprep.subr.mxu0 0.0
    %3096 = vmatpush1.msra.mxu0 0.0
    %3097 = vmatprep.subr.mxu0 0.0
    %3098 = vmatpush1.msra.mxu0 0.0
    %3099 = vmatprep.subr.mxu0 0.0
    %3100 = vmatpush1.msra.mxu0 0.0
    %3101 = vmatprep.subr.mxu0 0.0
    %3102 = vmatpush1.msra.mxu0 0.0
    %3103 = vmatprep.subr.mxu0 0.0
    %3104 = vmatpush1.msra.mxu0 0.0
    %3105 = vmatprep.subr.mxu0 0.0
    %3106 = vmatpush1.msra.mxu0 0.0
    %3107 = vmatprep.subr.mxu0 0.0
    %3108 = vmatpush1.msra.mxu0 0.0
    %3109 = vmatprep.subr.mxu0 0.0
    %3110 = vmatpush1.msra.mxu0 0.0
    %3111 = vmatprep.subr.mxu0 0.0
    %3112 = vmatpush1.msra.mxu0 0.0
    %3113 = vmatprep.subr.mxu0 0.0
    %3114 = vmatpush1.msra.mxu0 0.0
    %3115 = vmatprep.subr.mxu0 0.0
    %3116 = vmatpush1.msra.mxu0 0.0
    %3117 = vmatprep.subr.mxu0 0.0
    %3118 = vmatpush1.msra.mxu0 0.0
    %3119 = vmatprep.subr.mxu0 0.0
    %3120 = vmatpush1.msra.mxu0 0.0
    %3121 = vmatprep.subr.mxu0 0.0
    %3122 = vmatpush1.msra.mxu0 0.0
    %3123 = vmatprep.subr.mxu0 0.0
    %3124 = vmatpush1.msra.mxu0 0.0
    %3125 = vmatprep.subr.mxu0 0.0
    %3126 = vmatpush1.msra.mxu0 0.0
    %3127 = vmatprep.subr.mxu0 0.0
    %3128 = vmatpush1.msra.mxu0 0.0
    %3129 = vmatprep.subr.mxu0 0.0
    %3130 = vmatpush1.msra.mxu0 0.0
    %3131 = vmatprep.subr.mxu0 0.0
    %3132 = vmatpush1.msra.mxu0 0.0
    %3133 = vmatprep.subr.mxu0 0.0
    %3134 = vmatpush1.msra.mxu0 0.0
    %3135 = vmatprep.subr.mxu0 0.0
    %3136 = vmatpush1.msra.mxu0 0.0
    %3137 = vmatprep.subr.mxu0 0.0
    %3138 = vmatpush1.msra.mxu0 0.0
    %3139 = vmatprep.subr.mxu0 0.0
    %3140 = vmatpush1.msra.mxu0 0.0
    %3141 = vmatprep.subr.mxu0 0.0
    %3142 = vmatpush1.msra.mxu0 0.0
    %3143 = vmatprep.subr.mxu0 0.0
    %3144 = vmatpush1.msra.mxu0 0.0
    %3145 = vmatprep.subr.mxu0 0.0
    %3146 = vmatpush1.msra.mxu0 0.0
    %3147 = vmatprep.subr.mxu0 0.0
    %3148 = vmatpush1.msra.mxu0 0.0
    %3149 = vmatprep.subr.mxu0 0.0
    %3150 = vmatpush1.msra.mxu0 0.0
    %3151 = vmatprep.subr.mxu0 0.0
    %3152 = vmatpush1.msra.mxu0 0.0
    %3153 = vmatprep.subr.mxu0 0.0
    %3154 = vmatpush1.msra.mxu0 0.0
    %3155 = vmatprep.mubr.f32.mxu0 0.0
    %3156 = vmatmul.mubr.f32.gmra.mrb[0].mxu0 %v3089
    %v3157 = vpop.f32.mrb[0].mxu0
    %v3158 = vadd.f32 0.0, %v3157
    %v3159 = vpop.f32.mrb[0].mxu0
    %3160 = vdwg.mxu0
    %3163 = vrot.lane.b32.xlu0 %v2287, 112
    %v3164 = vpop.permute.xlu0 %3163
    %3165 = vrot.lane.b32.xlu0 %v2289, 112
    %v3166 = vpop.permute.xlu0 %3165
    %3169 = vxpose.xlu0.b32.start [1/16] %v3164, 128
    %3170 = vxpose.xlu0.b32.cont [2/16] %v3166, 128
    %3171 = vxpose.xlu0.b32.cont [3/16] 0.0, 128
    %3172 = vxpose.xlu0.b32.cont [4/16] 0.0, 128
    %3173 = vxpose.xlu0.b32.cont [5/16] 0.0, 128
    %3174 = vxpose.xlu0.b32.cont [6/16] 0.0, 128
    %3175 = vxpose.xlu0.b32.cont [7/16] 0.0, 128
    %3176 = vxpose.xlu0.b32.cont [8/16] 0.0, 128
    %3177 = vxpose.xlu0.b32.cont [9/16] 0.0, 128
    %3178 = vxpose.xlu0.b32.cont [10/16] 0.0, 128
    %3179 = vxpose.xlu0.b32.cont [11/16] 0.0, 128
    %3180 = vxpose.xlu0.b32.cont [12/16] 0.0, 128
    %3181 = vxpose.xlu0.b32.cont [13/16] 0.0, 128
    %3182 = vxpose.xlu0.b32.cont [14/16] 0.0, 128
    %3183 = vxpose.xlu0.b32.cont [15/16] 0.0, 128
    %3184 = vxpose.xlu0.b32.end [16/16] 0.0, 128
    %v3185 = vpop.trf.xlu0
    %v3186 = vpop.trf.xlu0
    %v3187 = vpop.trf.xlu0
    %v3188 = vpop.trf.xlu0
    %v3189 = vpop.trf.xlu0
    %v3190 = vpop.trf.xlu0
    %v3191 = vpop.trf.xlu0
    %v3192 = vpop.trf.xlu0
    %v3193 = vpop.trf.xlu0
    %v3194 = vpop.trf.xlu0
    %v3195 = vpop.trf.xlu0
    %v3196 = vpop.trf.xlu0
    %v3197 = vpop.trf.xlu0
    %v3198 = vpop.trf.xlu0
    %v3199 = vpop.trf.xlu0
    %v3200 = vpop.trf.xlu0
    %v3202 = vsel %vm74, %v3185, 0
    %3204 = vmatprep.subr.mxu0 0.0
    %3205 = vmatpush1.msra.mxu0 %v2167
    %3206 = vmatprep.subr.mxu0 0.0
    %3207 = vmatpush1.msra.mxu0 %v2168
    %3208 = vmatprep.subr.mxu0 0.0
    %3209 = vmatpush1.msra.mxu0 0.0
    %3210 = vmatprep.subr.mxu0 0.0
    %3211 = vmatpush1.msra.mxu0 0.0
    %3212 = vmatprep.subr.mxu0 0.0
    %3213 = vmatpush1.msra.mxu0 0.0
    %3214 = vmatprep.subr.mxu0 0.0
    %3215 = vmatpush1.msra.mxu0 0.0
    %3216 = vmatprep.subr.mxu0 0.0
    %3217 = vmatpush1.msra.mxu0 0.0
    %3218 = vmatprep.subr.mxu0 0.0
    %3219 = vmatpush1.msra.mxu0 0.0
    %3220 = vmatprep.subr.mxu0 0.0
    %3221 = vmatpush1.msra.mxu0 0.0
    %3222 = vmatprep.subr.mxu0 0.0
    %3223 = vmatpush1.msra.mxu0 0.0
    %3224 = vmatprep.subr.mxu0 0.0
    %3225 = vmatpush1.msra.mxu0 0.0
    %3226 = vmatprep.subr.mxu0 0.0
    %3227 = vmatpush1.msra.mxu0 0.0
    %3228 = vmatprep.subr.mxu0 0.0
    %3229 = vmatpush1.msra.mxu0 0.0
    %3230 = vmatprep.subr.mxu0 0.0
    %3231 = vmatpush1.msra.mxu0 0.0
    %3232 = vmatprep.subr.mxu0 0.0
    %3233 = vmatpush1.msra.mxu0 0.0
    %3234 = vmatprep.subr.mxu0 0.0
    %3235 = vmatpush1.msra.mxu0 0.0
    %3236 = vmatprep.subr.mxu0 0.0
    %3237 = vmatpush1.msra.mxu0 0.0
    %3238 = vmatprep.subr.mxu0 0.0
    %3239 = vmatpush1.msra.mxu0 0.0
    %3240 = vmatprep.subr.mxu0 0.0
    %3241 = vmatpush1.msra.mxu0 0.0
    %3242 = vmatprep.subr.mxu0 0.0
    %3243 = vmatpush1.msra.mxu0 0.0
    %3244 = vmatprep.subr.mxu0 0.0
    %3245 = vmatpush1.msra.mxu0 0.0
    %3246 = vmatprep.subr.mxu0 0.0
    %3247 = vmatpush1.msra.mxu0 0.0
    %3248 = vmatprep.subr.mxu0 0.0
    %3249 = vmatpush1.msra.mxu0 0.0
    %3250 = vmatprep.subr.mxu0 0.0
    %3251 = vmatpush1.msra.mxu0 0.0
    %3252 = vmatprep.subr.mxu0 0.0
    %3253 = vmatpush1.msra.mxu0 0.0
    %3254 = vmatprep.subr.mxu0 0.0
    %3255 = vmatpush1.msra.mxu0 0.0
    %3256 = vmatprep.subr.mxu0 0.0
    %3257 = vmatpush1.msra.mxu0 0.0
    %3258 = vmatprep.subr.mxu0 0.0
    %3259 = vmatpush1.msra.mxu0 0.0
    %3260 = vmatprep.subr.mxu0 0.0
    %3261 = vmatpush1.msra.mxu0 0.0
    %3262 = vmatprep.subr.mxu0 0.0
    %3263 = vmatpush1.msra.mxu0 0.0
    %3264 = vmatprep.subr.mxu0 0.0
    %3265 = vmatpush1.msra.mxu0 0.0
    %3266 = vmatprep.subr.mxu0 0.0
    %3267 = vmatpush1.msra.mxu0 0.0
    %3268 = vmatprep.mubr.f32.mxu0 0.0
    %3269 = vmatmul.mubr.f32.gmra.mrb[0].mxu0 %v3202
    %v3270 = vpop.f32.mrb[0].mxu0
    %v3271 = vadd.f32 0.0, %v3270
    %v3272 = vpop.f32.mrb[0].mxu0
    %3273 = vdwg.mxu0
    %3275 = vset.pattern.permute.xlu0 16
    %3276 = vperm.xlu0 %3275, %v2362
    %v3277 = vpop.permute.xlu0 %3276
    %3280 = vset.pattern.permute.xlu0 16
    %3281 = vperm.xlu0 %3280, %v2363
    %v3282 = vpop.permute.xlu0 %3281
    %3285 = vset.pattern.permute.xlu0 16
    %3286 = vperm.xlu0 %3285, %v2364
    %v3287 = vpop.permute.xlu0 %3286
    %3290 = vset.pattern.permute.xlu0 16
    %3291 = vperm.xlu0 %3290, %v2365
    %v3292 = vpop.permute.xlu0 %3291
    %3295 = vset.pattern.permute.xlu0 16
    %3296 = vperm.xlu0 %3295, %v2366
    %v3297 = vpop.permute.xlu0 %3296
    %3300 = vset.pattern.permute.xlu0 16
    %3301 = vperm.xlu0 %3300, %v2367
    %v3302 = vpop.permute.xlu0 %3301
    %3305 = vset.pattern.permute.xlu0 16
    %3306 = vperm.xlu0 %3305, %v2368
    %v3307 = vpop.permute.xlu0 %3306
    %3310 = vset.pattern.permute.xlu0 16
    %3311 = vperm.xlu0 %3310, %v2369
    %v3312 = vpop.permute.xlu0 %3311
    %v3314 = vmul.f32 %v2480, %v3277
    %v3315 = vmul.f32 %v2593, %v3282
    %v3316 = vmul.f32 %v2706, %v3287
    %v3317 = vmul.f32 %v2819, %v3292
    %v3318 = vmul.f32 %v2932, %v3297
    %v3319 = vmul.f32 %v3045, %v3302
    %v3320 = vmul.f32 %v3158, %v3307
    %v3321 = vmul.f32 %v3271, %v3312
    %v3330 = vrot.slane %v3315, 7
    %vm3331 = vcmask 1041409
    %v3332 = vsel %vm3331, %v3330, %v3314
    %v3333 = vrot.slane %v3316, 6
    %vm3334 = vcmask 1042434
    %v3335 = vsel %vm3334, %v3333, %v3332
    %v3336 = vrot.slane %v3317, 5
    %vm3337 = vcmask 1043459
    %v3338 = vsel %vm3337, %v3336, %v3335
    %v3339 = vrot.slane %v3318, 4
    %vm3340 = vcmask 1044484
    %v3341 = vsel %vm3340, %v3339, %v3338
    %v3342 = vrot.slane %v3319, 3
    %vm3343 = vcmask 1045509
    %v3344 = vsel %vm3343, %v3342, %v3341
    %v3345 = vrot.slane %v3320, 2
    %vm3346 = vcmask 1046534
    %v3347 = vsel %vm3346, %v3345, %v3344
    %v3348 = vrot.slane %v3321, 1
    %vm3349 = vcmask 1047559
    %v3350 = vsel %vm3349, %v3348, %v3347
    %3352 = vst.msk [vmem:[#allocation5] sm:$0xff] %vm74, %v3350
    // Predicated region
    $region38: #{graph_attention_pool.1} parent=1 // pred_check
      _
    $region39: #{graph_attention_pool.1} parent=1 // pred_check_branch
      %3354 = sbr.rel (0) target = $region41
    $region40: #{graph_attention_pool.1} parent=1 // pred_region
      %s3356 = ssub.s32 128, 128
      %3357 = vsyncadd [#allocation4], %s3356
      %s3359 = sshll.u32 [#allocation5], 4
      %s3360 = int_to_ptr.vmem [resolvable:$true] %s3359
      %3362 = dma.vmem_to_hbm [thread:$0]  %s3360, 128, %s8, [#allocation4]
    $region41: #{graph_attention_pool.1} parent=1 // pred_fallthru
      _
    // Predicated region
    $region42: #{graph_attention_pool.1} parent=1 // pred_check
      _
    $region43: #{graph_attention_pool.1} parent=1 // pred_check_branch
      %3364 = sbr.rel (0) target = $region45
    $region44: #{graph_attention_pool.1} parent=1 // pred_region
      %3365 = dma.done [#allocation4], 128
    $region45: #{graph_attention_pool.1} parent=1 // pred_fallthru
      _
    %3366 = vsyncpa [#allocation3], 1
    %3367 = vsyncpa [#allocation4], 1

</llo_original>
